<compile_context>
chip_gen: v7x
topology: tpu7x:2x2x1
jax: 0.10.0
libtpu: 0.0.40
codegen_flags: <defaults>
</compile_context>

<pallas_src>
import functools
import math

import jax
import jax.numpy as jnp
from jax.experimental import pallas as pl
from jax.experimental.pallas import tpu as pltpu


_ERF_P = 0.3275911
_ERF_A = (0.254829592, -0.284496736, 1.421413741, -1.453152027, 1.061405429)


def _erf_poly(z):
    # Abramowitz & Stegun 7.1.26 rational approximation, |err| <= 1.5e-7.
    a1, a2, a3, a4, a5 = _ERF_A
    za = jnp.abs(z)
    t = 1.0 / (1.0 + _ERF_P * za)
    poly = ((((a5 * t + a4) * t + a3) * t + a2) * t + a1) * t
    e = 1.0 - poly * jnp.exp(-za * za)
    return jnp.where(z < 0.0, -e, e)


def _gelu_exact(x):
    # nn.GELU() default (erf formulation): 0.5 * x * (1 + erf(x / sqrt(2)))
    return 0.5 * x * (1.0 + _erf_poly(x * (1.0 / math.sqrt(2.0))))


def _vit_encoder_kernel(x_ref, wqkv_ref, w1r_ref, b1_ref, w2r_ref, b2_ref,
                        o_ref, *, num_heads, head_dim, seq_len, eps,
                        matmul_dtype):
    # x_ref:    (S, D)          one batch sample (already squeezed)
    # wqkv_ref: (D, 3*D)        fused [Q | K | V] projection weights, head-major
    # w1r_ref:  (S, D, hidden)  fc1.weight.T reshaped (row-wise contraction)
    # b1_ref:   (1, hidden)
    # w2r_ref:  (S, hidden, D)  fc2.weight reshaped (per-row output matmul)
    # b2_ref:   (S, D)
    # o_ref:    (S, D)
    D = num_heads * head_dim

    def mm(a, b):
        if matmul_dtype is not None:
            a = a.astype(matmul_dtype)
            b = b.astype(matmul_dtype)
        return jnp.dot(a, b, preferred_element_type=jnp.float32)

    def layer_norm(t):
        # Fresh nn.LayerNorm(t.shape) per forward: identity affine, biased
        # variance, normalize over ALL dims of the per-sample tile.
        mu = jnp.mean(t)
        var = jnp.mean((t - mu) ** 2)
        return (t - mu) * jax.lax.rsqrt(var + eps)

    x = x_ref[...]                       # (S, D), f32
    x_ln = layer_norm(x)                 # `layer_norm1` in the torch code

    # ---- MHA: one fused QKV projection for all heads ----
    qkv = mm(x_ln, wqkv_ref[...])        # (S, 3*D)

    inv_sqrt_s = 1.0 / math.sqrt(seq_len)
    head_outs = []
    for h in range(num_heads):
        lo = h * head_dim
        q = layer_norm(qkv[:, lo:lo + head_dim])
        k = layer_norm(qkv[:, D + lo:D + lo + head_dim])
        v = layer_norm(qkv[:, 2 * D + lo:2 * D + lo + head_dim])
        if matmul_dtype is not None:
            qc, kc = q.astype(matmul_dtype), k.astype(matmul_dtype)
        else:
            qc, kc = q, k
        # q @ k^T without materializing k.T: contract the last dims on the MXU.
        s = jax.lax.dot_general(qc, kc, (((1,), (1,)), ((), ())),
                                preferred_element_type=jnp.float32)
        s = s * inv_sqrt_s
        s = s - jnp.max(s, axis=-1, keepdims=True)
        p = jnp.exp(s)
        # Softmax normalization on the EUP (approx reciprocal), not a VPU divide.
        p = p * pl.reciprocal(jnp.sum(p, axis=-1, keepdims=True), approx=True)
        head_outs.append(mm(p, v))       # (S, head_dim)
    attn = jnp.concatenate(head_outs, axis=-1)   # (S, D) == torch.cat over heads

    out1 = attn + x_ln                   # residual 1
    skip = out1
    y = layer_norm(out1)                 # second LayerNorm over (S, D)

    # ---- MLP on the flattened (S*D,) token vector, computed row-wise so no
    # in-kernel reshape of the (S, D) activation layout is needed. ----
    h1 = b1_ref[...]                     # (1, hidden)
    for s_i in range(seq_len):
        h1 = h1 + mm(y[s_i:s_i + 1, :], w1r_ref[s_i])     # (1, hidden)
    a1 = _gelu_exact(h1)
    # TODO(synk): nn.Dropout(0.1) treated as identity (inference semantics).
    rows = []
    for s_i in range(seq_len):
        rows.append(mm(a1, w2r_ref[s_i]))                 # (1, D)
    h2 = jnp.concatenate(rows, axis=0) + b2_ref[...]      # (S, D)
    a2 = _gelu_exact(h2)
    # TODO(synk): second nn.Dropout(0.1) also treated as identity.

    o_ref[...] = (skip + a2).astype(o_ref.dtype)


def vit_encoder_forward(images, w1, w2, w3, fc1_w, fc1_b, fc2_w, fc2_b, *,
                        matmul_dtype=None):
    """images: (B, S, D);  w1/w2/w3: (H, D, wd) per-head QKV weights;
    fc1_w: (hidden, S*D), fc1_b: (hidden,), fc2_w: (S*D, hidden), fc2_b: (S*D,).
    Returns (B, S, D) -- the VitEncoder forward output."""
    B, S, D = images.shape
    H, D_w, wd = w1.shape
    assert D == D_w == H * wd
    hidden = fc1_w.shape[0]
    assert fc1_w.shape == (hidden, S * D)
    assert fc2_w.shape == (S * D, hidden)

    # Fused QKV weight, columns [Q_h0..Q_h{H-1} | K_h0.. | V_h0..]  -> (D, 3D).
    wq = jnp.transpose(w1, (1, 0, 2)).reshape(D, H * wd)
    wk = jnp.transpose(w2, (1, 0, 2)).reshape(D, H * wd)
    wv = jnp.transpose(w3, (1, 0, 2)).reshape(D, H * wd)
    w_qkv = jnp.concatenate([wq, wk, wv], axis=1)

    # fc1:  h1 = flat(y) @ fc1_w.T + fc1_b, with fc1_w.T presented as
    # (S, D, hidden) so the kernel contracts row by row (no in-kernel reshape).
    w1r = fc1_w.T.reshape(S, D, hidden)
    b1r = fc1_b.reshape(1, hidden)
    # fc2:  h2 = a1 @ fc2_w.T + fc2_b, presented as (S, hidden, D) so each
    # output row is a (1, hidden) x (hidden, D) matmul.
    w2r = fc2_w.reshape(S, D, hidden).transpose(0, 2, 1)
    b2r = fc2_b.reshape(S, D)

    kernel = functools.partial(
        _vit_encoder_kernel, num_heads=H, head_dim=wd, seq_len=S, eps=1e-5,
        matmul_dtype=matmul_dtype)

    return pl.pallas_call(
        kernel,
        out_shape=jax.ShapeDtypeStruct((B, S, D), images.dtype),
        grid=(B,),
        in_specs=[
            pl.BlockSpec((pl.Squeezed(), S, D), lambda b: (b, 0, 0)),   # images
            pl.BlockSpec((D, 3 * D), lambda b: (0, 0)),                 # w_qkv
            pl.BlockSpec((S, D, hidden), lambda b: (0, 0, 0)),          # fc1
            pl.BlockSpec((1, hidden), lambda b: (0, 0)),                # b1
            pl.BlockSpec((S, hidden, D), lambda b: (0, 0, 0)),          # fc2
            pl.BlockSpec((S, D), lambda b: (0, 0)),                     # b2
        ],
        out_specs=pl.BlockSpec((pl.Squeezed(), S, D), lambda b: (b, 0, 0)),
        compiler_params=pltpu.CompilerParams(
            dimension_semantics=("parallel",)),
    )(images, w_qkv, w1r, b1r, w2r, b2r)


def vit_encoder_reference(images, w1, w2, w3, fc1_w, fc1_b, fc2_w, fc2_b):
    """Pure-JAX reference mirroring the PyTorch VitEncoder.forward exactly
    (dropout in inference mode)."""
    B, S, D = images.shape
    H = w1.shape[0]
    eps = 1e-5

    def ln(t):  # normalize over (dim1, dim2) per batch sample, identity affine
        mu = jnp.mean(t, axis=(1, 2), keepdims=True)
        var = jnp.mean((t - mu) ** 2, axis=(1, 2), keepdims=True)
        return (t - mu) / jnp.sqrt(var + eps)

    x = ln(images)
    layer_norm1 = x
    heads = []
    for h in range(H):
        q = ln(x @ w1[h])
        k = ln(x @ w2[h])
        v = ln(x @ w3[h])
        s = jnp.einsum("bsd,btd->bst", q, k) / math.sqrt(S)
        p = jax.nn.softmax(s, axis=-1)
        heads.append(jnp.einsum("bst,btd->bsd", p, v))
    out = jnp.concatenate(heads, axis=-1) + layer_norm1
    skip = out
    y = ln(out)
    flat = y.reshape(B, S * D)
    h1 = jax.nn.gelu(flat @ fc1_w.T + fc1_b, approximate=False)
    h2 = jax.nn.gelu(h1 @ fc2_w.T + fc2_b, approximate=False)
    return skip + h2.reshape(B, S, D)


if __name__ == "__main__":
    # Small VitEncoder config: img_size=16, patch_size=8 -> num_patches=4,
    # seq = num_patches + 1 = 5; embedding_dim=32, n_heads=4 -> head_dim=8;
    # hidden_dims_mlp=64; batch=2.
    img_size, patch_size = 16, 8
    embedding_dim, n_heads = 32, 4
    hidden_dims_mlp = 64
    batch = 2

    num_patches = (img_size // patch_size) ** 2
    seq = num_patches + 1
    head_dim = embedding_dim // n_heads
    flat_dim = embedding_dim * seq

    key = jax.random.PRNGKey(0)
    kx, k1, k2, k3, kf1w, kf1b, kf2w, kf2b = jax.random.split(key, 8)
    images = jax.random.normal(kx, (batch, seq, embedding_dim), dtype=jnp.float32)
    # Head parameters: torch.randn((embedding_dim, head_dim)) per head.
    w1 = jax.random.normal(k1, (n_heads, embedding_dim, head_dim), dtype=jnp.float32)
    w2 = jax.random.normal(k2, (n_heads, embedding_dim, head_dim), dtype=jnp.float32)
    w3 = jax.random.normal(k3, (n_heads, embedding_dim, head_dim), dtype=jnp.float32)
    # MLP parameters in nn.Linear layout: weight (out, in), bias (out,).
    fc1_w = jax.random.normal(kf1w, (hidden_dims_mlp, flat_dim), dtype=jnp.float32) \
        / math.sqrt(flat_dim)
    fc1_b = jax.random.normal(kf1b, (hidden_dims_mlp,), dtype=jnp.float32) * 0.1
    fc2_w = jax.random.normal(kf2w, (flat_dim, hidden_dims_mlp), dtype=jnp.float32) \
        / math.sqrt(hidden_dims_mlp)
    fc2_b = jax.random.normal(kf2b, (flat_dim,), dtype=jnp.float32) * 0.1

    out = vit_encoder_forward(images, w1, w2, w3, fc1_w, fc1_b, fc2_w, fc2_b)
    out = jax.block_until_ready(out)
    assert out.shape == (batch, seq, embedding_dim), out.shape

    ref = vit_encoder_reference(images, w1, w2, w3, fc1_w, fc1_b, fc2_w, fc2_b)
    if not jnp.allclose(out, ref, rtol=1e-2, atol=1e-2):
        max_err = jnp.max(jnp.abs(out - ref))
        raise AssertionError(f"kernel mismatch vs reference, max_err={max_err}")

    print("KERNEL_OK")
</pallas_src>

<mosaic_0001>
module attributes {stable_mosaic.version = 11 : i64} {
  func.func @_vit_encoder_kernel(%arg0: i32, %arg1: memref<1x5x32xf32, #tpu.memory_space<vmem>>, %arg2: memref<32x96xf32, #tpu.memory_space<vmem>>, %arg3: memref<5x32x64xf32, #tpu.memory_space<vmem>>, %arg4: memref<1x64xf32, #tpu.memory_space<vmem>>, %arg5: memref<5x64x32xf32, #tpu.memory_space<vmem>>, %arg6: memref<5x32xf32, #tpu.memory_space<vmem>>, %arg7: memref<1x5x32xf32, #tpu.memory_space<vmem>>) attributes {dimension_semantics = [#tpu.dimension_semantics<parallel>], iteration_bounds = array<i64: 2>, scalar_prefetch = 0 : i64, scratch_operands = 0 : i64, tpu.core_type = #tpu.core_type<tc>, window_params = [{transform_indices = @transform_0, window_bounds = array<i64: 1, 5, 32>}, {pipeline_mode = #tpu.pipeline_mode<synchronous>, transform_indices = @transform_1, window_bounds = array<i64: 32, 96>}, {pipeline_mode = #tpu.pipeline_mode<synchronous>, transform_indices = @transform_2, window_bounds = array<i64: 5, 32, 64>}, {pipeline_mode = #tpu.pipeline_mode<synchronous>, transform_indices = @transform_3, window_bounds = array<i64: 1, 64>}, {pipeline_mode = #tpu.pipeline_mode<synchronous>, transform_indices = @transform_4, window_bounds = array<i64: 5, 64, 32>}, {pipeline_mode = #tpu.pipeline_mode<synchronous>, transform_indices = @transform_5, window_bounds = array<i64: 5, 32>}, {transform_indices = @transform_6, window_bounds = array<i64: 1, 5, 32>}]} {
    %c0 = arith.constant 0 : index
    %c0_0 = arith.constant 0 : index
    %c0_1 = arith.constant 0 : index
    %0 = vector.load %arg1[%c0, %c0_0, %c0_1] : memref<1x5x32xf32, #tpu.memory_space<vmem>>, vector<1x5x32xf32>
    %1 = vector.shape_cast %0 : vector<1x5x32xf32> to vector<5x32xf32>
    %2 = vector.shape_cast %1 : vector<5x32xf32> to vector<1x5x32xf32>
    %cst = arith.constant dense<0.000000e+00> : vector<1xf32>
    %3 = vector.multi_reduction <add>, %2, %cst [1, 2] : vector<1x5x32xf32> to vector<1xf32>
    %4 = vector.shape_cast %3 : vector<1xf32> to vector<1x1x1xf32>
    %5 = vector.extract %4[0, 0, 0] : f32 from vector<1x1x1xf32>
    %cst_2 = arith.constant 1.600000e+02 : f32
    %6 = arith.divf %5, %cst_2 : f32
    %7 = vector.broadcast %6 : f32 to vector<5x32xf32>
    %8 = arith.subf %1, %7 : vector<5x32xf32>
    %9 = arith.mulf %8, %8 : vector<5x32xf32>
    %10 = vector.shape_cast %9 : vector<5x32xf32> to vector<1x5x32xf32>
    %cst_3 = arith.constant dense<0.000000e+00> : vector<1xf32>
    %11 = vector.multi_reduction <add>, %10, %cst_3 [1, 2] : vector<1x5x32xf32> to vector<1xf32>
    %12 = vector.shape_cast %11 : vector<1xf32> to vector<1x1x1xf32>
    %13 = vector.extract %12[0, 0, 0] : f32 from vector<1x1x1xf32>
    %cst_4 = arith.constant 1.600000e+02 : f32
    %14 = arith.divf %13, %cst_4 : f32
    %15 = vector.broadcast %6 : f32 to vector<5x32xf32>
    %16 = arith.subf %1, %15 : vector<5x32xf32>
    %cst_5 = arith.constant 9.99999974E-6 : f32
    %17 = arith.addf %14, %cst_5 : f32
    %18 = math.rsqrt %17 : f32
    %19 = vector.broadcast %18 : f32 to vector<5x32xf32>
    %20 = arith.mulf %16, %19 : vector<5x32xf32>
    %c0_6 = arith.constant 0 : index
    %c0_7 = arith.constant 0 : index
    %21 = vector.load %arg2[%c0_6, %c0_7] : memref<32x96xf32, #tpu.memory_space<vmem>>, vector<32x96xf32>
    %cst_8 = arith.constant dense<0.000000e+00> : vector<5x96xf32>
    %22 = tpu.matmul %20, %21, %cst_8 {dimension_numbers = #tpu.dot_dimension_numbers<[1], [0], [0], [1], [0, 0, 1, 1], [], []>} : vector<5x32xf32>, vector<32x96xf32>, vector<5x96xf32> -> vector<5x96xf32>
    %23 = vector.extract_strided_slice %22 {offsets = [0, 0], sizes = [5, 8], strides = [1, 1]} : vector<5x96xf32> to vector<5x8xf32>
    %24 = vector.shape_cast %23 : vector<5x8xf32> to vector<1x5x8xf32>
    %cst_9 = arith.constant dense<0.000000e+00> : vector<1xf32>
    %25 = vector.multi_reduction <add>, %24, %cst_9 [1, 2] : vector<1x5x8xf32> to vector<1xf32>
    %26 = vector.shape_cast %25 : vector<1xf32> to vector<1x1x1xf32>
    %27 = vector.extract %26[0, 0, 0] : f32 from vector<1x1x1xf32>
    %cst_10 = arith.constant 4.000000e+01 : f32
    %28 = arith.divf %27, %cst_10 : f32
    %29 = vector.broadcast %28 : f32 to vector<5x8xf32>
    %30 = arith.subf %23, %29 : vector<5x8xf32>
    %31 = arith.mulf %30, %30 : vector<5x8xf32>
    %32 = vector.shape_cast %31 : vector<5x8xf32> to vector<1x5x8xf32>
    %cst_11 = arith.constant dense<0.000000e+00> : vector<1xf32>
    %33 = vector.multi_reduction <add>, %32, %cst_11 [1, 2] : vector<1x5x8xf32> to vector<1xf32>
    %34 = vector.shape_cast %33 : vector<1xf32> to vector<1x1x1xf32>
    %35 = vector.extract %34[0, 0, 0] : f32 from vector<1x1x1xf32>
    %cst_12 = arith.constant 4.000000e+01 : f32
    %36 = arith.divf %35, %cst_12 : f32
    %37 = vector.broadcast %28 : f32 to vector<5x8xf32>
    %38 = arith.subf %23, %37 : vector<5x8xf32>
    %cst_13 = arith.constant 9.99999974E-6 : f32
    %39 = arith.addf %36, %cst_13 : f32
    %40 = math.rsqrt %39 : f32
    %41 = vector.broadcast %40 : f32 to vector<5x8xf32>
    %42 = arith.mulf %38, %41 : vector<5x8xf32>
    %43 = vector.extract_strided_slice %22 {offsets = [0, 32], sizes = [5, 8], strides = [1, 1]} : vector<5x96xf32> to vector<5x8xf32>
    %44 = vector.shape_cast %43 : vector<5x8xf32> to vector<1x5x8xf32>
    %cst_14 = arith.constant dense<0.000000e+00> : vector<1xf32>
    %45 = vector.multi_reduction <add>, %44, %cst_14 [1, 2] : vector<1x5x8xf32> to vector<1xf32>
    %46 = vector.shape_cast %45 : vector<1xf32> to vector<1x1x1xf32>
    %47 = vector.extract %46[0, 0, 0] : f32 from vector<1x1x1xf32>
    %cst_15 = arith.constant 4.000000e+01 : f32
    %48 = arith.divf %47, %cst_15 : f32
    %49 = vector.broadcast %48 : f32 to vector<5x8xf32>
    %50 = arith.subf %43, %49 : vector<5x8xf32>
    %51 = arith.mulf %50, %50 : vector<5x8xf32>
    %52 = vector.shape_cast %51 : vector<5x8xf32> to vector<1x5x8xf32>
    %cst_16 = arith.constant dense<0.000000e+00> : vector<1xf32>
    %53 = vector.multi_reduction <add>, %52, %cst_16 [1, 2] : vector<1x5x8xf32> to vector<1xf32>
    %54 = vector.shape_cast %53 : vector<1xf32> to vector<1x1x1xf32>
    %55 = vector.extract %54[0, 0, 0] : f32 from vector<1x1x1xf32>
    %cst_17 = arith.constant 4.000000e+01 : f32
    %56 = arith.divf %55, %cst_17 : f32
    %57 = vector.broadcast %48 : f32 to vector<5x8xf32>
    %58 = arith.subf %43, %57 : vector<5x8xf32>
    %cst_18 = arith.constant 9.99999974E-6 : f32
    %59 = arith.addf %56, %cst_18 : f32
    %60 = math.rsqrt %59 : f32
    %61 = vector.broadcast %60 : f32 to vector<5x8xf32>
    %62 = arith.mulf %58, %61 : vector<5x8xf32>
    %63 = vector.extract_strided_slice %22 {offsets = [0, 64], sizes = [5, 8], strides = [1, 1]} : vector<5x96xf32> to vector<5x8xf32>
    %64 = vector.shape_cast %63 : vector<5x8xf32> to vector<1x5x8xf32>
    %cst_19 = arith.constant dense<0.000000e+00> : vector<1xf32>
    %65 = vector.multi_reduction <add>, %64, %cst_19 [1, 2] : vector<1x5x8xf32> to vector<1xf32>
    %66 = vector.shape_cast %65 : vector<1xf32> to vector<1x1x1xf32>
    %67 = vector.extract %66[0, 0, 0] : f32 from vector<1x1x1xf32>
    %cst_20 = arith.constant 4.000000e+01 : f32
    %68 = arith.divf %67, %cst_20 : f32
    %69 = vector.broadcast %68 : f32 to vector<5x8xf32>
    %70 = arith.subf %63, %69 : vector<5x8xf32>
    %71 = arith.mulf %70, %70 : vector<5x8xf32>
    %72 = vector.shape_cast %71 : vector<5x8xf32> to vector<1x5x8xf32>
    %cst_21 = arith.constant dense<0.000000e+00> : vector<1xf32>
    %73 = vector.multi_reduction <add>, %72, %cst_21 [1, 2] : vector<1x5x8xf32> to vector<1xf32>
    %74 = vector.shape_cast %73 : vector<1xf32> to vector<1x1x1xf32>
    %75 = vector.extract %74[0, 0, 0] : f32 from vector<1x1x1xf32>
    %cst_22 = arith.constant 4.000000e+01 : f32
    %76 = arith.divf %75, %cst_22 : f32
    %77 = vector.broadcast %68 : f32 to vector<5x8xf32>
    %78 = arith.subf %63, %77 : vector<5x8xf32>
    %cst_23 = arith.constant 9.99999974E-6 : f32
    %79 = arith.addf %76, %cst_23 : f32
    %80 = math.rsqrt %79 : f32
    %81 = vector.broadcast %80 : f32 to vector<5x8xf32>
    %82 = arith.mulf %78, %81 : vector<5x8xf32>
    %cst_24 = arith.constant dense<0.000000e+00> : vector<5x5xf32>
    %83 = tpu.matmul %42, %62, %cst_24 {dimension_numbers = #tpu.dot_dimension_numbers<[1], [1], [0], [0], [0, 0, 1, 0], [], []>} : vector<5x8xf32>, vector<5x8xf32>, vector<5x5xf32> -> vector<5x5xf32>
    %cst_25 = arith.constant 0.44721359 : f32
    %84 = vector.broadcast %cst_25 : f32 to vector<5x5xf32>
    %85 = arith.mulf %83, %84 : vector<5x5xf32>
    %cst_26 = arith.constant dense<0xFF800000> : vector<5xf32>
    %86 = vector.multi_reduction <maximumf>, %85, %cst_26 [1] : vector<5x5xf32> to vector<5xf32>
    %87 = vector.shape_cast %86 : vector<5xf32> to vector<5x1xf32>
    %88 = vector.broadcast %87 : vector<5x1xf32> to vector<5x5xf32>
    %89 = arith.subf %85, %88 : vector<5x5xf32>
    %90 = math.exp %89 : vector<5x5xf32>
    %cst_27 = arith.constant dense<0.000000e+00> : vector<5xf32>
    %91 = vector.multi_reduction <add>, %90, %cst_27 [1] : vector<5x5xf32> to vector<5xf32>
    %92 = vector.shape_cast %91 : vector<5xf32> to vector<5x1xf32>
    %93 = tpu.reciprocal %92 {approx = true} : vector<5x1xf32> -> vector<5x1xf32>
    %94 = vector.broadcast %93 : vector<5x1xf32> to vector<5x5xf32>
    %95 = arith.mulf %90, %94 : vector<5x5xf32>
    %cst_28 = arith.constant dense<0.000000e+00> : vector<5x8xf32>
    %96 = tpu.matmul %95, %82, %cst_28 {dimension_numbers = #tpu.dot_dimension_numbers<[1], [0], [0], [1], [0, 0, 1, 1], [], []>} : vector<5x5xf32>, vector<5x8xf32>, vector<5x8xf32> -> vector<5x8xf32>
    %97 = vector.extract_strided_slice %22 {offsets = [0, 8], sizes = [5, 8], strides = [1, 1]} : vector<5x96xf32> to vector<5x8xf32>
    %98 = vector.shape_cast %97 : vector<5x8xf32> to vector<1x5x8xf32>
    %cst_29 = arith.constant dense<0.000000e+00> : vector<1xf32>
    %99 = vector.multi_reduction <add>, %98, %cst_29 [1, 2] : vector<1x5x8xf32> to vector<1xf32>
    %100 = vector.shape_cast %99 : vector<1xf32> to vector<1x1x1xf32>
    %101 = vector.extract %100[0, 0, 0] : f32 from vector<1x1x1xf32>
    %cst_30 = arith.constant 4.000000e+01 : f32
    %102 = arith.divf %101, %cst_30 : f32
    %103 = vector.broadcast %102 : f32 to vector<5x8xf32>
    %104 = arith.subf %97, %103 : vector<5x8xf32>
    %105 = arith.mulf %104, %104 : vector<5x8xf32>
    %106 = vector.shape_cast %105 : vector<5x8xf32> to vector<1x5x8xf32>
    %cst_31 = arith.constant dense<0.000000e+00> : vector<1xf32>
    %107 = vector.multi_reduction <add>, %106, %cst_31 [1, 2] : vector<1x5x8xf32> to vector<1xf32>
    %108 = vector.shape_cast %107 : vector<1xf32> to vector<1x1x1xf32>
    %109 = vector.extract %108[0, 0, 0] : f32 from vector<1x1x1xf32>
    %cst_32 = arith.constant 4.000000e+01 : f32
    %110 = arith.divf %109, %cst_32 : f32
    %111 = vector.broadcast %102 : f32 to vector<5x8xf32>
    %112 = arith.subf %97, %111 : vector<5x8xf32>
    %cst_33 = arith.constant 9.99999974E-6 : f32
    %113 = arith.addf %110, %cst_33 : f32
    %114 = math.rsqrt %113 : f32
    %115 = vector.broadcast %114 : f32 to vector<5x8xf32>
    %116 = arith.mulf %112, %115 : vector<5x8xf32>
    %117 = vector.extract_strided_slice %22 {offsets = [0, 40], sizes = [5, 8], strides = [1, 1]} : vector<5x96xf32> to vector<5x8xf32>
    %118 = vector.shape_cast %117 : vector<5x8xf32> to vector<1x5x8xf32>
    %cst_34 = arith.constant dense<0.000000e+00> : vector<1xf32>
    %119 = vector.multi_reduction <add>, %118, %cst_34 [1, 2] : vector<1x5x8xf32> to vector<1xf32>
    %120 = vector.shape_cast %119 : vector<1xf32> to vector<1x1x1xf32>
    %121 = vector.extract %120[0, 0, 0] : f32 from vector<1x1x1xf32>
    %cst_35 = arith.constant 4.000000e+01 : f32
    %122 = arith.divf %121, %cst_35 : f32
    %123 = vector.broadcast %122 : f32 to vector<5x8xf32>
    %124 = arith.subf %117, %123 : vector<5x8xf32>
    %125 = arith.mulf %124, %124 : vector<5x8xf32>
    %126 = vector.shape_cast %125 : vector<5x8xf32> to vector<1x5x8xf32>
    %cst_36 = arith.constant dense<0.000000e+00> : vector<1xf32>
    %127 = vector.multi_reduction <add>, %126, %cst_36 [1, 2] : vector<1x5x8xf32> to vector<1xf32>
    %128 = vector.shape_cast %127 : vector<1xf32> to vector<1x1x1xf32>
    %129 = vector.extract %128[0, 0, 0] : f32 from vector<1x1x1xf32>
    %cst_37 = arith.constant 4.000000e+01 : f32
    %130 = arith.divf %129, %cst_37 : f32
    %131 = vector.broadcast %122 : f32 to vector<5x8xf32>
    %132 = arith.subf %117, %131 : vector<5x8xf32>
    %cst_38 = arith.constant 9.99999974E-6 : f32
    %133 = arith.addf %130, %cst_38 : f32
    %134 = math.rsqrt %133 : f32
    %135 = vector.broadcast %134 : f32 to vector<5x8xf32>
    %136 = arith.mulf %132, %135 : vector<5x8xf32>
    %137 = vector.extract_strided_slice %22 {offsets = [0, 72], sizes = [5, 8], strides = [1, 1]} : vector<5x96xf32> to vector<5x8xf32>
    %138 = vector.shape_cast %137 : vector<5x8xf32> to vector<1x5x8xf32>
    %cst_39 = arith.constant dense<0.000000e+00> : vector<1xf32>
    %139 = vector.multi_reduction <add>, %138, %cst_39 [1, 2] : vector<1x5x8xf32> to vector<1xf32>
    %140 = vector.shape_cast %139 : vector<1xf32> to vector<1x1x1xf32>
    %141 = vector.extract %140[0, 0, 0] : f32 from vector<1x1x1xf32>
    %cst_40 = arith.constant 4.000000e+01 : f32
    %142 = arith.divf %141, %cst_40 : f32
    %143 = vector.broadcast %142 : f32 to vector<5x8xf32>
    %144 = arith.subf %137, %143 : vector<5x8xf32>
    %145 = arith.mulf %144, %144 : vector<5x8xf32>
    %146 = vector.shape_cast %145 : vector<5x8xf32> to vector<1x5x8xf32>
    %cst_41 = arith.constant dense<0.000000e+00> : vector<1xf32>
    %147 = vector.multi_reduction <add>, %146, %cst_41 [1, 2] : vector<1x5x8xf32> to vector<1xf32>
    %148 = vector.shape_cast %147 : vector<1xf32> to vector<1x1x1xf32>
    %149 = vector.extract %148[0, 0, 0] : f32 from vector<1x1x1xf32>
    %cst_42 = arith.constant 4.000000e+01 : f32
    %150 = arith.divf %149, %cst_42 : f32
    %151 = vector.broadcast %142 : f32 to vector<5x8xf32>
    %152 = arith.subf %137, %151 : vector<5x8xf32>
    %cst_43 = arith.constant 9.99999974E-6 : f32
    %153 = arith.addf %150, %cst_43 : f32
    %154 = math.rsqrt %153 : f32
    %155 = vector.broadcast %154 : f32 to vector<5x8xf32>
    %156 = arith.mulf %152, %155 : vector<5x8xf32>
    %cst_44 = arith.constant dense<0.000000e+00> : vector<5x5xf32>
    %157 = tpu.matmul %116, %136, %cst_44 {dimension_numbers = #tpu.dot_dimension_numbers<[1], [1], [0], [0], [0, 0, 1, 0], [], []>} : vector<5x8xf32>, vector<5x8xf32>, vector<5x5xf32> -> vector<5x5xf32>
    %cst_45 = arith.constant 0.44721359 : f32
    %158 = vector.broadcast %cst_45 : f32 to vector<5x5xf32>
    %159 = arith.mulf %157, %158 : vector<5x5xf32>
    %cst_46 = arith.constant dense<0xFF800000> : vector<5xf32>
    %160 = vector.multi_reduction <maximumf>, %159, %cst_46 [1] : vector<5x5xf32> to vector<5xf32>
    %161 = vector.shape_cast %160 : vector<5xf32> to vector<5x1xf32>
    %162 = vector.broadcast %161 : vector<5x1xf32> to vector<5x5xf32>
    %163 = arith.subf %159, %162 : vector<5x5xf32>
    %164 = math.exp %163 : vector<5x5xf32>
    %cst_47 = arith.constant dense<0.000000e+00> : vector<5xf32>
    %165 = vector.multi_reduction <add>, %164, %cst_47 [1] : vector<5x5xf32> to vector<5xf32>
    %166 = vector.shape_cast %165 : vector<5xf32> to vector<5x1xf32>
    %167 = tpu.reciprocal %166 {approx = true} : vector<5x1xf32> -> vector<5x1xf32>
    %168 = vector.broadcast %167 : vector<5x1xf32> to vector<5x5xf32>
    %169 = arith.mulf %164, %168 : vector<5x5xf32>
    %cst_48 = arith.constant dense<0.000000e+00> : vector<5x8xf32>
    %170 = tpu.matmul %169, %156, %cst_48 {dimension_numbers = #tpu.dot_dimension_numbers<[1], [0], [0], [1], [0, 0, 1, 1], [], []>} : vector<5x5xf32>, vector<5x8xf32>, vector<5x8xf32> -> vector<5x8xf32>
    %171 = vector.extract_strided_slice %22 {offsets = [0, 16], sizes = [5, 8], strides = [1, 1]} : vector<5x96xf32> to vector<5x8xf32>
    %172 = vector.shape_cast %171 : vector<5x8xf32> to vector<1x5x8xf32>
    %cst_49 = arith.constant dense<0.000000e+00> : vector<1xf32>
    %173 = vector.multi_reduction <add>, %172, %cst_49 [1, 2] : vector<1x5x8xf32> to vector<1xf32>
    %174 = vector.shape_cast %173 : vector<1xf32> to vector<1x1x1xf32>
    %175 = vector.extract %174[0, 0, 0] : f32 from vector<1x1x1xf32>
    %cst_50 = arith.constant 4.000000e+01 : f32
    %176 = arith.divf %175, %cst_50 : f32
    %177 = vector.broadcast %176 : f32 to vector<5x8xf32>
    %178 = arith.subf %171, %177 : vector<5x8xf32>
    %179 = arith.mulf %178, %178 : vector<5x8xf32>
    %180 = vector.shape_cast %179 : vector<5x8xf32> to vector<1x5x8xf32>
    %cst_51 = arith.constant dense<0.000000e+00> : vector<1xf32>
    %181 = vector.multi_reduction <add>, %180, %cst_51 [1, 2] : vector<1x5x8xf32> to vector<1xf32>
    %182 = vector.shape_cast %181 : vector<1xf32> to vector<1x1x1xf32>
    %183 = vector.extract %182[0, 0, 0] : f32 from vector<1x1x1xf32>
    %cst_52 = arith.constant 4.000000e+01 : f32
    %184 = arith.divf %183, %cst_52 : f32
    %185 = vector.broadcast %176 : f32 to vector<5x8xf32>
    %186 = arith.subf %171, %185 : vector<5x8xf32>
    %cst_53 = arith.constant 9.99999974E-6 : f32
    %187 = arith.addf %184, %cst_53 : f32
    %188 = math.rsqrt %187 : f32
    %189 = vector.broadcast %188 : f32 to vector<5x8xf32>
    %190 = arith.mulf %186, %189 : vector<5x8xf32>
    %191 = vector.extract_strided_slice %22 {offsets = [0, 48], sizes = [5, 8], strides = [1, 1]} : vector<5x96xf32> to vector<5x8xf32>
    %192 = vector.shape_cast %191 : vector<5x8xf32> to vector<1x5x8xf32>
    %cst_54 = arith.constant dense<0.000000e+00> : vector<1xf32>
    %193 = vector.multi_reduction <add>, %192, %cst_54 [1, 2] : vector<1x5x8xf32> to vector<1xf32>
    %194 = vector.shape_cast %193 : vector<1xf32> to vector<1x1x1xf32>
    %195 = vector.extract %194[0, 0, 0] : f32 from vector<1x1x1xf32>
    %cst_55 = arith.constant 4.000000e+01 : f32
    %196 = arith.divf %195, %cst_55 : f32
    %197 = vector.broadcast %196 : f32 to vector<5x8xf32>
    %198 = arith.subf %191, %197 : vector<5x8xf32>
    %199 = arith.mulf %198, %198 : vector<5x8xf32>
    %200 = vector.shape_cast %199 : vector<5x8xf32> to vector<1x5x8xf32>
    %cst_56 = arith.constant dense<0.000000e+00> : vector<1xf32>
    %201 = vector.multi_reduction <add>, %200, %cst_56 [1, 2] : vector<1x5x8xf32> to vector<1xf32>
    %202 = vector.shape_cast %201 : vector<1xf32> to vector<1x1x1xf32>
    %203 = vector.extract %202[0, 0, 0] : f32 from vector<1x1x1xf32>
    %cst_57 = arith.constant 4.000000e+01 : f32
    %204 = arith.divf %203, %cst_57 : f32
    %205 = vector.broadcast %196 : f32 to vector<5x8xf32>
    %206 = arith.subf %191, %205 : vector<5x8xf32>
    %cst_58 = arith.constant 9.99999974E-6 : f32
    %207 = arith.addf %204, %cst_58 : f32
    %208 = math.rsqrt %207 : f32
    %209 = vector.broadcast %208 : f32 to vector<5x8xf32>
    %210 = arith.mulf %206, %209 : vector<5x8xf32>
    %211 = vector.extract_strided_slice %22 {offsets = [0, 80], sizes = [5, 8], strides = [1, 1]} : vector<5x96xf32> to vector<5x8xf32>
    %212 = vector.shape_cast %211 : vector<5x8xf32> to vector<1x5x8xf32>
    %cst_59 = arith.constant dense<0.000000e+00> : vector<1xf32>
    %213 = vector.multi_reduction <add>, %212, %cst_59 [1, 2] : vector<1x5x8xf32> to vector<1xf32>
    %214 = vector.shape_cast %213 : vector<1xf32> to vector<1x1x1xf32>
    %215 = vector.extract %214[0, 0, 0] : f32 from vector<1x1x1xf32>
    %cst_60 = arith.constant 4.000000e+01 : f32
    %216 = arith.divf %215, %cst_60 : f32
    %217 = vector.broadcast %216 : f32 to vector<5x8xf32>
    %218 = arith.subf %211, %217 : vector<5x8xf32>
    %219 = arith.mulf %218, %218 : vector<5x8xf32>
    %220 = vector.shape_cast %219 : vector<5x8xf32> to vector<1x5x8xf32>
    %cst_61 = arith.constant dense<0.000000e+00> : vector<1xf32>
    %221 = vector.multi_reduction <add>, %220, %cst_61 [1, 2] : vector<1x5x8xf32> to vector<1xf32>
    %222 = vector.shape_cast %221 : vector<1xf32> to vector<1x1x1xf32>
    %223 = vector.extract %222[0, 0, 0] : f32 from vector<1x1x1xf32>
    %cst_62 = arith.constant 4.000000e+01 : f32
    %224 = arith.divf %223, %cst_62 : f32
    %225 = vector.broadcast %216 : f32 to vector<5x8xf32>
    %226 = arith.subf %211, %225 : vector<5x8xf32>
    %cst_63 = arith.constant 9.99999974E-6 : f32
    %227 = arith.addf %224, %cst_63 : f32
    %228 = math.rsqrt %227 : f32
    %229 = vector.broadcast %228 : f32 to vector<5x8xf32>
    %230 = arith.mulf %226, %229 : vector<5x8xf32>
    %cst_64 = arith.constant dense<0.000000e+00> : vector<5x5xf32>
    %231 = tpu.matmul %190, %210, %cst_64 {dimension_numbers = #tpu.dot_dimension_numbers<[1], [1], [0], [0], [0, 0, 1, 0], [], []>} : vector<5x8xf32>, vector<5x8xf32>, vector<5x5xf32> -> vector<5x5xf32>
    %cst_65 = arith.constant 0.44721359 : f32
    %232 = vector.broadcast %cst_65 : f32 to vector<5x5xf32>
    %233 = arith.mulf %231, %232 : vector<5x5xf32>
    %cst_66 = arith.constant dense<0xFF800000> : vector<5xf32>
    %234 = vector.multi_reduction <maximumf>, %233, %cst_66 [1] : vector<5x5xf32> to vector<5xf32>
    %235 = vector.shape_cast %234 : vector<5xf32> to vector<5x1xf32>
    %236 = vector.broadcast %235 : vector<5x1xf32> to vector<5x5xf32>
    %237 = arith.subf %233, %236 : vector<5x5xf32>
    %238 = math.exp %237 : vector<5x5xf32>
    %cst_67 = arith.constant dense<0.000000e+00> : vector<5xf32>
    %239 = vector.multi_reduction <add>, %238, %cst_67 [1] : vector<5x5xf32> to vector<5xf32>
    %240 = vector.shape_cast %239 : vector<5xf32> to vector<5x1xf32>
    %241 = tpu.reciprocal %240 {approx = true} : vector<5x1xf32> -> vector<5x1xf32>
    %242 = vector.broadcast %241 : vector<5x1xf32> to vector<5x5xf32>
    %243 = arith.mulf %238, %242 : vector<5x5xf32>
    %cst_68 = arith.constant dense<0.000000e+00> : vector<5x8xf32>
    %244 = tpu.matmul %243, %230, %cst_68 {dimension_numbers = #tpu.dot_dimension_numbers<[1], [0], [0], [1], [0, 0, 1, 1], [], []>} : vector<5x5xf32>, vector<5x8xf32>, vector<5x8xf32> -> vector<5x8xf32>
    %245 = vector.extract_strided_slice %22 {offsets = [0, 24], sizes = [5, 8], strides = [1, 1]} : vector<5x96xf32> to vector<5x8xf32>
    %246 = vector.shape_cast %245 : vector<5x8xf32> to vector<1x5x8xf32>
    %cst_69 = arith.constant dense<0.000000e+00> : vector<1xf32>
    %247 = vector.multi_reduction <add>, %246, %cst_69 [1, 2] : vector<1x5x8xf32> to vector<1xf32>
    %248 = vector.shape_cast %247 : vector<1xf32> to vector<1x1x1xf32>
    %249 = vector.extract %248[0, 0, 0] : f32 from vector<1x1x1xf32>
    %cst_70 = arith.constant 4.000000e+01 : f32
    %250 = arith.divf %249, %cst_70 : f32
    %251 = vector.broadcast %250 : f32 to vector<5x8xf32>
    %252 = arith.subf %245, %251 : vector<5x8xf32>
    %253 = arith.mulf %252, %252 : vector<5x8xf32>
    %254 = vector.shape_cast %253 : vector<5x8xf32> to vector<1x5x8xf32>
    %cst_71 = arith.constant dense<0.000000e+00> : vector<1xf32>
    %255 = vector.multi_reduction <add>, %254, %cst_71 [1, 2] : vector<1x5x8xf32> to vector<1xf32>
    %256 = vector.shape_cast %255 : vector<1xf32> to vector<1x1x1xf32>
    %257 = vector.extract %256[0, 0, 0] : f32 from vector<1x1x1xf32>
    %cst_72 = arith.constant 4.000000e+01 : f32
    %258 = arith.divf %257, %cst_72 : f32
    %259 = vector.broadcast %250 : f32 to vector<5x8xf32>
    %260 = arith.subf %245, %259 : vector<5x8xf32>
    %cst_73 = arith.constant 9.99999974E-6 : f32
    %261 = arith.addf %258, %cst_73 : f32
    %262 = math.rsqrt %261 : f32
    %263 = vector.broadcast %262 : f32 to vector<5x8xf32>
    %264 = arith.mulf %260, %263 : vector<5x8xf32>
    %265 = vector.extract_strided_slice %22 {offsets = [0, 56], sizes = [5, 8], strides = [1, 1]} : vector<5x96xf32> to vector<5x8xf32>
    %266 = vector.shape_cast %265 : vector<5x8xf32> to vector<1x5x8xf32>
    %cst_74 = arith.constant dense<0.000000e+00> : vector<1xf32>
    %267 = vector.multi_reduction <add>, %266, %cst_74 [1, 2] : vector<1x5x8xf32> to vector<1xf32>
    %268 = vector.shape_cast %267 : vector<1xf32> to vector<1x1x1xf32>
    %269 = vector.extract %268[0, 0, 0] : f32 from vector<1x1x1xf32>
    %cst_75 = arith.constant 4.000000e+01 : f32
    %270 = arith.divf %269, %cst_75 : f32
    %271 = vector.broadcast %270 : f32 to vector<5x8xf32>
    %272 = arith.subf %265, %271 : vector<5x8xf32>
    %273 = arith.mulf %272, %272 : vector<5x8xf32>
    %274 = vector.shape_cast %273 : vector<5x8xf32> to vector<1x5x8xf32>
    %cst_76 = arith.constant dense<0.000000e+00> : vector<1xf32>
    %275 = vector.multi_reduction <add>, %274, %cst_76 [1, 2] : vector<1x5x8xf32> to vector<1xf32>
    %276 = vector.shape_cast %275 : vector<1xf32> to vector<1x1x1xf32>
    %277 = vector.extract %276[0, 0, 0] : f32 from vector<1x1x1xf32>
    %cst_77 = arith.constant 4.000000e+01 : f32
    %278 = arith.divf %277, %cst_77 : f32
    %279 = vector.broadcast %270 : f32 to vector<5x8xf32>
    %280 = arith.subf %265, %279 : vector<5x8xf32>
    %cst_78 = arith.constant 9.99999974E-6 : f32
    %281 = arith.addf %278, %cst_78 : f32
    %282 = math.rsqrt %281 : f32
    %283 = vector.broadcast %282 : f32 to vector<5x8xf32>
    %284 = arith.mulf %280, %283 : vector<5x8xf32>
    %285 = vector.extract_strided_slice %22 {offsets = [0, 88], sizes = [5, 8], strides = [1, 1]} : vector<5x96xf32> to vector<5x8xf32>
    %286 = vector.shape_cast %285 : vector<5x8xf32> to vector<1x5x8xf32>
    %cst_79 = arith.constant dense<0.000000e+00> : vector<1xf32>
    %287 = vector.multi_reduction <add>, %286, %cst_79 [1, 2] : vector<1x5x8xf32> to vector<1xf32>
    %288 = vector.shape_cast %287 : vector<1xf32> to vector<1x1x1xf32>
    %289 = vector.extract %288[0, 0, 0] : f32 from vector<1x1x1xf32>
    %cst_80 = arith.constant 4.000000e+01 : f32
    %290 = arith.divf %289, %cst_80 : f32
    %291 = vector.broadcast %290 : f32 to vector<5x8xf32>
    %292 = arith.subf %285, %291 : vector<5x8xf32>
    %293 = arith.mulf %292, %292 : vector<5x8xf32>
    %294 = vector.shape_cast %293 : vector<5x8xf32> to vector<1x5x8xf32>
    %cst_81 = arith.constant dense<0.000000e+00> : vector<1xf32>
    %295 = vector.multi_reduction <add>, %294, %cst_81 [1, 2] : vector<1x5x8xf32> to vector<1xf32>
    %296 = vector.shape_cast %295 : vector<1xf32> to vector<1x1x1xf32>
    %297 = vector.extract %296[0, 0, 0] : f32 from vector<1x1x1xf32>
    %cst_82 = arith.constant 4.000000e+01 : f32
    %298 = arith.divf %297, %cst_82 : f32
    %299 = vector.broadcast %290 : f32 to vector<5x8xf32>
    %300 = arith.subf %285, %299 : vector<5x8xf32>
    %cst_83 = arith.constant 9.99999974E-6 : f32
    %301 = arith.addf %298, %cst_83 : f32
    %302 = math.rsqrt %301 : f32
    %303 = vector.broadcast %302 : f32 to vector<5x8xf32>
    %304 = arith.mulf %300, %303 : vector<5x8xf32>
    %cst_84 = arith.constant dense<0.000000e+00> : vector<5x5xf32>
    %305 = tpu.matmul %264, %284, %cst_84 {dimension_numbers = #tpu.dot_dimension_numbers<[1], [1], [0], [0], [0, 0, 1, 0], [], []>} : vector<5x8xf32>, vector<5x8xf32>, vector<5x5xf32> -> vector<5x5xf32>
    %cst_85 = arith.constant 0.44721359 : f32
    %306 = vector.broadcast %cst_85 : f32 to vector<5x5xf32>
    %307 = arith.mulf %305, %306 : vector<5x5xf32>
    %cst_86 = arith.constant dense<0xFF800000> : vector<5xf32>
    %308 = vector.multi_reduction <maximumf>, %307, %cst_86 [1] : vector<5x5xf32> to vector<5xf32>
    %309 = vector.shape_cast %308 : vector<5xf32> to vector<5x1xf32>
    %310 = vector.broadcast %309 : vector<5x1xf32> to vector<5x5xf32>
    %311 = arith.subf %307, %310 : vector<5x5xf32>
    %312 = math.exp %311 : vector<5x5xf32>
    %cst_87 = arith.constant dense<0.000000e+00> : vector<5xf32>
    %313 = vector.multi_reduction <add>, %312, %cst_87 [1] : vector<5x5xf32> to vector<5xf32>
    %314 = vector.shape_cast %313 : vector<5xf32> to vector<5x1xf32>
    %315 = tpu.reciprocal %314 {approx = true} : vector<5x1xf32> -> vector<5x1xf32>
    %316 = vector.broadcast %315 : vector<5x1xf32> to vector<5x5xf32>
    %317 = arith.mulf %312, %316 : vector<5x5xf32>
    %cst_88 = arith.constant dense<0.000000e+00> : vector<5x8xf32>
    %318 = tpu.matmul %317, %304, %cst_88 {dimension_numbers = #tpu.dot_dimension_numbers<[1], [0], [0], [1], [0, 0, 1, 1], [], []>} : vector<5x5xf32>, vector<5x8xf32>, vector<5x8xf32> -> vector<5x8xf32>
    %319 = tpu.concatenate %96, %170, %244, %318 in 1 : vector<5x8xf32>, vector<5x8xf32>, vector<5x8xf32>, vector<5x8xf32> -> vector<5x32xf32>
    %320 = arith.addf %319, %20 : vector<5x32xf32>
    %321 = vector.shape_cast %320 : vector<5x32xf32> to vector<1x5x32xf32>
    %cst_89 = arith.constant dense<0.000000e+00> : vector<1xf32>
    %322 = vector.multi_reduction <add>, %321, %cst_89 [1, 2] : vector<1x5x32xf32> to vector<1xf32>
    %323 = vector.shape_cast %322 : vector<1xf32> to vector<1x1x1xf32>
    %324 = vector.extract %323[0, 0, 0] : f32 from vector<1x1x1xf32>
    %cst_90 = arith.constant 1.600000e+02 : f32
    %325 = arith.divf %324, %cst_90 : f32
    %326 = vector.broadcast %325 : f32 to vector<5x32xf32>
    %327 = arith.subf %320, %326 : vector<5x32xf32>
    %328 = arith.mulf %327, %327 : vector<5x32xf32>
    %329 = vector.shape_cast %328 : vector<5x32xf32> to vector<1x5x32xf32>
    %cst_91 = arith.constant dense<0.000000e+00> : vector<1xf32>
    %330 = vector.multi_reduction <add>, %329, %cst_91 [1, 2] : vector<1x5x32xf32> to vector<1xf32>
    %331 = vector.shape_cast %330 : vector<1xf32> to vector<1x1x1xf32>
    %332 = vector.extract %331[0, 0, 0] : f32 from vector<1x1x1xf32>
    %cst_92 = arith.constant 1.600000e+02 : f32
    %333 = arith.divf %332, %cst_92 : f32
    %334 = vector.broadcast %325 : f32 to vector<5x32xf32>
    %335 = arith.subf %320, %334 : vector<5x32xf32>
    %cst_93 = arith.constant 9.99999974E-6 : f32
    %336 = arith.addf %333, %cst_93 : f32
    %337 = math.rsqrt %336 : f32
    %338 = vector.broadcast %337 : f32 to vector<5x32xf32>
    %339 = arith.mulf %335, %338 : vector<5x32xf32>
    %c0_94 = arith.constant 0 : index
    %c0_95 = arith.constant 0 : index
    %340 = vector.load %arg4[%c0_94, %c0_95] : memref<1x64xf32, #tpu.memory_space<vmem>>, vector<1x64xf32>
    %341 = vector.extract_strided_slice %339 {offsets = [0, 0], sizes = [1, 32], strides = [1, 1]} : vector<5x32xf32> to vector<1x32xf32>
    %c0_96 = arith.constant 0 : index
    %c0_97 = arith.constant 0 : index
    %c0_98 = arith.constant 0 : index
    %342 = vector.load %arg3[%c0_96, %c0_97, %c0_98] : memref<5x32x64xf32, #tpu.memory_space<vmem>>, vector<1x32x64xf32>
    %343 = vector.shape_cast %342 : vector<1x32x64xf32> to vector<32x64xf32>
    %cst_99 = arith.constant dense<0.000000e+00> : vector<1x64xf32>
    %344 = tpu.matmul %341, %343, %cst_99 {dimension_numbers = #tpu.dot_dimension_numbers<[1], [0], [0], [1], [0, 0, 1, 1], [], []>} : vector<1x32xf32>, vector<32x64xf32>, vector<1x64xf32> -> vector<1x64xf32>
    %345 = arith.addf %340, %344 : vector<1x64xf32>
    %346 = vector.extract_strided_slice %339 {offsets = [1, 0], sizes = [1, 32], strides = [1, 1]} : vector<5x32xf32> to vector<1x32xf32>
    %c1 = arith.constant 1 : index
    %c0_100 = arith.constant 0 : index
    %c0_101 = arith.constant 0 : index
    %347 = vector.load %arg3[%c1, %c0_100, %c0_101] : memref<5x32x64xf32, #tpu.memory_space<vmem>>, vector<1x32x64xf32>
    %348 = vector.shape_cast %347 : vector<1x32x64xf32> to vector<32x64xf32>
    %cst_102 = arith.constant dense<0.000000e+00> : vector<1x64xf32>
    %349 = tpu.matmul %346, %348, %cst_102 {dimension_numbers = #tpu.dot_dimension_numbers<[1], [0], [0], [1], [0, 0, 1, 1], [], []>} : vector<1x32xf32>, vector<32x64xf32>, vector<1x64xf32> -> vector<1x64xf32>
    %350 = arith.addf %345, %349 : vector<1x64xf32>
    %351 = vector.extract_strided_slice %339 {offsets = [2, 0], sizes = [1, 32], strides = [1, 1]} : vector<5x32xf32> to vector<1x32xf32>
    %c2 = arith.constant 2 : index
    %c0_103 = arith.constant 0 : index
    %c0_104 = arith.constant 0 : index
    %352 = vector.load %arg3[%c2, %c0_103, %c0_104] : memref<5x32x64xf32, #tpu.memory_space<vmem>>, vector<1x32x64xf32>
    %353 = vector.shape_cast %352 : vector<1x32x64xf32> to vector<32x64xf32>
    %cst_105 = arith.constant dense<0.000000e+00> : vector<1x64xf32>
    %354 = tpu.matmul %351, %353, %cst_105 {dimension_numbers = #tpu.dot_dimension_numbers<[1], [0], [0], [1], [0, 0, 1, 1], [], []>} : vector<1x32xf32>, vector<32x64xf32>, vector<1x64xf32> -> vector<1x64xf32>
    %355 = arith.addf %350, %354 : vector<1x64xf32>
    %356 = vector.extract_strided_slice %339 {offsets = [3, 0], sizes = [1, 32], strides = [1, 1]} : vector<5x32xf32> to vector<1x32xf32>
    %c3 = arith.constant 3 : index
    %c0_106 = arith.constant 0 : index
    %c0_107 = arith.constant 0 : index
    %357 = vector.load %arg3[%c3, %c0_106, %c0_107] : memref<5x32x64xf32, #tpu.memory_space<vmem>>, vector<1x32x64xf32>
    %358 = vector.shape_cast %357 : vector<1x32x64xf32> to vector<32x64xf32>
    %cst_108 = arith.constant dense<0.000000e+00> : vector<1x64xf32>
    %359 = tpu.matmul %356, %358, %cst_108 {dimension_numbers = #tpu.dot_dimension_numbers<[1], [0], [0], [1], [0, 0, 1, 1], [], []>} : vector<1x32xf32>, vector<32x64xf32>, vector<1x64xf32> -> vector<1x64xf32>
    %360 = arith.addf %355, %359 : vector<1x64xf32>
    %361 = vector.extract_strided_slice %339 {offsets = [4, 0], sizes = [1, 32], strides = [1, 1]} : vector<5x32xf32> to vector<1x32xf32>
    %c4 = arith.constant 4 : index
    %c0_109 = arith.constant 0 : index
    %c0_110 = arith.constant 0 : index
    %362 = vector.load %arg3[%c4, %c0_109, %c0_110] : memref<5x32x64xf32, #tpu.memory_space<vmem>>, vector<1x32x64xf32>
    %363 = vector.shape_cast %362 : vector<1x32x64xf32> to vector<32x64xf32>
    %cst_111 = arith.constant dense<0.000000e+00> : vector<1x64xf32>
    %364 = tpu.matmul %361, %363, %cst_111 {dimension_numbers = #tpu.dot_dimension_numbers<[1], [0], [0], [1], [0, 0, 1, 1], [], []>} : vector<1x32xf32>, vector<32x64xf32>, vector<1x64xf32> -> vector<1x64xf32>
    %365 = arith.addf %360, %364 : vector<1x64xf32>
    %cst_112 = arith.constant 5.000000e-01 : f32
    %366 = vector.broadcast %cst_112 : f32 to vector<1x64xf32>
    %367 = arith.mulf %366, %365 : vector<1x64xf32>
    %cst_113 = arith.constant 0.707106769 : f32
    %368 = vector.broadcast %cst_113 : f32 to vector<1x64xf32>
    %369 = arith.mulf %365, %368 : vector<1x64xf32>
    %370 = math.absf %369 : vector<1x64xf32>
    %cst_114 = arith.constant 0.327591091 : f32
    %371 = vector.broadcast %cst_114 : f32 to vector<1x64xf32>
    %372 = arith.mulf %371, %370 : vector<1x64xf32>
    %cst_115 = arith.constant 1.000000e+00 : f32
    %373 = vector.broadcast %cst_115 : f32 to vector<1x64xf32>
    %374 = arith.addf %373, %372 : vector<1x64xf32>
    %cst_116 = arith.constant 1.000000e+00 : f32
    %375 = vector.broadcast %cst_116 : f32 to vector<1x64xf32>
    %376 = arith.divf %375, %374 : vector<1x64xf32>
    %cst_117 = arith.constant 1.06140542 : f32
    %377 = vector.broadcast %cst_117 : f32 to vector<1x64xf32>
    %378 = arith.mulf %377, %376 : vector<1x64xf32>
    %cst_118 = arith.constant -1.45315206 : f32
    %379 = vector.broadcast %cst_118 : f32 to vector<1x64xf32>
    %380 = arith.addf %378, %379 : vector<1x64xf32>
    %381 = arith.mulf %380, %376 : vector<1x64xf32>
    %cst_119 = arith.constant 1.42141378 : f32
    %382 = vector.broadcast %cst_119 : f32 to vector<1x64xf32>
    %383 = arith.addf %381, %382 : vector<1x64xf32>
    %384 = arith.mulf %383, %376 : vector<1x64xf32>
    %cst_120 = arith.constant -0.284496725 : f32
    %385 = vector.broadcast %cst_120 : f32 to vector<1x64xf32>
    %386 = arith.addf %384, %385 : vector<1x64xf32>
    %387 = arith.mulf %386, %376 : vector<1x64xf32>
    %cst_121 = arith.constant 0.254829586 : f32
    %388 = vector.broadcast %cst_121 : f32 to vector<1x64xf32>
    %389 = arith.addf %387, %388 : vector<1x64xf32>
    %390 = arith.mulf %389, %376 : vector<1x64xf32>
    %cst_122 = arith.constant 0.000000e+00 : f32
    %391 = vector.broadcast %cst_122 : f32 to vector<1x64xf32>
    %392 = arith.subf %391, %370 : vector<1x64xf32>
    %393 = arith.mulf %392, %370 : vector<1x64xf32>
    %394 = math.exp %393 : vector<1x64xf32>
    %395 = arith.mulf %390, %394 : vector<1x64xf32>
    %cst_123 = arith.constant 1.000000e+00 : f32
    %396 = vector.broadcast %cst_123 : f32 to vector<1x64xf32>
    %397 = arith.subf %396, %395 : vector<1x64xf32>
    %cst_124 = arith.constant 0.000000e+00 : f32
    %398 = vector.broadcast %cst_124 : f32 to vector<1x64xf32>
    %399 = arith.cmpf olt, %369, %398 : vector<1x64xf32>
    %cst_125 = arith.constant 0.000000e+00 : f32
    %400 = vector.broadcast %cst_125 : f32 to vector<1x64xf32>
    %401 = arith.subf %400, %397 : vector<1x64xf32>
    %402 = arith.select %399, %401, %397 : vector<1x64xi1>, vector<1x64xf32>
    %cst_126 = arith.constant 1.000000e+00 : f32
    %403 = vector.broadcast %cst_126 : f32 to vector<1x64xf32>
    %404 = arith.addf %403, %402 : vector<1x64xf32>
    %405 = arith.mulf %367, %404 : vector<1x64xf32>
    %c0_127 = arith.constant 0 : index
    %c0_128 = arith.constant 0 : index
    %c0_129 = arith.constant 0 : index
    %406 = vector.load %arg5[%c0_127, %c0_128, %c0_129] : memref<5x64x32xf32, #tpu.memory_space<vmem>>, vector<1x64x32xf32>
    %407 = vector.shape_cast %406 : vector<1x64x32xf32> to vector<64x32xf32>
    %cst_130 = arith.constant dense<0.000000e+00> : vector<1x32xf32>
    %408 = tpu.matmul %405, %407, %cst_130 {dimension_numbers = #tpu.dot_dimension_numbers<[1], [0], [0], [1], [0, 0, 1, 1], [], []>} : vector<1x64xf32>, vector<64x32xf32>, vector<1x32xf32> -> vector<1x32xf32>
    %c1_131 = arith.constant 1 : index
    %c0_132 = arith.constant 0 : index
    %c0_133 = arith.constant 0 : index
    %409 = vector.load %arg5[%c1_131, %c0_132, %c0_133] : memref<5x64x32xf32, #tpu.memory_space<vmem>>, vector<1x64x32xf32>
    %410 = vector.shape_cast %409 : vector<1x64x32xf32> to vector<64x32xf32>
    %cst_134 = arith.constant dense<0.000000e+00> : vector<1x32xf32>
    %411 = tpu.matmul %405, %410, %cst_134 {dimension_numbers = #tpu.dot_dimension_numbers<[1], [0], [0], [1], [0, 0, 1, 1], [], []>} : vector<1x64xf32>, vector<64x32xf32>, vector<1x32xf32> -> vector<1x32xf32>
    %c2_135 = arith.constant 2 : index
    %c0_136 = arith.constant 0 : index
    %c0_137 = arith.constant 0 : index
    %412 = vector.load %arg5[%c2_135, %c0_136, %c0_137] : memref<5x64x32xf32, #tpu.memory_space<vmem>>, vector<1x64x32xf32>
    %413 = vector.shape_cast %412 : vector<1x64x32xf32> to vector<64x32xf32>
    %cst_138 = arith.constant dense<0.000000e+00> : vector<1x32xf32>
    %414 = tpu.matmul %405, %413, %cst_138 {dimension_numbers = #tpu.dot_dimension_numbers<[1], [0], [0], [1], [0, 0, 1, 1], [], []>} : vector<1x64xf32>, vector<64x32xf32>, vector<1x32xf32> -> vector<1x32xf32>
    %c3_139 = arith.constant 3 : index
    %c0_140 = arith.constant 0 : index
    %c0_141 = arith.constant 0 : index
    %415 = vector.load %arg5[%c3_139, %c0_140, %c0_141] : memref<5x64x32xf32, #tpu.memory_space<vmem>>, vector<1x64x32xf32>
    %416 = vector.shape_cast %415 : vector<1x64x32xf32> to vector<64x32xf32>
    %cst_142 = arith.constant dense<0.000000e+00> : vector<1x32xf32>
    %417 = tpu.matmul %405, %416, %cst_142 {dimension_numbers = #tpu.dot_dimension_numbers<[1], [0], [0], [1], [0, 0, 1, 1], [], []>} : vector<1x64xf32>, vector<64x32xf32>, vector<1x32xf32> -> vector<1x32xf32>
    %c4_143 = arith.constant 4 : index
    %c0_144 = arith.constant 0 : index
    %c0_145 = arith.constant 0 : index
    %418 = vector.load %arg5[%c4_143, %c0_144, %c0_145] : memref<5x64x32xf32, #tpu.memory_space<vmem>>, vector<1x64x32xf32>
    %419 = vector.shape_cast %418 : vector<1x64x32xf32> to vector<64x32xf32>
    %cst_146 = arith.constant dense<0.000000e+00> : vector<1x32xf32>
    %420 = tpu.matmul %405, %419, %cst_146 {dimension_numbers = #tpu.dot_dimension_numbers<[1], [0], [0], [1], [0, 0, 1, 1], [], []>} : vector<1x64xf32>, vector<64x32xf32>, vector<1x32xf32> -> vector<1x32xf32>
    %421 = tpu.concatenate %408, %411, %414, %417, %420 in 0 : vector<1x32xf32>, vector<1x32xf32>, vector<1x32xf32>, vector<1x32xf32>, vector<1x32xf32> -> vector<5x32xf32>
    %c0_147 = arith.constant 0 : index
    %c0_148 = arith.constant 0 : index
    %422 = vector.load %arg6[%c0_147, %c0_148] : memref<5x32xf32, #tpu.memory_space<vmem>>, vector<5x32xf32>
    %423 = arith.addf %421, %422 : vector<5x32xf32>
    %cst_149 = arith.constant 5.000000e-01 : f32
    %424 = vector.broadcast %cst_149 : f32 to vector<5x32xf32>
    %425 = arith.mulf %424, %423 : vector<5x32xf32>
    %cst_150 = arith.constant 0.707106769 : f32
    %426 = vector.broadcast %cst_150 : f32 to vector<5x32xf32>
    %427 = arith.mulf %423, %426 : vector<5x32xf32>
    %428 = math.absf %427 : vector<5x32xf32>
    %cst_151 = arith.constant 0.327591091 : f32
    %429 = vector.broadcast %cst_151 : f32 to vector<5x32xf32>
    %430 = arith.mulf %429, %428 : vector<5x32xf32>
    %cst_152 = arith.constant 1.000000e+00 : f32
    %431 = vector.broadcast %cst_152 : f32 to vector<5x32xf32>
    %432 = arith.addf %431, %430 : vector<5x32xf32>
    %cst_153 = arith.constant 1.000000e+00 : f32
    %433 = vector.broadcast %cst_153 : f32 to vector<5x32xf32>
    %434 = arith.divf %433, %432 : vector<5x32xf32>
    %cst_154 = arith.constant 1.06140542 : f32
    %435 = vector.broadcast %cst_154 : f32 to vector<5x32xf32>
    %436 = arith.mulf %435, %434 : vector<5x32xf32>
    %cst_155 = arith.constant -1.45315206 : f32
    %437 = vector.broadcast %cst_155 : f32 to vector<5x32xf32>
    %438 = arith.addf %436, %437 : vector<5x32xf32>
    %439 = arith.mulf %438, %434 : vector<5x32xf32>
    %cst_156 = arith.constant 1.42141378 : f32
    %440 = vector.broadcast %cst_156 : f32 to vector<5x32xf32>
    %441 = arith.addf %439, %440 : vector<5x32xf32>
    %442 = arith.mulf %441, %434 : vector<5x32xf32>
    %cst_157 = arith.constant -0.284496725 : f32
    %443 = vector.broadcast %cst_157 : f32 to vector<5x32xf32>
    %444 = arith.addf %442, %443 : vector<5x32xf32>
    %445 = arith.mulf %444, %434 : vector<5x32xf32>
    %cst_158 = arith.constant 0.254829586 : f32
    %446 = vector.broadcast %cst_158 : f32 to vector<5x32xf32>
    %447 = arith.addf %445, %446 : vector<5x32xf32>
    %448 = arith.mulf %447, %434 : vector<5x32xf32>
    %cst_159 = arith.constant 0.000000e+00 : f32
    %449 = vector.broadcast %cst_159 : f32 to vector<5x32xf32>
    %450 = arith.subf %449, %428 : vector<5x32xf32>
    %451 = arith.mulf %450, %428 : vector<5x32xf32>
    %452 = math.exp %451 : vector<5x32xf32>
    %453 = arith.mulf %448, %452 : vector<5x32xf32>
    %cst_160 = arith.constant 1.000000e+00 : f32
    %454 = vector.broadcast %cst_160 : f32 to vector<5x32xf32>
    %455 = arith.subf %454, %453 : vector<5x32xf32>
    %cst_161 = arith.constant 0.000000e+00 : f32
    %456 = vector.broadcast %cst_161 : f32 to vector<5x32xf32>
    %457 = arith.cmpf olt, %427, %456 : vector<5x32xf32>
    %cst_162 = arith.constant 0.000000e+00 : f32
    %458 = vector.broadcast %cst_162 : f32 to vector<5x32xf32>
    %459 = arith.subf %458, %455 : vector<5x32xf32>
    %460 = arith.select %457, %459, %455 : vector<5x32xi1>, vector<5x32xf32>
    %cst_163 = arith.constant 1.000000e+00 : f32
    %461 = vector.broadcast %cst_163 : f32 to vector<5x32xf32>
    %462 = arith.addf %461, %460 : vector<5x32xf32>
    %463 = arith.mulf %425, %462 : vector<5x32xf32>
    %464 = arith.addf %320, %463 : vector<5x32xf32>
    %c0_164 = arith.constant 0 : index
    %c0_165 = arith.constant 0 : index
    %c0_166 = arith.constant 0 : index
    %465 = vector.load %arg7[%c0_164, %c0_165, %c0_166] : memref<1x5x32xf32, #tpu.memory_space<vmem>>, vector<1x5x32xf32>
    %466 = vector.shape_cast %465 : vector<1x5x32xf32> to vector<5x32xf32>
    %467 = vector.shape_cast %464 : vector<5x32xf32> to vector<1x5x32xf32>
    tpu.vector_store %arg7[%c0_164, %c0_165, %c0_166], %467 {strides = array<i32>} : memref<1x5x32xf32, #tpu.memory_space<vmem>>, vector<1x5x32xf32>,
    return
  }
  func.func @transform_0(%arg0: i32) -> (i32, i32, i32) {
    %c0_i32 = arith.constant 0 : i32
    %c0_i32_0 = arith.constant 0 : i32
    %c0_i32_1 = arith.constant 0 : i32
    return %arg0, %c0_i32, %c0_i32_0 : i32, i32, i32
  }
  func.func @transform_1(%arg0: i32) -> (i32, i32) {
    %c0_i32 = arith.constant 0 : i32
    %c0_i32_0 = arith.constant 0 : i32
    %c0_i32_1 = arith.constant 0 : i32
    return %c0_i32, %c0_i32_0 : i32, i32
  }
  func.func @transform_2(%arg0: i32) -> (i32, i32, i32) {
    %c0_i32 = arith.constant 0 : i32
    %c0_i32_0 = arith.constant 0 : i32
    %c0_i32_1 = arith.constant 0 : i32
    %c0_i32_2 = arith.constant 0 : i32
    return %c0_i32, %c0_i32_0, %c0_i32_1 : i32, i32, i32
  }
  func.func @transform_3(%arg0: i32) -> (i32, i32) {
    %c0_i32 = arith.constant 0 : i32
    %c0_i32_0 = arith.constant 0 : i32
    %c0_i32_1 = arith.constant 0 : i32
    return %c0_i32, %c0_i32_0 : i32, i32
  }
  func.func @transform_4(%arg0: i32) -> (i32, i32, i32) {
    %c0_i32 = arith.constant 0 : i32
    %c0_i32_0 = arith.constant 0 : i32
    %c0_i32_1 = arith.constant 0 : i32
    %c0_i32_2 = arith.constant 0 : i32
    return %c0_i32, %c0_i32_0, %c0_i32_1 : i32, i32, i32
  }
  func.func @transform_5(%arg0: i32) -> (i32, i32) {
    %c0_i32 = arith.constant 0 : i32
    %c0_i32_0 = arith.constant 0 : i32
    %c0_i32_1 = arith.constant 0 : i32
    return %c0_i32, %c0_i32_0 : i32, i32
  }
  func.func @transform_6(%arg0: i32) -> (i32, i32, i32) {
    %c0_i32 = arith.constant 0 : i32
    %c0_i32_0 = arith.constant 0 : i32
    %c0_i32_1 = arith.constant 0 : i32
    return %arg0, %c0_i32, %c0_i32_0 : i32, i32, i32
  }
}

</mosaic_0001>

<llo_original>
// kernel: tpu_custom_call.1
$region0: #{tpu_custom_call.1}
  #allocation0 [shape = 'u32[]', space=smem, size = 0x4, offset = 0x4, fixed_abs, tag = 'smem constant byte address 0x4 - core index']
  #allocation1 [shape = 'u32[144,128]{1,0:T(1,128)}', space=vmem, size = 0x12000, scoped, tag = 'internal scratch']
  %s0 = inlined_call_operand.vmem [shape: f32[2,5,32], index: 0, kind: input, shape index: {}]
  %s1 = inlined_call_operand.vmem [shape: f32[32,96], index: 1, kind: input, shape index: {}]
  %s2 = inlined_call_operand.vmem [shape: f32[5,32,64], index: 2, kind: input, shape index: {}]
  %s3 = inlined_call_operand.vmem [shape: f32[1,64], index: 3, kind: input, shape index: {}]
  %s4 = inlined_call_operand.vmem [shape: f32[5,64,32], index: 4, kind: input, shape index: {}]
  %s5 = inlined_call_operand.vmem [shape: f32[5,32], index: 5, kind: input, shape index: {}]
  %s6 = inlined_call_operand.vmem [shape: f32[2,5,32], index: 6, kind: output, shape index: {}]
  %s7 = sld [smem:[#allocation0]]
  $region57: #{tpu_custom_call.1} parent=0
    _
  %s9 = ssub.s32 1, %s7
  %s10 = scalar_select 0, %s9, %s7
  loop: start=0, step=1, limit=4
  $region2: #{tpu_custom_call.1} parent=0 // loop_pre_header
    _
  $region3: #{tpu_custom_call.1} parent=0 // loop_header
    %s12 = sphi 0, %s16
    %p13 = scmp.ge.s32.totalorder %s12, 4
    %s22 = sphi 0, %s24
    %s25 = sphi 0, %s22
    %s26 = sphi 0, %s25
    %s42 = sphi 0, %s26
    %s46 = sphi 0, %s46
    %s48 = sphi 0, %s46
    %s49 = sphi 0, %s48
    %s63 = sphi 0, %s49
    %s67 = sphi 0, %s67
    %s69 = sphi 0, %s67
    %s70 = sphi 0, %s69
    %s84 = sphi 0, %s70
    %s88 = sphi 0, %s88
    %s90 = sphi 0, %s88
    %s91 = sphi 0, %s90
    %s105 = sphi 0, %s91
    %s109 = sphi 0, %s109
    %s111 = sphi 0, %s109
    %s112 = sphi 0, %s111
    %s126 = sphi 0, %s112
    %s130 = sphi 0, %s130
    %s132 = sphi 0, %s130
    %s133 = sphi 0, %s132
    %s147 = sphi 0, %s133
    %s153 = sphi 0, %s155
    %s156 = sphi 0, %s153
    %s157 = sphi 0, %s156
    %s173 = sphi 0, %s157
  $region4: #{tpu_custom_call.1} parent=0 // loop_header_branch
    %15 = sbr.rel (%p13) target = $region8
  $region5: #{tpu_custom_call.1} parent=0 // loop_body
    %s17 = ssub.s32 %s12, 1
    %s18 = ssub.s32 %s12, 2
    %s19 = sadd.s32 %s12, 1
    %s20 = ssub.s32 %s12, %s19
    %p21 = scmp.eq.s32.totalorder %s20, 0
    %s23 = sadd.s32 %s22, 1
    %s24 = scalar_select %p21, %s22, %s23
    %p27 = pneg %p21
    %p28 = scmp.eq.s32.totalorder %s12, 1
    %p29 = por %p27, %p28
    %p30 = scmp.ne.s32.totalorder %s22, %s25
    %p31 = scmp.eq.s32.totalorder %s12, 0
    %p32 = por %p30, %p31
    %p33 = scmp.ne.s32.totalorder %s22, %s25
    %p34 = scmp.eq.s32.totalorder %s17, 1
    %p35 = por %p33, %p34
    %p36 = scmp.ne.s32.totalorder %s25, %s26
    %p37 = scmp.eq.s32.totalorder %s17, 0
    %p38 = por %p36, %p37
    %p39 = scmp.ne.s32.totalorder %s25, %s26
    %p40 = scmp.eq.s32.totalorder %s18, 1
    %p41 = por %p39, %p40
    %p43 = scmp.ne.s32.totalorder %s26, %s42
    %p44 = scmp.eq.s32.totalorder %s18, 0
    %p45 = por %p43, %p44
    %s47 = sadd.s32 %s46, 1
    %p50 = scmp.eq.s32.totalorder %s12, 1
    %p51 = scmp.ne.s32.totalorder %s46, %s48
    %p52 = scmp.eq.s32.totalorder %s12, 0
    %p53 = por %p51, %p52
    %p54 = scmp.ne.s32.totalorder %s46, %s48
    %p55 = scmp.eq.s32.totalorder %s17, 1
    %p56 = por %p54, %p55
    %p57 = scmp.ne.s32.totalorder %s48, %s49
    %p58 = scmp.eq.s32.totalorder %s17, 0
    %p59 = por %p57, %p58
    %p60 = scmp.ne.s32.totalorder %s48, %s49
    %p61 = scmp.eq.s32.totalorder %s18, 1
    %p62 = por %p60, %p61
    %p64 = scmp.ne.s32.totalorder %s49, %s63
    %p65 = scmp.eq.s32.totalorder %s18, 0
    %p66 = por %p64, %p65
    %s68 = sadd.s32 %s67, 1
    %p71 = scmp.eq.s32.totalorder %s12, 1
    %p72 = scmp.ne.s32.totalorder %s67, %s69
    %p73 = scmp.eq.s32.totalorder %s12, 0
    %p74 = por %p72, %p73
    %p75 = scmp.ne.s32.totalorder %s67, %s69
    %p76 = scmp.eq.s32.totalorder %s17, 1
    %p77 = por %p75, %p76
    %p78 = scmp.ne.s32.totalorder %s69, %s70
    %p79 = scmp.eq.s32.totalorder %s17, 0
    %p80 = por %p78, %p79
    %p81 = scmp.ne.s32.totalorder %s69, %s70
    %p82 = scmp.eq.s32.totalorder %s18, 1
    %p83 = por %p81, %p82
    %p85 = scmp.ne.s32.totalorder %s70, %s84
    %p86 = scmp.eq.s32.totalorder %s18, 0
    %p87 = por %p85, %p86
    %s89 = sadd.s32 %s88, 1
    %p92 = scmp.eq.s32.totalorder %s12, 1
    %p93 = scmp.ne.s32.totalorder %s88, %s90
    %p94 = scmp.eq.s32.totalorder %s12, 0
    %p95 = por %p93, %p94
    %p96 = scmp.ne.s32.totalorder %s88, %s90
    %p97 = scmp.eq.s32.totalorder %s17, 1
    %p98 = por %p96, %p97
    %p99 = scmp.ne.s32.totalorder %s90, %s91
    %p100 = scmp.eq.s32.totalorder %s17, 0
    %p101 = por %p99, %p100
    %p102 = scmp.ne.s32.totalorder %s90, %s91
    %p103 = scmp.eq.s32.totalorder %s18, 1
    %p104 = por %p102, %p103
    %p106 = scmp.ne.s32.totalorder %s91, %s105
    %p107 = scmp.eq.s32.totalorder %s18, 0
    %p108 = por %p106, %p107
    %s110 = sadd.s32 %s109, 1
    %p113 = scmp.eq.s32.totalorder %s12, 1
    %p114 = scmp.ne.s32.totalorder %s109, %s111
    %p115 = scmp.eq.s32.totalorder %s12, 0
    %p116 = por %p114, %p115
    %p117 = scmp.ne.s32.totalorder %s109, %s111
    %p118 = scmp.eq.s32.totalorder %s17, 1
    %p119 = por %p117, %p118
    %p120 = scmp.ne.s32.totalorder %s111, %s112
    %p121 = scmp.eq.s32.totalorder %s17, 0
    %p122 = por %p120, %p121
    %p123 = scmp.ne.s32.totalorder %s111, %s112
    %p124 = scmp.eq.s32.totalorder %s18, 1
    %p125 = por %p123, %p124
    %p127 = scmp.ne.s32.totalorder %s112, %s126
    %p128 = scmp.eq.s32.totalorder %s18, 0
    %p129 = por %p127, %p128
    %s131 = sadd.s32 %s130, 1
    %p134 = scmp.eq.s32.totalorder %s12, 1
    %p135 = scmp.ne.s32.totalorder %s130, %s132
    %p136 = scmp.eq.s32.totalorder %s12, 0
    %p137 = por %p135, %p136
    %p138 = scmp.ne.s32.totalorder %s130, %s132
    %p139 = scmp.eq.s32.totalorder %s17, 1
    %p140 = por %p138, %p139
    %p141 = scmp.ne.s32.totalorder %s132, %s133
    %p142 = scmp.eq.s32.totalorder %s17, 0
    %p143 = por %p141, %p142
    %p144 = scmp.ne.s32.totalorder %s132, %s133
    %p145 = scmp.eq.s32.totalorder %s18, 1
    %p146 = por %p144, %p145
    %p148 = scmp.ne.s32.totalorder %s133, %s147
    %p149 = scmp.eq.s32.totalorder %s18, 0
    %p150 = por %p148, %p149
    %s151 = ssub.s32 %s12, %s19
    %p152 = scmp.eq.s32.totalorder %s151, 0
    %s154 = sadd.s32 %s153, 1
    %s155 = scalar_select %p152, %s153, %s154
    %p158 = pneg %p152
    %p159 = scmp.eq.s32.totalorder %s12, 1
    %p160 = por %p158, %p159
    %p161 = scmp.ne.s32.totalorder %s153, %s156
    %p162 = scmp.eq.s32.totalorder %s12, 0
    %p163 = por %p161, %p162
    %p164 = scmp.ne.s32.totalorder %s153, %s156
    %p165 = scmp.eq.s32.totalorder %s17, 1
    %p166 = por %p164, %p165
    %p167 = scmp.ne.s32.totalorder %s156, %s157
    %p168 = scmp.eq.s32.totalorder %s17, 0
    %p169 = por %p167, %p168
    %p170 = scmp.ne.s32.totalorder %s156, %s157
    %p171 = scmp.eq.s32.totalorder %s18, 1
    %p172 = por %p170, %p171
    %p174 = scmp.ne.s32.totalorder %s157, %s173
    %p175 = scmp.eq.s32.totalorder %s18, 0
    %p176 = por %p174, %p175
    %p177 = scmp.le.s32.totalorder 1, %s12
    %p178 = scmp.lt.s32.totalorder %s12, 3
    %p179 = pnand %p177, %p178
    %p180 = pneg %p179
    // Predicated region
    $region9: #{tpu_custom_call.1} parent=5 // pred_check
      _
    $region10: #{tpu_custom_call.1} parent=5 // pred_check_branch
      %182 = sbr.rel (%p179) target = $region12
    $region11: #{tpu_custom_call.1} parent=5 // pred_region
      %s183 = ssub.s32 %s12, 1
      // Predicated region
      $region13: #{tpu_custom_call.1} parent=11 // pred_check
        %p184 = pneg %p59
      $region14: #{tpu_custom_call.1} parent=11 // pred_check_branch
        %186 = sbr.rel (%p184) target = $region16
      $region15: #{tpu_custom_call.1} parent=11 // pred_region
        _
      $region16: #{tpu_custom_call.1} parent=11 // pred_fallthru
        _
      // Predicated region
      $region17: #{tpu_custom_call.1} parent=11 // pred_check
        %p187 = pneg %p80
      $region18: #{tpu_custom_call.1} parent=11 // pred_check_branch
        %189 = sbr.rel (%p187) target = $region20
      $region19: #{tpu_custom_call.1} parent=11 // pred_region
        _
      $region20: #{tpu_custom_call.1} parent=11 // pred_fallthru
        _
      // Predicated region
      $region21: #{tpu_custom_call.1} parent=11 // pred_check
        %p190 = pneg %p101
      $region22: #{tpu_custom_call.1} parent=11 // pred_check_branch
        %192 = sbr.rel (%p190) target = $region24
      $region23: #{tpu_custom_call.1} parent=11 // pred_region
        _
      $region24: #{tpu_custom_call.1} parent=11 // pred_fallthru
        _
      // Predicated region
      $region25: #{tpu_custom_call.1} parent=11 // pred_check
        %p193 = pneg %p122
      $region26: #{tpu_custom_call.1} parent=11 // pred_check_branch
        %195 = sbr.rel (%p193) target = $region28
      $region27: #{tpu_custom_call.1} parent=11 // pred_region
        _
      $region28: #{tpu_custom_call.1} parent=11 // pred_fallthru
        _
      // Predicated region
      $region29: #{tpu_custom_call.1} parent=11 // pred_check
        %p196 = pneg %p143
      $region30: #{tpu_custom_call.1} parent=11 // pred_check_branch
        %198 = sbr.rel (%p196) target = $region32
      $region31: #{tpu_custom_call.1} parent=11 // pred_region
        _
      $region32: #{tpu_custom_call.1} parent=11 // pred_fallthru
        _
    $region12: #{tpu_custom_call.1} parent=5 // pred_fallthru
      _
    %p199 = scmp.lt.s32.totalorder %s12, 2
    // Predicated region
    $region33: #{tpu_custom_call.1} parent=5 // pred_check
      %p200 = pneg %p199
    $region34: #{tpu_custom_call.1} parent=5 // pred_check_branch
      %202 = sbr.rel (%p200) target = $region36
    $region35: #{tpu_custom_call.1} parent=5 // pred_region
      // Predicated region
      $region37: #{tpu_custom_call.1} parent=35 // pred_check
        %p203 = pneg %p32
      $region38: #{tpu_custom_call.1} parent=35 // pred_check_branch
        %205 = sbr.rel (%p203) target = $region40
      $region39: #{tpu_custom_call.1} parent=35 // pred_region
        %p206 = scmp.lt.s32.totalorder %s12, 1
        %s207 = scalar_select %p206, %s12, 1
        %s208 = smul.addr %s207, 8
        %s209 = scalar_lea.vmem %s0, %s208
      $region40: #{tpu_custom_call.1} parent=35 // pred_fallthru
        _
    $region36: #{tpu_custom_call.1} parent=5 // pred_fallthru
      _
    %p210 = scmp.le.s32.totalorder 1, %s12
    %p211 = scmp.lt.s32.totalorder %s12, 3
    %p212 = pnand %p210, %p211
    %p213 = pneg %p212
    // Predicated region
    $region41: #{tpu_custom_call.1} parent=5 // pred_check
      _
    $region42: #{tpu_custom_call.1} parent=5 // pred_check_branch
      %215 = sbr.rel (%p212) target = $region44
    $region43: #{tpu_custom_call.1} parent=5 // pred_region
      %s216 = ssub.s32 %s12, 1
      %p217 = scmp.lt.s32.totalorder %s17, 1
      %s218 = scalar_select %p217, %s17, 1
      %s219 = smul.addr %s218, 8
      %s220 = scalar_lea.vmem %s0, %s219
      %p221 = pneg %p38
      %p222 = pneg %p35
      %p223 = pneg %p59
      %p224 = pneg %p56
      %p225 = pneg %p80
      %p226 = pneg %p77
      %p227 = pneg %p101
      %p228 = pneg %p98
      %p229 = pneg %p122
      %p230 = pneg %p119
      %p231 = pneg %p143
      %p232 = pneg %p140
      %p233 = pneg %p169
      %p234 = pneg %p166
      %p235 = scmp.lt.s32.totalorder %s17, 1
      %s236 = scalar_select %p235, %s17, 1
      %s237 = smul.addr %s236, 8
      %s238 = scalar_lea.vmem %s6, %s237
      %p239 = scmp.lt.s32.totalorder %s17, 1
      %s240 = scalar_select %p239, %s17, 1
      %s241 = smul.addr %s240, 8
      %s242 = scalar_lea.vmem %s0, %s241
      %p243 = scmp.lt.s32.totalorder %s17, 1
      %s244 = scalar_select %p243, %s17, 1
      %s245 = smul.addr %s244, 8
      %s246 = scalar_lea.vmem %s6, %s245
      %v247 = vld [vmem:[%s242] sm:$0x1f]
      %vm248 = vcmask 258048
      %v249 = vsel %vm248, %v247, 0.0
      %250 = vadd.xlane.f32.xlu0 %v249
      %v251 = vpop.xlane.xlu0 %250
      %v252 = vrot.slane %v251, 4
      %v253 = vadd.f32 %v251, %v252
      %v254 = vrot.slane %v253, 2
      %v255 = vadd.f32 %v253, %v254
      %v256 = vrot.slane %v255, 1
      %v257 = vadd.f32 %v255, %v256
      %s258 = vtos %v257
      %v259 = vrcp.pop 160.0
      %s260 = vtos %v259
      %s261 = smul.f32 %s258, %s260
      %v262 = vstv %s261
      %v263 = vsub.f32 %v247, %v262
      %v264 = vmul.f32 %v263, %v263
      %v265 = vsel %vm248, %v264, 0.0
      %266 = vadd.xlane.f32.xlu0 %v265
      %v267 = vpop.xlane.xlu0 %266
      %v268 = vrot.slane %v267, 4
      %v269 = vadd.f32 %v267, %v268
      %v270 = vrot.slane %v269, 2
      %v271 = vadd.f32 %v269, %v270
      %v272 = vrot.slane %v271, 1
      %v273 = vadd.f32 %v271, %v272
      %s274 = vtos %v273
      %v275 = vrcp.pop 160.0
      %s276 = vtos %v275
      %s277 = smul.f32 %s274, %s276
      %s278 = sadd.f32 %s277, 1e-05
      %v279 = vstv %s278
      %v280 = vrsqrt.pop %v279
      %s281 = vtos %v280
      %v282 = vstv %s281
      %v283 = vmul.f32 %v263, %v282
      %v284 = vld [vmem:[%s1] sm:$0xff]
      %v285 = vld [vmem:[%s1 + $0x8] sm:$0xff]
      %v286 = vld [vmem:[%s1 + $0x10] sm:$0xff]
      %v287 = vld [vmem:[%s1 + $0x18] sm:$0xff]
      %vm288 = vcmask 261120
      %v290 = vsel %vm288, %v283, 0
      %292 = vmatprep.subr.mxu0 0.0
      %293 = vmatpush1.msra.mxu0 %v284
      %294 = vmatprep.subr.mxu0 0.0
      %295 = vmatpush1.msra.mxu0 %v285
      %296 = vmatprep.subr.mxu0 0.0
      %297 = vmatpush1.msra.mxu0 %v286
      %298 = vmatprep.subr.mxu0 0.0
      %299 = vmatpush1.msra.mxu0 %v287
      %300 = vmatprep.subr.mxu0 0.0
      %301 = vmatpush1.msra.mxu0 0.0
      %302 = vmatprep.subr.mxu0 0.0
      %303 = vmatpush1.msra.mxu0 0.0
      %304 = vmatprep.subr.mxu0 0.0
      %305 = vmatpush1.msra.mxu0 0.0
      %306 = vmatprep.subr.mxu0 0.0
      %307 = vmatpush1.msra.mxu0 0.0
      %308 = vmatprep.subr.mxu0 0.0
      %309 = vmatpush1.msra.mxu0 0.0
      %310 = vmatprep.subr.mxu0 0.0
      %311 = vmatpush1.msra.mxu0 0.0
      %312 = vmatprep.subr.mxu0 0.0
      %313 = vmatpush1.msra.mxu0 0.0
      %314 = vmatprep.subr.mxu0 0.0
      %315 = vmatpush1.msra.mxu0 0.0
      %316 = vmatprep.subr.mxu0 0.0
      %317 = vmatpush1.msra.mxu0 0.0
      %318 = vmatprep.subr.mxu0 0.0
      %319 = vmatpush1.msra.mxu0 0.0
      %320 = vmatprep.subr.mxu0 0.0
      %321 = vmatpush1.msra.mxu0 0.0
      %322 = vmatprep.subr.mxu0 0.0
      %323 = vmatpush1.msra.mxu0 0.0
      %324 = vmatprep.subr.mxu0 0.0
      %325 = vmatpush1.msra.mxu0 0.0
      %326 = vmatprep.subr.mxu0 0.0
      %327 = vmatpush1.msra.mxu0 0.0
      %328 = vmatprep.subr.mxu0 0.0
      %329 = vmatpush1.msra.mxu0 0.0
      %330 = vmatprep.subr.mxu0 0.0
      %331 = vmatpush1.msra.mxu0 0.0
      %332 = vmatprep.subr.mxu0 0.0
      %333 = vmatpush1.msra.mxu0 0.0
      %334 = vmatprep.subr.mxu0 0.0
      %335 = vmatpush1.msra.mxu0 0.0
      %336 = vmatprep.subr.mxu0 0.0
      %337 = vmatpush1.msra.mxu0 0.0
      %338 = vmatprep.subr.mxu0 0.0
      %339 = vmatpush1.msra.mxu0 0.0
      %340 = vmatprep.subr.mxu0 0.0
      %341 = vmatpush1.msra.mxu0 0.0
      %342 = vmatprep.subr.mxu0 0.0
      %343 = vmatpush1.msra.mxu0 0.0
      %344 = vmatprep.subr.mxu0 0.0
      %345 = vmatpush1.msra.mxu0 0.0
      %346 = vmatprep.subr.mxu0 0.0
      %347 = vmatpush1.msra.mxu0 0.0
      %348 = vmatprep.subr.mxu0 0.0
      %349 = vmatpush1.msra.mxu0 0.0
      %350 = vmatprep.subr.mxu0 0.0
      %351 = vmatpush1.msra.mxu0 0.0
      %352 = vmatprep.subr.mxu0 0.0
      %353 = vmatpush1.msra.mxu0 0.0
      %354 = vmatprep.subr.mxu0 0.0
      %355 = vmatpush1.msra.mxu0 0.0
      %356 = vmatprep.mubr.f32.mxu0 0.0
      %357 = vmatmul.mubr.f32.gmra.mrb[0].mxu0 %v290
      %v358 = vpop.f32.mrb[0].mxu0
      %v359 = vadd.f32 0.0, %v358
      %v360 = vpop.f32.mrb[0].mxu0
      %361 = vdwg.mxu0
      %vm362 = vcmask 61440
      %v363 = vsel %vm362, %v359, 0.0
      %364 = vadd.xlane.f32.xlu0 %v363
      %v365 = vpop.xlane.xlu0 %364
      %v366 = vrot.slane %v365, 4
      %v367 = vadd.f32 %v365, %v366
      %v368 = vrot.slane %v367, 2
      %v369 = vadd.f32 %v367, %v368
      %v370 = vrot.slane %v369, 1
      %v371 = vadd.f32 %v369, %v370
      %s372 = vtos %v371
      %v373 = vrcp.pop 40.0
      %s374 = vtos %v373
      %s375 = smul.f32 %s372, %s374
      %v376 = vstv %s375
      %v377 = vsub.f32 %v359, %v376
      %v378 = vmul.f32 %v377, %v377
      %v379 = vsel %vm362, %v378, 0.0
      %380 = vadd.xlane.f32.xlu0 %v379
      %v381 = vpop.xlane.xlu0 %380
      %v382 = vrot.slane %v381, 4
      %v383 = vadd.f32 %v381, %v382
      %v384 = vrot.slane %v383, 2
      %v385 = vadd.f32 %v383, %v384
      %v386 = vrot.slane %v385, 1
      %v387 = vadd.f32 %v385, %v386
      %s388 = vtos %v387
      %v389 = vrcp.pop 40.0
      %s390 = vtos %v389
      %s391 = smul.f32 %s388, %s390
      %s392 = sadd.f32 %s391, 1e-05
      %v393 = vstv %s392
      %v394 = vrsqrt.pop %v393
      %s395 = vtos %v394
      %v396 = vstv %s395
      %v397 = vmul.f32 %v377, %v396
      %399 = vrot.lane.b32.xlu0 %v359, 96
      %v400 = vpop.permute.xlu0 %399
      %v402 = vsel %vm362, %v400, 0.0
      %403 = vadd.xlane.f32.xlu0 %v402
      %v404 = vpop.xlane.xlu0 %403
      %v405 = vrot.slane %v404, 4
      %v406 = vadd.f32 %v404, %v405
      %v407 = vrot.slane %v406, 2
      %v408 = vadd.f32 %v406, %v407
      %v409 = vrot.slane %v408, 1
      %v410 = vadd.f32 %v408, %v409
      %s411 = vtos %v410
      %v412 = vrcp.pop 40.0
      %s413 = vtos %v412
      %s414 = smul.f32 %s411, %s413
      %v415 = vstv %s414
      %v416 = vsub.f32 %v359, %v415
      %v417 = vmul.f32 %v416, %v416
      %419 = vrot.lane.b32.xlu0 %v417, 96
      %v420 = vpop.permute.xlu0 %419
      %v422 = vsel %vm362, %v420, 0.0
      %423 = vadd.xlane.f32.xlu0 %v422
      %v424 = vpop.xlane.xlu0 %423
      %v425 = vrot.slane %v424, 4
      %v426 = vadd.f32 %v424, %v425
      %v427 = vrot.slane %v426, 2
      %v428 = vadd.f32 %v426, %v427
      %v429 = vrot.slane %v428, 1
      %v430 = vadd.f32 %v428, %v429
      %s431 = vtos %v430
      %v432 = vrcp.pop 40.0
      %s433 = vtos %v432
      %s434 = smul.f32 %s431, %s433
      %s435 = sadd.f32 %s434, 1e-05
      %v436 = vstv %s435
      %v437 = vrsqrt.pop %v436
      %s438 = vtos %v437
      %v439 = vstv %s438
      %v440 = vmul.f32 %v416, %v439
      %441 = vrot.lane.b32.xlu0 %v359, 64
      %v442 = vpop.permute.xlu0 %441
      %v444 = vsel %vm362, %v442, 0.0
      %445 = vadd.xlane.f32.xlu0 %v444
      %v446 = vpop.xlane.xlu0 %445
      %v447 = vrot.slane %v446, 4
      %v448 = vadd.f32 %v446, %v447
      %v449 = vrot.slane %v448, 2
      %v450 = vadd.f32 %v448, %v449
      %v451 = vrot.slane %v450, 1
      %v452 = vadd.f32 %v450, %v451
      %s453 = vtos %v452
      %v454 = vrcp.pop 40.0
      %s455 = vtos %v454
      %s456 = smul.f32 %s453, %s455
      %v457 = vstv %s456
      %v458 = vsub.f32 %v359, %v457
      %v459 = vmul.f32 %v458, %v458
      %461 = vrot.lane.b32.xlu0 %v459, 64
      %v462 = vpop.permute.xlu0 %461
      %v464 = vsel %vm362, %v462, 0.0
      %465 = vadd.xlane.f32.xlu0 %v464
      %v466 = vpop.xlane.xlu0 %465
      %v467 = vrot.slane %v466, 4
      %v468 = vadd.f32 %v466, %v467
      %v469 = vrot.slane %v468, 2
      %v470 = vadd.f32 %v468, %v469
      %v471 = vrot.slane %v470, 1
      %v472 = vadd.f32 %v470, %v471
      %s473 = vtos %v472
      %v474 = vrcp.pop 40.0
      %s475 = vtos %v474
      %s476 = smul.f32 %s473, %s475
      %s477 = sadd.f32 %s476, 1e-05
      %v478 = vstv %s477
      %v479 = vrsqrt.pop %v478
      %s480 = vtos %v479
      %v481 = vstv %s480
      %v482 = vmul.f32 %v458, %v481
      %484 = vrot.lane.b32.xlu0 %v440, 96
      %v485 = vpop.permute.xlu0 %484
      %vm486 = vcmask 64512
      %v488 = vsel %vm486, %v397, 0
      %v490 = vsel %vm486, %v485, 0
      %492 = vmatprep.subr.mxu0 0.0
      %493 = vmatpush1.xpose.msra.mxu0 %v490
      %494 = vmatprep.subr.mxu0 0.0
      %495 = vmatpush1.xpose.msra.mxu0 0.0
      %496 = vmatprep.subr.mxu0 0.0
      %497 = vmatpush1.xpose.msra.mxu0 0.0
      %498 = vmatprep.subr.mxu0 0.0
      %499 = vmatpush1.xpose.msra.mxu0 0.0
      %500 = vmatprep.subr.mxu0 0.0
      %501 = vmatpush1.xpose.msra.mxu0 0.0
      %502 = vmatprep.subr.mxu0 0.0
      %503 = vmatpush1.xpose.msra.mxu0 0.0
      %504 = vmatprep.subr.mxu0 0.0
      %505 = vmatpush1.xpose.msra.mxu0 0.0
      %506 = vmatprep.subr.mxu0 0.0
      %507 = vmatpush1.xpose.msra.mxu0 0.0
      %508 = vmatprep.subr.mxu0 0.0
      %509 = vmatpush1.xpose.msra.mxu0 0.0
      %510 = vmatprep.subr.mxu0 0.0
      %511 = vmatpush1.xpose.msra.mxu0 0.0
      %512 = vmatprep.subr.mxu0 0.0
      %513 = vmatpush1.xpose.msra.mxu0 0.0
      %514 = vmatprep.subr.mxu0 0.0
      %515 = vmatpush1.xpose.msra.mxu0 0.0
      %516 = vmatprep.subr.mxu0 0.0
      %517 = vmatpush1.xpose.msra.mxu0 0.0
      %518 = vmatprep.subr.mxu0 0.0
      %519 = vmatpush1.xpose.msra.mxu0 0.0
      %520 = vmatprep.subr.mxu0 0.0
      %521 = vmatpush1.xpose.msra.mxu0 0.0
      %522 = vmatprep.subr.mxu0 0.0
      %523 = vmatpush1.xpose.msra.mxu0 0.0
      %524 = vmatprep.subr.mxu0 0.0
      %525 = vmatpush1.xpose.msra.mxu0 0.0
      %526 = vmatprep.subr.mxu0 0.0
      %527 = vmatpush1.xpose.msra.mxu0 0.0
      %528 = vmatprep.subr.mxu0 0.0
      %529 = vmatpush1.xpose.msra.mxu0 0.0
      %530 = vmatprep.subr.mxu0 0.0
      %531 = vmatpush1.xpose.msra.mxu0 0.0
      %532 = vmatprep.subr.mxu0 0.0
      %533 = vmatpush1.xpose.msra.mxu0 0.0
      %534 = vmatprep.subr.mxu0 0.0
      %535 = vmatpush1.xpose.msra.mxu0 0.0
      %536 = vmatprep.subr.mxu0 0.0
      %537 = vmatpush1.xpose.msra.mxu0 0.0
      %538 = vmatprep.subr.mxu0 0.0
      %539 = vmatpush1.xpose.msra.mxu0 0.0
      %540 = vmatprep.subr.mxu0 0.0
      %541 = vmatpush1.xpose.msra.mxu0 0.0
      %542 = vmatprep.subr.mxu0 0.0
      %543 = vmatpush1.xpose.msra.mxu0 0.0
      %544 = vmatprep.subr.mxu0 0.0
      %545 = vmatpush1.xpose.msra.mxu0 0.0
      %546 = vmatprep.subr.mxu0 0.0
      %547 = vmatpush1.xpose.msra.mxu0 0.0
      %548 = vmatprep.subr.mxu0 0.0
      %549 = vmatpush1.xpose.msra.mxu0 0.0
      %550 = vmatprep.subr.mxu0 0.0
      %551 = vmatpush1.xpose.msra.mxu0 0.0
      %552 = vmatprep.subr.mxu0 0.0
      %553 = vmatpush1.xpose.msra.mxu0 0.0
      %554 = vmatprep.subr.mxu0 0.0
      %555 = vmatpush1.xpose.msra.mxu0 0.0
      %556 = vmatprep.mubr.f32.mxu0 0.0
      %557 = vmatmul.mubr.f32.gmra.mrb[0].mxu0 %v488
      %v558 = vpop.f32.mrb[0].mxu0
      %v559 = vadd.f32 0.0, %v558
      %v560 = vpop.f32.mrb[0].mxu0
      %561 = vdwg.mxu0
      %v562 = vmul.f32 %v559, 0.4472136
      %vm563 = vcmask 36864
      %v564 = vsel %vm563, %v562, -inf
      %565 = vmax.xlane.f32.xlu0 %v564
      %v566 = vpop.xlane.xlu0 %565
      %v567 = vsub.f32 %v562, %v566
      %v568 = vmul.f32 %v567, 1.442695
      %v569 = vpow.pop %v568
      %v570 = vsel %vm563, %v569, 0.0
      %571 = vadd.xlane.f32.xlu0 %v570
      %v572 = vpop.xlane.xlu0 %571
      %v573 = vrcp.pop %v572
      %v574 = vmul.f32 %v569, %v573
      %576 = vrot.lane.b32.xlu0 %v482, 64
      %v577 = vpop.permute.xlu0 %576
      %vm578 = vcmask 39936
      %v580 = vsel %vm578, %v574, 0
      %vm582 = vcmask 1044480
      %v583 = vsel %vm582, %v577, 0
      %585 = vmatprep.subr.mxu0 0.0
      %586 = vmatpush1.msra.mxu0 %v583
      %587 = vmatprep.subr.mxu0 0.0
      %588 = vmatpush1.msra.mxu0 0.0
      %589 = vmatprep.subr.mxu0 0.0
      %590 = vmatpush1.msra.mxu0 0.0
      %591 = vmatprep.subr.mxu0 0.0
      %592 = vmatpush1.msra.mxu0 0.0
      %593 = vmatprep.subr.mxu0 0.0
      %594 = vmatpush1.msra.mxu0 0.0
      %595 = vmatprep.subr.mxu0 0.0
      %596 = vmatpush1.msra.mxu0 0.0
      %597 = vmatprep.subr.mxu0 0.0
      %598 = vmatpush1.msra.mxu0 0.0
      %599 = vmatprep.subr.mxu0 0.0
      %600 = vmatpush1.msra.mxu0 0.0
      %601 = vmatprep.subr.mxu0 0.0
      %602 = vmatpush1.msra.mxu0 0.0
      %603 = vmatprep.subr.mxu0 0.0
      %604 = vmatpush1.msra.mxu0 0.0
      %605 = vmatprep.subr.mxu0 0.0
      %606 = vmatpush1.msra.mxu0 0.0
      %607 = vmatprep.subr.mxu0 0.0
      %608 = vmatpush1.msra.mxu0 0.0
      %609 = vmatprep.subr.mxu0 0.0
      %610 = vmatpush1.msra.mxu0 0.0
      %611 = vmatprep.subr.mxu0 0.0
      %612 = vmatpush1.msra.mxu0 0.0
      %613 = vmatprep.subr.mxu0 0.0
      %614 = vmatpush1.msra.mxu0 0.0
      %615 = vmatprep.subr.mxu0 0.0
      %616 = vmatpush1.msra.mxu0 0.0
      %617 = vmatprep.subr.mxu0 0.0
      %618 = vmatpush1.msra.mxu0 0.0
      %619 = vmatprep.subr.mxu0 0.0
      %620 = vmatpush1.msra.mxu0 0.0
      %621 = vmatprep.subr.mxu0 0.0
      %622 = vmatpush1.msra.mxu0 0.0
      %623 = vmatprep.subr.mxu0 0.0
      %624 = vmatpush1.msra.mxu0 0.0
      %625 = vmatprep.subr.mxu0 0.0
      %626 = vmatpush1.msra.mxu0 0.0
      %627 = vmatprep.subr.mxu0 0.0
      %628 = vmatpush1.msra.mxu0 0.0
      %629 = vmatprep.subr.mxu0 0.0
      %630 = vmatpush1.msra.mxu0 0.0
      %631 = vmatprep.subr.mxu0 0.0
      %632 = vmatpush1.msra.mxu0 0.0
      %633 = vmatprep.subr.mxu0 0.0
      %634 = vmatpush1.msra.mxu0 0.0
      %635 = vmatprep.subr.mxu0 0.0
      %636 = vmatpush1.msra.mxu0 0.0
      %637 = vmatprep.subr.mxu0 0.0
      %638 = vmatpush1.msra.mxu0 0.0
      %639 = vmatprep.subr.mxu0 0.0
      %640 = vmatpush1.msra.mxu0 0.0
      %641 = vmatprep.subr.mxu0 0.0
      %642 = vmatpush1.msra.mxu0 0.0
      %643 = vmatprep.subr.mxu0 0.0
      %644 = vmatpush1.msra.mxu0 0.0
      %645 = vmatprep.subr.mxu0 0.0
      %646 = vmatpush1.msra.mxu0 0.0
      %647 = vmatprep.subr.mxu0 0.0
      %648 = vmatpush1.msra.mxu0 0.0
      %649 = vmatprep.mubr.f32.mxu0 0.0
      %650 = vmatmul.mubr.f32.gmra.mrb[0].mxu0 %v580
      %v651 = vpop.f32.mrb[0].mxu0
      %v652 = vadd.f32 0.0, %v651
      %v653 = vpop.f32.mrb[0].mxu0
      %654 = vdwg.mxu0
      %655 = vrot.lane.b32.xlu0 %v359, 120
      %v656 = vpop.permute.xlu0 %655
      %v658 = vsel %vm362, %v656, 0.0
      %659 = vadd.xlane.f32.xlu0 %v658
      %v660 = vpop.xlane.xlu0 %659
      %v661 = vrot.slane %v660, 4
      %v662 = vadd.f32 %v660, %v661
      %v663 = vrot.slane %v662, 2
      %v664 = vadd.f32 %v662, %v663
      %v665 = vrot.slane %v664, 1
      %v666 = vadd.f32 %v664, %v665
      %s667 = vtos %v666
      %v668 = vrcp.pop 40.0
      %s669 = vtos %v668
      %s670 = smul.f32 %s667, %s669
      %v671 = vstv %s670
      %v672 = vsub.f32 %v359, %v671
      %v673 = vmul.f32 %v672, %v672
      %675 = vrot.lane.b32.xlu0 %v673, 120
      %v676 = vpop.permute.xlu0 %675
      %v678 = vsel %vm362, %v676, 0.0
      %679 = vadd.xlane.f32.xlu0 %v678
      %v680 = vpop.xlane.xlu0 %679
      %v681 = vrot.slane %v680, 4
      %v682 = vadd.f32 %v680, %v681
      %v683 = vrot.slane %v682, 2
      %v684 = vadd.f32 %v682, %v683
      %v685 = vrot.slane %v684, 1
      %v686 = vadd.f32 %v684, %v685
      %s687 = vtos %v686
      %v688 = vrcp.pop 40.0
      %s689 = vtos %v688
      %s690 = smul.f32 %s687, %s689
      %s691 = sadd.f32 %s690, 1e-05
      %v692 = vstv %s691
      %v693 = vrsqrt.pop %v692
      %s694 = vtos %v693
      %v695 = vstv %s694
      %v696 = vmul.f32 %v672, %v695
      %697 = vrot.lane.b32.xlu0 %v359, 88
      %v698 = vpop.permute.xlu0 %697
      %v700 = vsel %vm362, %v698, 0.0
      %701 = vadd.xlane.f32.xlu0 %v700
      %v702 = vpop.xlane.xlu0 %701
      %v703 = vrot.slane %v702, 4
      %v704 = vadd.f32 %v702, %v703
      %v705 = vrot.slane %v704, 2
      %v706 = vadd.f32 %v704, %v705
      %v707 = vrot.slane %v706, 1
      %v708 = vadd.f32 %v706, %v707
      %s709 = vtos %v708
      %v710 = vrcp.pop 40.0
      %s711 = vtos %v710
      %s712 = smul.f32 %s709, %s711
      %v713 = vstv %s712
      %v714 = vsub.f32 %v359, %v713
      %v715 = vmul.f32 %v714, %v714
      %717 = vrot.lane.b32.xlu0 %v715, 88
      %v718 = vpop.permute.xlu0 %717
      %v720 = vsel %vm362, %v718, 0.0
      %721 = vadd.xlane.f32.xlu0 %v720
      %v722 = vpop.xlane.xlu0 %721
      %v723 = vrot.slane %v722, 4
      %v724 = vadd.f32 %v722, %v723
      %v725 = vrot.slane %v724, 2
      %v726 = vadd.f32 %v724, %v725
      %v727 = vrot.slane %v726, 1
      %v728 = vadd.f32 %v726, %v727
      %s729 = vtos %v728
      %v730 = vrcp.pop 40.0
      %s731 = vtos %v730
      %s732 = smul.f32 %s729, %s731
      %s733 = sadd.f32 %s732, 1e-05
      %v734 = vstv %s733
      %v735 = vrsqrt.pop %v734
      %s736 = vtos %v735
      %v737 = vstv %s736
      %v738 = vmul.f32 %v714, %v737
      %739 = vrot.lane.b32.xlu0 %v359, 56
      %v740 = vpop.permute.xlu0 %739
      %v742 = vsel %vm362, %v740, 0.0
      %743 = vadd.xlane.f32.xlu0 %v742
      %v744 = vpop.xlane.xlu0 %743
      %v745 = vrot.slane %v744, 4
      %v746 = vadd.f32 %v744, %v745
      %v747 = vrot.slane %v746, 2
      %v748 = vadd.f32 %v746, %v747
      %v749 = vrot.slane %v748, 1
      %v750 = vadd.f32 %v748, %v749
      %s751 = vtos %v750
      %v752 = vrcp.pop 40.0
      %s753 = vtos %v752
      %s754 = smul.f32 %s751, %s753
      %v755 = vstv %s754
      %v756 = vsub.f32 %v359, %v755
      %v757 = vmul.f32 %v756, %v756
      %759 = vrot.lane.b32.xlu0 %v757, 56
      %v760 = vpop.permute.xlu0 %759
      %v762 = vsel %vm362, %v760, 0.0
      %763 = vadd.xlane.f32.xlu0 %v762
      %v764 = vpop.xlane.xlu0 %763
      %v765 = vrot.slane %v764, 4
      %v766 = vadd.f32 %v764, %v765
      %v767 = vrot.slane %v766, 2
      %v768 = vadd.f32 %v766, %v767
      %v769 = vrot.slane %v768, 1
      %v770 = vadd.f32 %v768, %v769
      %s771 = vtos %v770
      %v772 = vrcp.pop 40.0
      %s773 = vtos %v772
      %s774 = smul.f32 %s771, %s773
      %s775 = sadd.f32 %s774, 1e-05
      %v776 = vstv %s775
      %v777 = vrsqrt.pop %v776
      %s778 = vtos %v777
      %v779 = vstv %s778
      %v780 = vmul.f32 %v756, %v779
      %782 = vrot.lane.b32.xlu0 %v696, 120
      %v783 = vpop.permute.xlu0 %782
      %785 = vrot.lane.b32.xlu0 %v738, 88
      %v786 = vpop.permute.xlu0 %785
      %v787 = vsel %vm486, %v783, 0
      %v789 = vsel %vm486, %v786, 0
      %791 = vmatprep.subr.mxu0 0.0
      %792 = vmatpush1.xpose.msra.mxu0 %v789
      %793 = vmatprep.subr.mxu0 0.0
      %794 = vmatpush1.xpose.msra.mxu0 0.0
      %795 = vmatprep.subr.mxu0 0.0
      %796 = vmatpush1.xpose.msra.mxu0 0.0
      %797 = vmatprep.subr.mxu0 0.0
      %798 = vmatpush1.xpose.msra.mxu0 0.0
      %799 = vmatprep.subr.mxu0 0.0
      %800 = vmatpush1.xpose.msra.mxu0 0.0
      %801 = vmatprep.subr.mxu0 0.0
      %802 = vmatpush1.xpose.msra.mxu0 0.0
      %803 = vmatprep.subr.mxu0 0.0
      %804 = vmatpush1.xpose.msra.mxu0 0.0
      %805 = vmatprep.subr.mxu0 0.0
      %806 = vmatpush1.xpose.msra.mxu0 0.0
      %807 = vmatprep.subr.mxu0 0.0
      %808 = vmatpush1.xpose.msra.mxu0 0.0
      %809 = vmatprep.subr.mxu0 0.0
      %810 = vmatpush1.xpose.msra.mxu0 0.0
      %811 = vmatprep.subr.mxu0 0.0
      %812 = vmatpush1.xpose.msra.mxu0 0.0
      %813 = vmatprep.subr.mxu0 0.0
      %814 = vmatpush1.xpose.msra.mxu0 0.0
      %815 = vmatprep.subr.mxu0 0.0
      %816 = vmatpush1.xpose.msra.mxu0 0.0
      %817 = vmatprep.subr.mxu0 0.0
      %818 = vmatpush1.xpose.msra.mxu0 0.0
      %819 = vmatprep.subr.mxu0 0.0
      %820 = vmatpush1.xpose.msra.mxu0 0.0
      %821 = vmatprep.subr.mxu0 0.0
      %822 = vmatpush1.xpose.msra.mxu0 0.0
      %823 = vmatprep.subr.mxu0 0.0
      %824 = vmatpush1.xpose.msra.mxu0 0.0
      %825 = vmatprep.subr.mxu0 0.0
      %826 = vmatpush1.xpose.msra.mxu0 0.0
      %827 = vmatprep.subr.mxu0 0.0
      %828 = vmatpush1.xpose.msra.mxu0 0.0
      %829 = vmatprep.subr.mxu0 0.0
      %830 = vmatpush1.xpose.msra.mxu0 0.0
      %831 = vmatprep.subr.mxu0 0.0
      %832 = vmatpush1.xpose.msra.mxu0 0.0
      %833 = vmatprep.subr.mxu0 0.0
      %834 = vmatpush1.xpose.msra.mxu0 0.0
      %835 = vmatprep.subr.mxu0 0.0
      %836 = vmatpush1.xpose.msra.mxu0 0.0
      %837 = vmatprep.subr.mxu0 0.0
      %838 = vmatpush1.xpose.msra.mxu0 0.0
      %839 = vmatprep.subr.mxu0 0.0
      %840 = vmatpush1.xpose.msra.mxu0 0.0
      %841 = vmatprep.subr.mxu0 0.0
      %842 = vmatpush1.xpose.msra.mxu0 0.0
      %843 = vmatprep.subr.mxu0 0.0
      %844 = vmatpush1.xpose.msra.mxu0 0.0
      %845 = vmatprep.subr.mxu0 0.0
      %846 = vmatpush1.xpose.msra.mxu0 0.0
      %847 = vmatprep.subr.mxu0 0.0
      %848 = vmatpush1.xpose.msra.mxu0 0.0
      %849 = vmatprep.subr.mxu0 0.0
      %850 = vmatpush1.xpose.msra.mxu0 0.0
      %851 = vmatprep.subr.mxu0 0.0
      %852 = vmatpush1.xpose.msra.mxu0 0.0
      %853 = vmatprep.subr.mxu0 0.0
      %854 = vmatpush1.xpose.msra.mxu0 0.0
      %855 = vmatprep.mubr.f32.mxu0 0.0
      %856 = vmatmul.mubr.f32.gmra.mrb[0].mxu0 %v787
      %v857 = vpop.f32.mrb[0].mxu0
      %v858 = vadd.f32 0.0, %v857
      %v859 = vpop.f32.mrb[0].mxu0
      %860 = vdwg.mxu0
      %v861 = vmul.f32 %v858, 0.4472136
      %v862 = vsel %vm563, %v861, -inf
      %863 = vmax.xlane.f32.xlu0 %v862
      %v864 = vpop.xlane.xlu0 %863
      %v865 = vsub.f32 %v861, %v864
      %v866 = vmul.f32 %v865, 1.442695
      %v867 = vpow.pop %v866
      %v868 = vsel %vm563, %v867, 0.0
      %869 = vadd.xlane.f32.xlu0 %v868
      %v870 = vpop.xlane.xlu0 %869
      %v871 = vrcp.pop %v870
      %v872 = vmul.f32 %v867, %v871
      %874 = vrot.lane.b32.xlu0 %v780, 56
      %v875 = vpop.permute.xlu0 %874
      %v877 = vsel %vm578, %v872, 0
      %v879 = vsel %vm582, %v875, 0
      %881 = vmatprep.subr.mxu0 0.0
      %882 = vmatpush1.msra.mxu0 %v879
      %883 = vmatprep.subr.mxu0 0.0
      %884 = vmatpush1.msra.mxu0 0.0
      %885 = vmatprep.subr.mxu0 0.0
      %886 = vmatpush1.msra.mxu0 0.0
      %887 = vmatprep.subr.mxu0 0.0
      %888 = vmatpush1.msra.mxu0 0.0
      %889 = vmatprep.subr.mxu0 0.0
      %890 = vmatpush1.msra.mxu0 0.0
      %891 = vmatprep.subr.mxu0 0.0
      %892 = vmatpush1.msra.mxu0 0.0
      %893 = vmatprep.subr.mxu0 0.0
      %894 = vmatpush1.msra.mxu0 0.0
      %895 = vmatprep.subr.mxu0 0.0
      %896 = vmatpush1.msra.mxu0 0.0
      %897 = vmatprep.subr.mxu0 0.0
      %898 = vmatpush1.msra.mxu0 0.0
      %899 = vmatprep.subr.mxu0 0.0
      %900 = vmatpush1.msra.mxu0 0.0
      %901 = vmatprep.subr.mxu0 0.0
      %902 = vmatpush1.msra.mxu0 0.0
      %903 = vmatprep.subr.mxu0 0.0
      %904 = vmatpush1.msra.mxu0 0.0
      %905 = vmatprep.subr.mxu0 0.0
      %906 = vmatpush1.msra.mxu0 0.0
      %907 = vmatprep.subr.mxu0 0.0
      %908 = vmatpush1.msra.mxu0 0.0
      %909 = vmatprep.subr.mxu0 0.0
      %910 = vmatpush1.msra.mxu0 0.0
      %911 = vmatprep.subr.mxu0 0.0
      %912 = vmatpush1.msra.mxu0 0.0
      %913 = vmatprep.subr.mxu0 0.0
      %914 = vmatpush1.msra.mxu0 0.0
      %915 = vmatprep.subr.mxu0 0.0
      %916 = vmatpush1.msra.mxu0 0.0
      %917 = vmatprep.subr.mxu0 0.0
      %918 = vmatpush1.msra.mxu0 0.0
      %919 = vmatprep.subr.mxu0 0.0
      %920 = vmatpush1.msra.mxu0 0.0
      %921 = vmatprep.subr.mxu0 0.0
      %922 = vmatpush1.msra.mxu0 0.0
      %923 = vmatprep.subr.mxu0 0.0
      %924 = vmatpush1.msra.mxu0 0.0
      %925 = vmatprep.subr.mxu0 0.0
      %926 = vmatpush1.msra.mxu0 0.0
      %927 = vmatprep.subr.mxu0 0.0
      %928 = vmatpush1.msra.mxu0 0.0
      %929 = vmatprep.subr.mxu0 0.0
      %930 = vmatpush1.msra.mxu0 0.0
      %931 = vmatprep.subr.mxu0 0.0
      %932 = vmatpush1.msra.mxu0 0.0
      %933 = vmatprep.subr.mxu0 0.0
      %934 = vmatpush1.msra.mxu0 0.0
      %935 = vmatprep.subr.mxu0 0.0
      %936 = vmatpush1.msra.mxu0 0.0
      %937 = vmatprep.subr.mxu0 0.0
      %938 = vmatpush1.msra.mxu0 0.0
      %939 = vmatprep.subr.mxu0 0.0
      %940 = vmatpush1.msra.mxu0 0.0
      %941 = vmatprep.subr.mxu0 0.0
      %942 = vmatpush1.msra.mxu0 0.0
      %943 = vmatprep.subr.mxu0 0.0
      %944 = vmatpush1.msra.mxu0 0.0
      %945 = vmatprep.mubr.f32.mxu0 0.0
      %946 = vmatmul.mubr.f32.gmra.mrb[0].mxu0 %v877
      %v947 = vpop.f32.mrb[0].mxu0
      %v948 = vadd.f32 0.0, %v947
      %v949 = vpop.f32.mrb[0].mxu0
      %950 = vdwg.mxu0
      %951 = vrot.lane.b32.xlu0 %v359, 112
      %v952 = vpop.permute.xlu0 %951
      %v954 = vsel %vm362, %v952, 0.0
      %955 = vadd.xlane.f32.xlu0 %v954
      %v956 = vpop.xlane.xlu0 %955
      %v957 = vrot.slane %v956, 4
      %v958 = vadd.f32 %v956, %v957
      %v959 = vrot.slane %v958, 2
      %v960 = vadd.f32 %v958, %v959
      %v961 = vrot.slane %v960, 1
      %v962 = vadd.f32 %v960, %v961
      %s963 = vtos %v962
      %v964 = vrcp.pop 40.0
      %s965 = vtos %v964
      %s966 = smul.f32 %s963, %s965
      %v967 = vstv %s966
      %v968 = vsub.f32 %v359, %v967
      %v969 = vmul.f32 %v968, %v968
      %971 = vrot.lane.b32.xlu0 %v969, 112
      %v972 = vpop.permute.xlu0 %971
      %v974 = vsel %vm362, %v972, 0.0
      %975 = vadd.xlane.f32.xlu0 %v974
      %v976 = vpop.xlane.xlu0 %975
      %v977 = vrot.slane %v976, 4
      %v978 = vadd.f32 %v976, %v977
      %v979 = vrot.slane %v978, 2
      %v980 = vadd.f32 %v978, %v979
      %v981 = vrot.slane %v980, 1
      %v982 = vadd.f32 %v980, %v981
      %s983 = vtos %v982
      %v984 = vrcp.pop 40.0
      %s985 = vtos %v984
      %s986 = smul.f32 %s983, %s985
      %s987 = sadd.f32 %s986, 1e-05
      %v988 = vstv %s987
      %v989 = vrsqrt.pop %v988
      %s990 = vtos %v989
      %v991 = vstv %s990
      %v992 = vmul.f32 %v968, %v991
      %993 = vrot.lane.b32.xlu0 %v359, 80
      %v994 = vpop.permute.xlu0 %993
      %v996 = vsel %vm362, %v994, 0.0
      %997 = vadd.xlane.f32.xlu0 %v996
      %v998 = vpop.xlane.xlu0 %997
      %v999 = vrot.slane %v998, 4
      %v1000 = vadd.f32 %v998, %v999
      %v1001 = vrot.slane %v1000, 2
      %v1002 = vadd.f32 %v1000, %v1001
      %v1003 = vrot.slane %v1002, 1
      %v1004 = vadd.f32 %v1002, %v1003
      %s1005 = vtos %v1004
      %v1006 = vrcp.pop 40.0
      %s1007 = vtos %v1006
      %s1008 = smul.f32 %s1005, %s1007
      %v1009 = vstv %s1008
      %v1010 = vsub.f32 %v359, %v1009
      %v1011 = vmul.f32 %v1010, %v1010
      %1013 = vrot.lane.b32.xlu0 %v1011, 80
      %v1014 = vpop.permute.xlu0 %1013
      %v1016 = vsel %vm362, %v1014, 0.0
      %1017 = vadd.xlane.f32.xlu0 %v1016
      %v1018 = vpop.xlane.xlu0 %1017
      %v1019 = vrot.slane %v1018, 4
      %v1020 = vadd.f32 %v1018, %v1019
      %v1021 = vrot.slane %v1020, 2
      %v1022 = vadd.f32 %v1020, %v1021
      %v1023 = vrot.slane %v1022, 1
      %v1024 = vadd.f32 %v1022, %v1023
      %s1025 = vtos %v1024
      %v1026 = vrcp.pop 40.0
      %s1027 = vtos %v1026
      %s1028 = smul.f32 %s1025, %s1027
      %s1029 = sadd.f32 %s1028, 1e-05
      %v1030 = vstv %s1029
      %v1031 = vrsqrt.pop %v1030
      %s1032 = vtos %v1031
      %v1033 = vstv %s1032
      %v1034 = vmul.f32 %v1010, %v1033
      %1035 = vrot.lane.b32.xlu0 %v359, 48
      %v1036 = vpop.permute.xlu0 %1035
      %v1038 = vsel %vm362, %v1036, 0.0
      %1039 = vadd.xlane.f32.xlu0 %v1038
      %v1040 = vpop.xlane.xlu0 %1039
      %v1041 = vrot.slane %v1040, 4
      %v1042 = vadd.f32 %v1040, %v1041
      %v1043 = vrot.slane %v1042, 2
      %v1044 = vadd.f32 %v1042, %v1043
      %v1045 = vrot.slane %v1044, 1
      %v1046 = vadd.f32 %v1044, %v1045
      %s1047 = vtos %v1046
      %v1048 = vrcp.pop 40.0
      %s1049 = vtos %v1048
      %s1050 = smul.f32 %s1047, %s1049
      %v1051 = vstv %s1050
      %v1052 = vsub.f32 %v359, %v1051
      %v1053 = vmul.f32 %v1052, %v1052
      %1055 = vrot.lane.b32.xlu0 %v1053, 48
      %v1056 = vpop.permute.xlu0 %1055
      %v1058 = vsel %vm362, %v1056, 0.0
      %1059 = vadd.xlane.f32.xlu0 %v1058
      %v1060 = vpop.xlane.xlu0 %1059
      %v1061 = vrot.slane %v1060, 4
      %v1062 = vadd.f32 %v1060, %v1061
      %v1063 = vrot.slane %v1062, 2
      %v1064 = vadd.f32 %v1062, %v1063
      %v1065 = vrot.slane %v1064, 1
      %v1066 = vadd.f32 %v1064, %v1065
      %s1067 = vtos %v1066
      %v1068 = vrcp.pop 40.0
      %s1069 = vtos %v1068
      %s1070 = smul.f32 %s1067, %s1069
      %s1071 = sadd.f32 %s1070, 1e-05
      %v1072 = vstv %s1071
      %v1073 = vrsqrt.pop %v1072
      %s1074 = vtos %v1073
      %v1075 = vstv %s1074
      %v1076 = vmul.f32 %v1052, %v1075
      %1078 = vrot.lane.b32.xlu0 %v992, 112
      %v1079 = vpop.permute.xlu0 %1078
      %1081 = vrot.lane.b32.xlu0 %v1034, 80
      %v1082 = vpop.permute.xlu0 %1081
      %v1083 = vsel %vm486, %v1079, 0
      %v1085 = vsel %vm486, %v1082, 0
      %1087 = vmatprep.subr.mxu0 0.0
      %1088 = vmatpush1.xpose.msra.mxu0 %v1085
      %1089 = vmatprep.subr.mxu0 0.0
      %1090 = vmatpush1.xpose.msra.mxu0 0.0
      %1091 = vmatprep.subr.mxu0 0.0
      %1092 = vmatpush1.xpose.msra.mxu0 0.0
      %1093 = vmatprep.subr.mxu0 0.0
      %1094 = vmatpush1.xpose.msra.mxu0 0.0
      %1095 = vmatprep.subr.mxu0 0.0
      %1096 = vmatpush1.xpose.msra.mxu0 0.0
      %1097 = vmatprep.subr.mxu0 0.0
      %1098 = vmatpush1.xpose.msra.mxu0 0.0
      %1099 = vmatprep.subr.mxu0 0.0
      %1100 = vmatpush1.xpose.msra.mxu0 0.0
      %1101 = vmatprep.subr.mxu0 0.0
      %1102 = vmatpush1.xpose.msra.mxu0 0.0
      %1103 = vmatprep.subr.mxu0 0.0
      %1104 = vmatpush1.xpose.msra.mxu0 0.0
      %1105 = vmatprep.subr.mxu0 0.0
      %1106 = vmatpush1.xpose.msra.mxu0 0.0
      %1107 = vmatprep.subr.mxu0 0.0
      %1108 = vmatpush1.xpose.msra.mxu0 0.0
      %1109 = vmatprep.subr.mxu0 0.0
      %1110 = vmatpush1.xpose.msra.mxu0 0.0
      %1111 = vmatprep.subr.mxu0 0.0
      %1112 = vmatpush1.xpose.msra.mxu0 0.0
      %1113 = vmatprep.subr.mxu0 0.0
      %1114 = vmatpush1.xpose.msra.mxu0 0.0
      %1115 = vmatprep.subr.mxu0 0.0
      %1116 = vmatpush1.xpose.msra.mxu0 0.0
      %1117 = vmatprep.subr.mxu0 0.0
      %1118 = vmatpush1.xpose.msra.mxu0 0.0
      %1119 = vmatprep.subr.mxu0 0.0
      %1120 = vmatpush1.xpose.msra.mxu0 0.0
      %1121 = vmatprep.subr.mxu0 0.0
      %1122 = vmatpush1.xpose.msra.mxu0 0.0
      %1123 = vmatprep.subr.mxu0 0.0
      %1124 = vmatpush1.xpose.msra.mxu0 0.0
      %1125 = vmatprep.subr.mxu0 0.0
      %1126 = vmatpush1.xpose.msra.mxu0 0.0
      %1127 = vmatprep.subr.mxu0 0.0
      %1128 = vmatpush1.xpose.msra.mxu0 0.0
      %1129 = vmatprep.subr.mxu0 0.0
      %1130 = vmatpush1.xpose.msra.mxu0 0.0
      %1131 = vmatprep.subr.mxu0 0.0
      %1132 = vmatpush1.xpose.msra.mxu0 0.0
      %1133 = vmatprep.subr.mxu0 0.0
      %1134 = vmatpush1.xpose.msra.mxu0 0.0
      %1135 = vmatprep.subr.mxu0 0.0
      %1136 = vmatpush1.xpose.msra.mxu0 0.0
      %1137 = vmatprep.subr.mxu0 0.0
      %1138 = vmatpush1.xpose.msra.mxu0 0.0
      %1139 = vmatprep.subr.mxu0 0.0
      %1140 = vmatpush1.xpose.msra.mxu0 0.0
      %1141 = vmatprep.subr.mxu0 0.0
      %1142 = vmatpush1.xpose.msra.mxu0 0.0
      %1143 = vmatprep.subr.mxu0 0.0
      %1144 = vmatpush1.xpose.msra.mxu0 0.0
      %1145 = vmatprep.subr.mxu0 0.0
      %1146 = vmatpush1.xpose.msra.mxu0 0.0
      %1147 = vmatprep.subr.mxu0 0.0
      %1148 = vmatpush1.xpose.msra.mxu0 0.0
      %1149 = vmatprep.subr.mxu0 0.0
      %1150 = vmatpush1.xpose.msra.mxu0 0.0
      %1151 = vmatprep.mubr.f32.mxu0 0.0
      %1152 = vmatmul.mubr.f32.gmra.mrb[0].mxu0 %v1083
      %v1153 = vpop.f32.mrb[0].mxu0
      %v1154 = vadd.f32 0.0, %v1153
      %v1155 = vpop.f32.mrb[0].mxu0
      %1156 = vdwg.mxu0
      %v1157 = vmul.f32 %v1154, 0.4472136
      %v1158 = vsel %vm563, %v1157, -inf
      %1159 = vmax.xlane.f32.xlu0 %v1158
      %v1160 = vpop.xlane.xlu0 %1159
      %v1161 = vsub.f32 %v1157, %v1160
      %v1162 = vmul.f32 %v1161, 1.442695
      %v1163 = vpow.pop %v1162
      %v1164 = vsel %vm563, %v1163, 0.0
      %1165 = vadd.xlane.f32.xlu0 %v1164
      %v1166 = vpop.xlane.xlu0 %1165
      %v1167 = vrcp.pop %v1166
      %v1168 = vmul.f32 %v1163, %v1167
      %1170 = vrot.lane.b32.xlu0 %v1076, 48
      %v1171 = vpop.permute.xlu0 %1170
      %v1173 = vsel %vm578, %v1168, 0
      %v1175 = vsel %vm582, %v1171, 0
      %1177 = vmatprep.subr.mxu0 0.0
      %1178 = vmatpush1.msra.mxu0 %v1175
      %1179 = vmatprep.subr.mxu0 0.0
      %1180 = vmatpush1.msra.mxu0 0.0
      %1181 = vmatprep.subr.mxu0 0.0
      %1182 = vmatpush1.msra.mxu0 0.0
      %1183 = vmatprep.subr.mxu0 0.0
      %1184 = vmatpush1.msra.mxu0 0.0
      %1185 = vmatprep.subr.mxu0 0.0
      %1186 = vmatpush1.msra.mxu0 0.0
      %1187 = vmatprep.subr.mxu0 0.0
      %1188 = vmatpush1.msra.mxu0 0.0
      %1189 = vmatprep.subr.mxu0 0.0
      %1190 = vmatpush1.msra.mxu0 0.0
      %1191 = vmatprep.subr.mxu0 0.0
      %1192 = vmatpush1.msra.mxu0 0.0
      %1193 = vmatprep.subr.mxu0 0.0
      %1194 = vmatpush1.msra.mxu0 0.0
      %1195 = vmatprep.subr.mxu0 0.0
      %1196 = vmatpush1.msra.mxu0 0.0
      %1197 = vmatprep.subr.mxu0 0.0
      %1198 = vmatpush1.msra.mxu0 0.0
      %1199 = vmatprep.subr.mxu0 0.0
      %1200 = vmatpush1.msra.mxu0 0.0
      %1201 = vmatprep.subr.mxu0 0.0
      %1202 = vmatpush1.msra.mxu0 0.0
      %1203 = vmatprep.subr.mxu0 0.0
      %1204 = vmatpush1.msra.mxu0 0.0
      %1205 = vmatprep.subr.mxu0 0.0
      %1206 = vmatpush1.msra.mxu0 0.0
      %1207 = vmatprep.subr.mxu0 0.0
      %1208 = vmatpush1.msra.mxu0 0.0
      %1209 = vmatprep.subr.mxu0 0.0
      %1210 = vmatpush1.msra.mxu0 0.0
      %1211 = vmatprep.subr.mxu0 0.0
      %1212 = vmatpush1.msra.mxu0 0.0
      %1213 = vmatprep.subr.mxu0 0.0
      %1214 = vmatpush1.msra.mxu0 0.0
      %1215 = vmatprep.subr.mxu0 0.0
      %1216 = vmatpush1.msra.mxu0 0.0
      %1217 = vmatprep.subr.mxu0 0.0
      %1218 = vmatpush1.msra.mxu0 0.0
      %1219 = vmatprep.subr.mxu0 0.0
      %1220 = vmatpush1.msra.mxu0 0.0
      %1221 = vmatprep.subr.mxu0 0.0
      %1222 = vmatpush1.msra.mxu0 0.0
      %1223 = vmatprep.subr.mxu0 0.0
      %1224 = vmatpush1.msra.mxu0 0.0
      %1225 = vmatprep.subr.mxu0 0.0
      %1226 = vmatpush1.msra.mxu0 0.0
      %1227 = vmatprep.subr.mxu0 0.0
      %1228 = vmatpush1.msra.mxu0 0.0
      %1229 = vmatprep.subr.mxu0 0.0
      %1230 = vmatpush1.msra.mxu0 0.0
      %1231 = vmatprep.subr.mxu0 0.0
      %1232 = vmatpush1.msra.mxu0 0.0
      %1233 = vmatprep.subr.mxu0 0.0
      %1234 = vmatpush1.msra.mxu0 0.0
      %1235 = vmatprep.subr.mxu0 0.0
      %1236 = vmatpush1.msra.mxu0 0.0
      %1237 = vmatprep.subr.mxu0 0.0
      %1238 = vmatpush1.msra.mxu0 0.0
      %1239 = vmatprep.subr.mxu0 0.0
      %1240 = vmatpush1.msra.mxu0 0.0
      %1241 = vmatprep.mubr.f32.mxu0 0.0
      %1242 = vmatmul.mubr.f32.gmra.mrb[0].mxu0 %v1173
      %v1243 = vpop.f32.mrb[0].mxu0
      %v1244 = vadd.f32 0.0, %v1243
      %v1245 = vpop.f32.mrb[0].mxu0
      %1246 = vdwg.mxu0
      %1247 = vrot.lane.b32.xlu0 %v359, 104
      %v1248 = vpop.permute.xlu0 %1247
      %v1250 = vsel %vm362, %v1248, 0.0
      %1251 = vadd.xlane.f32.xlu0 %v1250
      %v1252 = vpop.xlane.xlu0 %1251
      %v1253 = vrot.slane %v1252, 4
      %v1254 = vadd.f32 %v1252, %v1253
      %v1255 = vrot.slane %v1254, 2
      %v1256 = vadd.f32 %v1254, %v1255
      %v1257 = vrot.slane %v1256, 1
      %v1258 = vadd.f32 %v1256, %v1257
      %s1259 = vtos %v1258
      %v1260 = vrcp.pop 40.0
      %s1261 = vtos %v1260
      %s1262 = smul.f32 %s1259, %s1261
      %v1263 = vstv %s1262
      %v1264 = vsub.f32 %v359, %v1263
      %v1265 = vmul.f32 %v1264, %v1264
      %1267 = vrot.lane.b32.xlu0 %v1265, 104
      %v1268 = vpop.permute.xlu0 %1267
      %v1270 = vsel %vm362, %v1268, 0.0
      %1271 = vadd.xlane.f32.xlu0 %v1270
      %v1272 = vpop.xlane.xlu0 %1271
      %v1273 = vrot.slane %v1272, 4
      %v1274 = vadd.f32 %v1272, %v1273
      %v1275 = vrot.slane %v1274, 2
      %v1276 = vadd.f32 %v1274, %v1275
      %v1277 = vrot.slane %v1276, 1
      %v1278 = vadd.f32 %v1276, %v1277
      %s1279 = vtos %v1278
      %v1280 = vrcp.pop 40.0
      %s1281 = vtos %v1280
      %s1282 = smul.f32 %s1279, %s1281
      %s1283 = sadd.f32 %s1282, 1e-05
      %v1284 = vstv %s1283
      %v1285 = vrsqrt.pop %v1284
      %s1286 = vtos %v1285
      %v1287 = vstv %s1286
      %v1288 = vmul.f32 %v1264, %v1287
      %1289 = vrot.lane.b32.xlu0 %v359, 72
      %v1290 = vpop.permute.xlu0 %1289
      %v1292 = vsel %vm362, %v1290, 0.0
      %1293 = vadd.xlane.f32.xlu0 %v1292
      %v1294 = vpop.xlane.xlu0 %1293
      %v1295 = vrot.slane %v1294, 4
      %v1296 = vadd.f32 %v1294, %v1295
      %v1297 = vrot.slane %v1296, 2
      %v1298 = vadd.f32 %v1296, %v1297
      %v1299 = vrot.slane %v1298, 1
      %v1300 = vadd.f32 %v1298, %v1299
      %s1301 = vtos %v1300
      %v1302 = vrcp.pop 40.0
      %s1303 = vtos %v1302
      %s1304 = smul.f32 %s1301, %s1303
      %v1305 = vstv %s1304
      %v1306 = vsub.f32 %v359, %v1305
      %v1307 = vmul.f32 %v1306, %v1306
      %1309 = vrot.lane.b32.xlu0 %v1307, 72
      %v1310 = vpop.permute.xlu0 %1309
      %v1312 = vsel %vm362, %v1310, 0.0
      %1313 = vadd.xlane.f32.xlu0 %v1312
      %v1314 = vpop.xlane.xlu0 %1313
      %v1315 = vrot.slane %v1314, 4
      %v1316 = vadd.f32 %v1314, %v1315
      %v1317 = vrot.slane %v1316, 2
      %v1318 = vadd.f32 %v1316, %v1317
      %v1319 = vrot.slane %v1318, 1
      %v1320 = vadd.f32 %v1318, %v1319
      %s1321 = vtos %v1320
      %v1322 = vrcp.pop 40.0
      %s1323 = vtos %v1322
      %s1324 = smul.f32 %s1321, %s1323
      %s1325 = sadd.f32 %s1324, 1e-05
      %v1326 = vstv %s1325
      %v1327 = vrsqrt.pop %v1326
      %s1328 = vtos %v1327
      %v1329 = vstv %s1328
      %v1330 = vmul.f32 %v1306, %v1329
      %1331 = vrot.lane.b32.xlu0 %v359, 40
      %v1332 = vpop.permute.xlu0 %1331
      %v1334 = vsel %vm362, %v1332, 0.0
      %1335 = vadd.xlane.f32.xlu0 %v1334
      %v1336 = vpop.xlane.xlu0 %1335
      %v1337 = vrot.slane %v1336, 4
      %v1338 = vadd.f32 %v1336, %v1337
      %v1339 = vrot.slane %v1338, 2
      %v1340 = vadd.f32 %v1338, %v1339
      %v1341 = vrot.slane %v1340, 1
      %v1342 = vadd.f32 %v1340, %v1341
      %s1343 = vtos %v1342
      %v1344 = vrcp.pop 40.0
      %s1345 = vtos %v1344
      %s1346 = smul.f32 %s1343, %s1345
      %v1347 = vstv %s1346
      %v1348 = vsub.f32 %v359, %v1347
      %v1349 = vmul.f32 %v1348, %v1348
      %1351 = vrot.lane.b32.xlu0 %v1349, 40
      %v1352 = vpop.permute.xlu0 %1351
      %v1354 = vsel %vm362, %v1352, 0.0
      %1355 = vadd.xlane.f32.xlu0 %v1354
      %v1356 = vpop.xlane.xlu0 %1355
      %v1357 = vrot.slane %v1356, 4
      %v1358 = vadd.f32 %v1356, %v1357
      %v1359 = vrot.slane %v1358, 2
      %v1360 = vadd.f32 %v1358, %v1359
      %v1361 = vrot.slane %v1360, 1
      %v1362 = vadd.f32 %v1360, %v1361
      %s1363 = vtos %v1362
      %v1364 = vrcp.pop 40.0
      %s1365 = vtos %v1364
      %s1366 = smul.f32 %s1363, %s1365
      %s1367 = sadd.f32 %s1366, 1e-05
      %v1368 = vstv %s1367
      %v1369 = vrsqrt.pop %v1368
      %s1370 = vtos %v1369
      %v1371 = vstv %s1370
      %v1372 = vmul.f32 %v1348, %v1371
      %1374 = vrot.lane.b32.xlu0 %v1288, 104
      %v1375 = vpop.permute.xlu0 %1374
      %1377 = vrot.lane.b32.xlu0 %v1330, 72
      %v1378 = vpop.permute.xlu0 %1377
      %v1379 = vsel %vm486, %v1375, 0
      %v1381 = vsel %vm486, %v1378, 0
      %1383 = vmatprep.subr.mxu0 0.0
      %1384 = vmatpush1.xpose.msra.mxu0 %v1381
      %1385 = vmatprep.subr.mxu0 0.0
      %1386 = vmatpush1.xpose.msra.mxu0 0.0
      %1387 = vmatprep.subr.mxu0 0.0
      %1388 = vmatpush1.xpose.msra.mxu0 0.0
      %1389 = vmatprep.subr.mxu0 0.0
      %1390 = vmatpush1.xpose.msra.mxu0 0.0
      %1391 = vmatprep.subr.mxu0 0.0
      %1392 = vmatpush1.xpose.msra.mxu0 0.0
      %1393 = vmatprep.subr.mxu0 0.0
      %1394 = vmatpush1.xpose.msra.mxu0 0.0
      %1395 = vmatprep.subr.mxu0 0.0
      %1396 = vmatpush1.xpose.msra.mxu0 0.0
      %1397 = vmatprep.subr.mxu0 0.0
      %1398 = vmatpush1.xpose.msra.mxu0 0.0
      %1399 = vmatprep.subr.mxu0 0.0
      %1400 = vmatpush1.xpose.msra.mxu0 0.0
      %1401 = vmatprep.subr.mxu0 0.0
      %1402 = vmatpush1.xpose.msra.mxu0 0.0
      %1403 = vmatprep.subr.mxu0 0.0
      %1404 = vmatpush1.xpose.msra.mxu0 0.0
      %1405 = vmatprep.subr.mxu0 0.0
      %1406 = vmatpush1.xpose.msra.mxu0 0.0
      %1407 = vmatprep.subr.mxu0 0.0
      %1408 = vmatpush1.xpose.msra.mxu0 0.0
      %1409 = vmatprep.subr.mxu0 0.0
      %1410 = vmatpush1.xpose.msra.mxu0 0.0
      %1411 = vmatprep.subr.mxu0 0.0
      %1412 = vmatpush1.xpose.msra.mxu0 0.0
      %1413 = vmatprep.subr.mxu0 0.0
      %1414 = vmatpush1.xpose.msra.mxu0 0.0
      %1415 = vmatprep.subr.mxu0 0.0
      %1416 = vmatpush1.xpose.msra.mxu0 0.0
      %1417 = vmatprep.subr.mxu0 0.0
      %1418 = vmatpush1.xpose.msra.mxu0 0.0
      %1419 = vmatprep.subr.mxu0 0.0
      %1420 = vmatpush1.xpose.msra.mxu0 0.0
      %1421 = vmatprep.subr.mxu0 0.0
      %1422 = vmatpush1.xpose.msra.mxu0 0.0
      %1423 = vmatprep.subr.mxu0 0.0
      %1424 = vmatpush1.xpose.msra.mxu0 0.0
      %1425 = vmatprep.subr.mxu0 0.0
      %1426 = vmatpush1.xpose.msra.mxu0 0.0
      %1427 = vmatprep.subr.mxu0 0.0
      %1428 = vmatpush1.xpose.msra.mxu0 0.0
      %1429 = vmatprep.subr.mxu0 0.0
      %1430 = vmatpush1.xpose.msra.mxu0 0.0
      %1431 = vmatprep.subr.mxu0 0.0
      %1432 = vmatpush1.xpose.msra.mxu0 0.0
      %1433 = vmatprep.subr.mxu0 0.0
      %1434 = vmatpush1.xpose.msra.mxu0 0.0
      %1435 = vmatprep.subr.mxu0 0.0
      %1436 = vmatpush1.xpose.msra.mxu0 0.0
      %1437 = vmatprep.subr.mxu0 0.0
      %1438 = vmatpush1.xpose.msra.mxu0 0.0
      %1439 = vmatprep.subr.mxu0 0.0
      %1440 = vmatpush1.xpose.msra.mxu0 0.0
      %1441 = vmatprep.subr.mxu0 0.0
      %1442 = vmatpush1.xpose.msra.mxu0 0.0
      %1443 = vmatprep.subr.mxu0 0.0
      %1444 = vmatpush1.xpose.msra.mxu0 0.0
      %1445 = vmatprep.subr.mxu0 0.0
      %1446 = vmatpush1.xpose.msra.mxu0 0.0
      %1447 = vmatprep.mubr.f32.mxu0 0.0
      %1448 = vmatmul.mubr.f32.gmra.mrb[0].mxu0 %v1379
      %v1449 = vpop.f32.mrb[0].mxu0
      %v1450 = vadd.f32 0.0, %v1449
      %v1451 = vpop.f32.mrb[0].mxu0
      %1452 = vdwg.mxu0
      %v1453 = vmul.f32 %v1450, 0.4472136
      %v1454 = vsel %vm563, %v1453, -inf
      %1455 = vmax.xlane.f32.xlu0 %v1454
      %v1456 = vpop.xlane.xlu0 %1455
      %v1457 = vsub.f32 %v1453, %v1456
      %v1458 = vmul.f32 %v1457, 1.442695
      %v1459 = vpow.pop %v1458
      %v1460 = vsel %vm563, %v1459, 0.0
      %1461 = vadd.xlane.f32.xlu0 %v1460
      %v1462 = vpop.xlane.xlu0 %1461
      %v1463 = vrcp.pop %v1462
      %v1464 = vmul.f32 %v1459, %v1463
      %1466 = vrot.lane.b32.xlu0 %v1372, 40
      %v1467 = vpop.permute.xlu0 %1466
      %v1469 = vsel %vm578, %v1464, 0
      %v1471 = vsel %vm582, %v1467, 0
      %1473 = vmatprep.subr.mxu0 0.0
      %1474 = vmatpush1.msra.mxu0 %v1471
      %1475 = vmatprep.subr.mxu0 0.0
      %1476 = vmatpush1.msra.mxu0 0.0
      %1477 = vmatprep.subr.mxu0 0.0
      %1478 = vmatpush1.msra.mxu0 0.0
      %1479 = vmatprep.subr.mxu0 0.0
      %1480 = vmatpush1.msra.mxu0 0.0
      %1481 = vmatprep.subr.mxu0 0.0
      %1482 = vmatpush1.msra.mxu0 0.0
      %1483 = vmatprep.subr.mxu0 0.0
      %1484 = vmatpush1.msra.mxu0 0.0
      %1485 = vmatprep.subr.mxu0 0.0
      %1486 = vmatpush1.msra.mxu0 0.0
      %1487 = vmatprep.subr.mxu0 0.0
      %1488 = vmatpush1.msra.mxu0 0.0
      %1489 = vmatprep.subr.mxu0 0.0
      %1490 = vmatpush1.msra.mxu0 0.0
      %1491 = vmatprep.subr.mxu0 0.0
      %1492 = vmatpush1.msra.mxu0 0.0
      %1493 = vmatprep.subr.mxu0 0.0
      %1494 = vmatpush1.msra.mxu0 0.0
      %1495 = vmatprep.subr.mxu0 0.0
      %1496 = vmatpush1.msra.mxu0 0.0
      %1497 = vmatprep.subr.mxu0 0.0
      %1498 = vmatpush1.msra.mxu0 0.0
      %1499 = vmatprep.subr.mxu0 0.0
      %1500 = vmatpush1.msra.mxu0 0.0
      %1501 = vmatprep.subr.mxu0 0.0
      %1502 = vmatpush1.msra.mxu0 0.0
      %1503 = vmatprep.subr.mxu0 0.0
      %1504 = vmatpush1.msra.mxu0 0.0
      %1505 = vmatprep.subr.mxu0 0.0
      %1506 = vmatpush1.msra.mxu0 0.0
      %1507 = vmatprep.subr.mxu0 0.0
      %1508 = vmatpush1.msra.mxu0 0.0
      %1509 = vmatprep.subr.mxu0 0.0
      %1510 = vmatpush1.msra.mxu0 0.0
      %1511 = vmatprep.subr.mxu0 0.0
      %1512 = vmatpush1.msra.mxu0 0.0
      %1513 = vmatprep.subr.mxu0 0.0
      %1514 = vmatpush1.msra.mxu0 0.0
      %1515 = vmatprep.subr.mxu0 0.0
      %1516 = vmatpush1.msra.mxu0 0.0
      %1517 = vmatprep.subr.mxu0 0.0
      %1518 = vmatpush1.msra.mxu0 0.0
      %1519 = vmatprep.subr.mxu0 0.0
      %1520 = vmatpush1.msra.mxu0 0.0
      %1521 = vmatprep.subr.mxu0 0.0
      %1522 = vmatpush1.msra.mxu0 0.0
      %1523 = vmatprep.subr.mxu0 0.0
      %1524 = vmatpush1.msra.mxu0 0.0
      %1525 = vmatprep.subr.mxu0 0.0
      %1526 = vmatpush1.msra.mxu0 0.0
      %1527 = vmatprep.subr.mxu0 0.0
      %1528 = vmatpush1.msra.mxu0 0.0
      %1529 = vmatprep.subr.mxu0 0.0
      %1530 = vmatpush1.msra.mxu0 0.0
      %1531 = vmatprep.subr.mxu0 0.0
      %1532 = vmatpush1.msra.mxu0 0.0
      %1533 = vmatprep.subr.mxu0 0.0
      %1534 = vmatpush1.msra.mxu0 0.0
      %1535 = vmatprep.subr.mxu0 0.0
      %1536 = vmatpush1.msra.mxu0 0.0
      %1537 = vmatprep.mubr.f32.mxu0 0.0
      %1538 = vmatmul.mubr.f32.gmra.mrb[0].mxu0 %v1469
      %v1539 = vpop.f32.mrb[0].mxu0
      %v1540 = vadd.f32 0.0, %v1539
      %v1541 = vpop.f32.mrb[0].mxu0
      %1542 = vdwg.mxu0
      %1544 = vrot.lane.b32.xlu0 %v948, 8
      %v1545 = vpop.permute.xlu0 %1544
      %1548 = vrot.lane.b32.xlu0 %v1244, 16
      %v1549 = vpop.permute.xlu0 %1548
      %1552 = vrot.lane.b32.xlu0 %v1540, 24
      %v1553 = vpop.permute.xlu0 %1552
      %v1555 = vsel %vm486, %v652, %v1545
      %vm1556 = vcmask 130048
      %v1557 = vsel %vm1556, %v1555, %v1549
      %vm1558 = vcmask 195584
      %v1559 = vsel %vm1558, %v1557, %v1553
      %v1560 = vadd.f32 %v1559, %v283
      %v1561 = vsel %vm248, %v1560, 0.0
      %1562 = vadd.xlane.f32.xlu0 %v1561
      %v1563 = vpop.xlane.xlu0 %1562
      %v1564 = vrot.slane %v1563, 4
      %v1565 = vadd.f32 %v1563, %v1564
      %v1566 = vrot.slane %v1565, 2
      %v1567 = vadd.f32 %v1565, %v1566
      %v1568 = vrot.slane %v1567, 1
      %v1569 = vadd.f32 %v1567, %v1568
      %s1570 = vtos %v1569
      %v1571 = vrcp.pop 160.0
      %s1572 = vtos %v1571
      %s1573 = smul.f32 %s1570, %s1572
      %v1574 = vstv %s1573
      %v1575 = vsub.f32 %v1560, %v1574
      %v1576 = vmul.f32 %v1575, %v1575
      %v1577 = vsel %vm248, %v1576, 0.0
      %1578 = vadd.xlane.f32.xlu0 %v1577
      %v1579 = vpop.xlane.xlu0 %1578
      %v1580 = vrot.slane %v1579, 4
      %v1581 = vadd.f32 %v1579, %v1580
      %v1582 = vrot.slane %v1581, 2
      %v1583 = vadd.f32 %v1581, %v1582
      %v1584 = vrot.slane %v1583, 1
      %v1585 = vadd.f32 %v1583, %v1584
      %s1586 = vtos %v1585
      %v1587 = vrcp.pop 160.0
      %s1588 = vtos %v1587
      %s1589 = smul.f32 %s1586, %s1588
      %s1590 = sadd.f32 %s1589, 1e-05
      %v1591 = vstv %s1590
      %v1592 = vrsqrt.pop %v1591
      %s1593 = vtos %v1592
      %v1594 = vstv %s1593
      %v1595 = vmul.f32 %v1575, %v1594
      %v1596 = vld [vmem:[%s3] sm:$0x1]
      %v1597 = vld [vmem:[%s2] sm:$0xff]
      %v1598 = vld [vmem:[%s2 + $0x8] sm:$0xff]
      %v1599 = vld [vmem:[%s2 + $0x10] sm:$0xff]
      %v1600 = vld [vmem:[%s2 + $0x18] sm:$0xff]
      %v1602 = vsel %vm288, %v1595, 0
      %1604 = vmatprep.subr.mxu0 0.0
      %1605 = vmatpush1.msra.mxu0 %v1597
      %1606 = vmatprep.subr.mxu0 0.0
      %1607 = vmatpush1.msra.mxu0 %v1598
      %1608 = vmatprep.subr.mxu0 0.0
      %1609 = vmatpush1.msra.mxu0 %v1599
      %1610 = vmatprep.subr.mxu0 0.0
      %1611 = vmatpush1.msra.mxu0 %v1600
      %1612 = vmatprep.subr.mxu0 0.0
      %1613 = vmatpush1.msra.mxu0 0.0
      %1614 = vmatprep.subr.mxu0 0.0
      %1615 = vmatpush1.msra.mxu0 0.0
      %1616 = vmatprep.subr.mxu0 0.0
      %1617 = vmatpush1.msra.mxu0 0.0
      %1618 = vmatprep.subr.mxu0 0.0
      %1619 = vmatpush1.msra.mxu0 0.0
      %1620 = vmatprep.subr.mxu0 0.0
      %1621 = vmatpush1.msra.mxu0 0.0
      %1622 = vmatprep.subr.mxu0 0.0
      %1623 = vmatpush1.msra.mxu0 0.0
      %1624 = vmatprep.subr.mxu0 0.0
      %1625 = vmatpush1.msra.mxu0 0.0
      %1626 = vmatprep.subr.mxu0 0.0
      %1627 = vmatpush1.msra.mxu0 0.0
      %1628 = vmatprep.subr.mxu0 0.0
      %1629 = vmatpush1.msra.mxu0 0.0
      %1630 = vmatprep.subr.mxu0 0.0
      %1631 = vmatpush1.msra.mxu0 0.0
      %1632 = vmatprep.subr.mxu0 0.0
      %1633 = vmatpush1.msra.mxu0 0.0
      %1634 = vmatprep.subr.mxu0 0.0
      %1635 = vmatpush1.msra.mxu0 0.0
      %1636 = vmatprep.subr.mxu0 0.0
      %1637 = vmatpush1.msra.mxu0 0.0
      %1638 = vmatprep.subr.mxu0 0.0
      %1639 = vmatpush1.msra.mxu0 0.0
      %1640 = vmatprep.subr.mxu0 0.0
      %1641 = vmatpush1.msra.mxu0 0.0
      %1642 = vmatprep.subr.mxu0 0.0
      %1643 = vmatpush1.msra.mxu0 0.0
      %1644 = vmatprep.subr.mxu0 0.0
      %1645 = vmatpush1.msra.mxu0 0.0
      %1646 = vmatprep.subr.mxu0 0.0
      %1647 = vmatpush1.msra.mxu0 0.0
      %1648 = vmatprep.subr.mxu0 0.0
      %1649 = vmatpush1.msra.mxu0 0.0
      %1650 = vmatprep.subr.mxu0 0.0
      %1651 = vmatpush1.msra.mxu0 0.0
      %1652 = vmatprep.subr.mxu0 0.0
      %1653 = vmatpush1.msra.mxu0 0.0
      %1654 = vmatprep.subr.mxu0 0.0
      %1655 = vmatpush1.msra.mxu0 0.0
      %1656 = vmatprep.subr.mxu0 0.0
      %1657 = vmatpush1.msra.mxu0 0.0
      %1658 = vmatprep.subr.mxu0 0.0
      %1659 = vmatpush1.msra.mxu0 0.0
      %1660 = vmatprep.subr.mxu0 0.0
      %1661 = vmatpush1.msra.mxu0 0.0
      %1662 = vmatprep.subr.mxu0 0.0
      %1663 = vmatpush1.msra.mxu0 0.0
      %1664 = vmatprep.subr.mxu0 0.0
      %1665 = vmatpush1.msra.mxu0 0.0
      %1666 = vmatprep.subr.mxu0 0.0
      %1667 = vmatpush1.msra.mxu0 0.0
      %1668 = vmatprep.mubr.f32.mxu0 0.0
      %1669 = vmatmul.mubr.f32.gmra.mrb[0].mxu0 %v1602
      %v1670 = vpop.f32.mrb[0].mxu0
      %v1671 = vadd.f32 0.0, %v1670
      %v1672 = vpop.f32.mrb[0].mxu0
      %1673 = vdwg.mxu0
      %v1674 = vadd.f32 %v1596, %v1671
      %s1675 = scalar_lea.vmem %s2, 32
      %v1676 = vld [vmem:[%s1675] sm:$0xff]
      %v1677 = vld [vmem:[%s1675 + $0x8] sm:$0xff]
      %v1678 = vld [vmem:[%s1675 + $0x10] sm:$0xff]
      %v1679 = vld [vmem:[%s1675 + $0x18] sm:$0xff]
      %v1680 = vrot.slane %v1595, 1
      %v1681 = vsel %vm288, %v1680, 0
      %1683 = vmatprep.subr.mxu0 0.0
      %1684 = vmatpush1.msra.mxu0 %v1676
      %1685 = vmatprep.subr.mxu0 0.0
      %1686 = vmatpush1.msra.mxu0 %v1677
      %1687 = vmatprep.subr.mxu0 0.0
      %1688 = vmatpush1.msra.mxu0 %v1678
      %1689 = vmatprep.subr.mxu0 0.0
      %1690 = vmatpush1.msra.mxu0 %v1679
      %1691 = vmatprep.subr.mxu0 0.0
      %1692 = vmatpush1.msra.mxu0 0.0
      %1693 = vmatprep.subr.mxu0 0.0
      %1694 = vmatpush1.msra.mxu0 0.0
      %1695 = vmatprep.subr.mxu0 0.0
      %1696 = vmatpush1.msra.mxu0 0.0
      %1697 = vmatprep.subr.mxu0 0.0
      %1698 = vmatpush1.msra.mxu0 0.0
      %1699 = vmatprep.subr.mxu0 0.0
      %1700 = vmatpush1.msra.mxu0 0.0
      %1701 = vmatprep.subr.mxu0 0.0
      %1702 = vmatpush1.msra.mxu0 0.0
      %1703 = vmatprep.subr.mxu0 0.0
      %1704 = vmatpush1.msra.mxu0 0.0
      %1705 = vmatprep.subr.mxu0 0.0
      %1706 = vmatpush1.msra.mxu0 0.0
      %1707 = vmatprep.subr.mxu0 0.0
      %1708 = vmatpush1.msra.mxu0 0.0
      %1709 = vmatprep.subr.mxu0 0.0
      %1710 = vmatpush1.msra.mxu0 0.0
      %1711 = vmatprep.subr.mxu0 0.0
      %1712 = vmatpush1.msra.mxu0 0.0
      %1713 = vmatprep.subr.mxu0 0.0
      %1714 = vmatpush1.msra.mxu0 0.0
      %1715 = vmatprep.subr.mxu0 0.0
      %1716 = vmatpush1.msra.mxu0 0.0
      %1717 = vmatprep.subr.mxu0 0.0
      %1718 = vmatpush1.msra.mxu0 0.0
      %1719 = vmatprep.subr.mxu0 0.0
      %1720 = vmatpush1.msra.mxu0 0.0
      %1721 = vmatprep.subr.mxu0 0.0
      %1722 = vmatpush1.msra.mxu0 0.0
      %1723 = vmatprep.subr.mxu0 0.0
      %1724 = vmatpush1.msra.mxu0 0.0
      %1725 = vmatprep.subr.mxu0 0.0
      %1726 = vmatpush1.msra.mxu0 0.0
      %1727 = vmatprep.subr.mxu0 0.0
      %1728 = vmatpush1.msra.mxu0 0.0
      %1729 = vmatprep.subr.mxu0 0.0
      %1730 = vmatpush1.msra.mxu0 0.0
      %1731 = vmatprep.subr.mxu0 0.0
      %1732 = vmatpush1.msra.mxu0 0.0
      %1733 = vmatprep.subr.mxu0 0.0
      %1734 = vmatpush1.msra.mxu0 0.0
      %1735 = vmatprep.subr.mxu0 0.0
      %1736 = vmatpush1.msra.mxu0 0.0
      %1737 = vmatprep.subr.mxu0 0.0
      %1738 = vmatpush1.msra.mxu0 0.0
      %1739 = vmatprep.subr.mxu0 0.0
      %1740 = vmatpush1.msra.mxu0 0.0
      %1741 = vmatprep.subr.mxu0 0.0
      %1742 = vmatpush1.msra.mxu0 0.0
      %1743 = vmatprep.subr.mxu0 0.0
      %1744 = vmatpush1.msra.mxu0 0.0
      %1745 = vmatprep.subr.mxu0 0.0
      %1746 = vmatpush1.msra.mxu0 0.0
      %1747 = vmatprep.mubr.f32.mxu0 0.0
      %1748 = vmatmul.mubr.f32.gmra.mrb[0].mxu0 %v1681
      %v1749 = vpop.f32.mrb[0].mxu0
      %v1750 = vadd.f32 0.0, %v1749
      %v1751 = vpop.f32.mrb[0].mxu0
      %1752 = vdwg.mxu0
      %v1753 = vadd.f32 %v1674, %v1750
      %s1754 = scalar_lea.vmem %s2, 64
      %v1755 = vld [vmem:[%s1754] sm:$0xff]
      %v1756 = vld [vmem:[%s1754 + $0x8] sm:$0xff]
      %v1757 = vld [vmem:[%s1754 + $0x10] sm:$0xff]
      %v1758 = vld [vmem:[%s1754 + $0x18] sm:$0xff]
      %v1759 = vrot.slane %v1595, 2
      %v1760 = vsel %vm288, %v1759, 0
      %1762 = vmatprep.subr.mxu0 0.0
      %1763 = vmatpush1.msra.mxu0 %v1755
      %1764 = vmatprep.subr.mxu0 0.0
      %1765 = vmatpush1.msra.mxu0 %v1756
      %1766 = vmatprep.subr.mxu0 0.0
      %1767 = vmatpush1.msra.mxu0 %v1757
      %1768 = vmatprep.subr.mxu0 0.0
      %1769 = vmatpush1.msra.mxu0 %v1758
      %1770 = vmatprep.subr.mxu0 0.0
      %1771 = vmatpush1.msra.mxu0 0.0
      %1772 = vmatprep.subr.mxu0 0.0
      %1773 = vmatpush1.msra.mxu0 0.0
      %1774 = vmatprep.subr.mxu0 0.0
      %1775 = vmatpush1.msra.mxu0 0.0
      %1776 = vmatprep.subr.mxu0 0.0
      %1777 = vmatpush1.msra.mxu0 0.0
      %1778 = vmatprep.subr.mxu0 0.0
      %1779 = vmatpush1.msra.mxu0 0.0
      %1780 = vmatprep.subr.mxu0 0.0
      %1781 = vmatpush1.msra.mxu0 0.0
      %1782 = vmatprep.subr.mxu0 0.0
      %1783 = vmatpush1.msra.mxu0 0.0
      %1784 = vmatprep.subr.mxu0 0.0
      %1785 = vmatpush1.msra.mxu0 0.0
      %1786 = vmatprep.subr.mxu0 0.0
      %1787 = vmatpush1.msra.mxu0 0.0
      %1788 = vmatprep.subr.mxu0 0.0
      %1789 = vmatpush1.msra.mxu0 0.0
      %1790 = vmatprep.subr.mxu0 0.0
      %1791 = vmatpush1.msra.mxu0 0.0
      %1792 = vmatprep.subr.mxu0 0.0
      %1793 = vmatpush1.msra.mxu0 0.0
      %1794 = vmatprep.subr.mxu0 0.0
      %1795 = vmatpush1.msra.mxu0 0.0
      %1796 = vmatprep.subr.mxu0 0.0
      %1797 = vmatpush1.msra.mxu0 0.0
      %1798 = vmatprep.subr.mxu0 0.0
      %1799 = vmatpush1.msra.mxu0 0.0
      %1800 = vmatprep.subr.mxu0 0.0
      %1801 = vmatpush1.msra.mxu0 0.0
      %1802 = vmatprep.subr.mxu0 0.0
      %1803 = vmatpush1.msra.mxu0 0.0
      %1804 = vmatprep.subr.mxu0 0.0
      %1805 = vmatpush1.msra.mxu0 0.0
      %1806 = vmatprep.subr.mxu0 0.0
      %1807 = vmatpush1.msra.mxu0 0.0
      %1808 = vmatprep.subr.mxu0 0.0
      %1809 = vmatpush1.msra.mxu0 0.0
      %1810 = vmatprep.subr.mxu0 0.0
      %1811 = vmatpush1.msra.mxu0 0.0
      %1812 = vmatprep.subr.mxu0 0.0
      %1813 = vmatpush1.msra.mxu0 0.0
      %1814 = vmatprep.subr.mxu0 0.0
      %1815 = vmatpush1.msra.mxu0 0.0
      %1816 = vmatprep.subr.mxu0 0.0
      %1817 = vmatpush1.msra.mxu0 0.0
      %1818 = vmatprep.subr.mxu0 0.0
      %1819 = vmatpush1.msra.mxu0 0.0
      %1820 = vmatprep.subr.mxu0 0.0
      %1821 = vmatpush1.msra.mxu0 0.0
      %1822 = vmatprep.subr.mxu0 0.0
      %1823 = vmatpush1.msra.mxu0 0.0
      %1824 = vmatprep.subr.mxu0 0.0
      %1825 = vmatpush1.msra.mxu0 0.0
      %1826 = vmatprep.mubr.f32.mxu0 0.0
      %1827 = vmatmul.mubr.f32.gmra.mrb[0].mxu0 %v1760
      %v1828 = vpop.f32.mrb[0].mxu0
      %v1829 = vadd.f32 0.0, %v1828
      %v1830 = vpop.f32.mrb[0].mxu0
      %1831 = vdwg.mxu0
      %v1832 = vadd.f32 %v1753, %v1829
      %s1833 = scalar_lea.vmem %s2, 96
      %v1834 = vld [vmem:[%s1833] sm:$0xff]
      %v1835 = vld [vmem:[%s1833 + $0x8] sm:$0xff]
      %v1836 = vld [vmem:[%s1833 + $0x10] sm:$0xff]
      %v1837 = vld [vmem:[%s1833 + $0x18] sm:$0xff]
      %v1838 = vrot.slane %v1595, 3
      %v1839 = vsel %vm288, %v1838, 0
      %1841 = vmatprep.subr.mxu0 0.0
      %1842 = vmatpush1.msra.mxu0 %v1834
      %1843 = vmatprep.subr.mxu0 0.0
      %1844 = vmatpush1.msra.mxu0 %v1835
      %1845 = vmatprep.subr.mxu0 0.0
      %1846 = vmatpush1.msra.mxu0 %v1836
      %1847 = vmatprep.subr.mxu0 0.0
      %1848 = vmatpush1.msra.mxu0 %v1837
      %1849 = vmatprep.subr.mxu0 0.0
      %1850 = vmatpush1.msra.mxu0 0.0
      %1851 = vmatprep.subr.mxu0 0.0
      %1852 = vmatpush1.msra.mxu0 0.0
      %1853 = vmatprep.subr.mxu0 0.0
      %1854 = vmatpush1.msra.mxu0 0.0
      %1855 = vmatprep.subr.mxu0 0.0
      %1856 = vmatpush1.msra.mxu0 0.0
      %1857 = vmatprep.subr.mxu0 0.0
      %1858 = vmatpush1.msra.mxu0 0.0
      %1859 = vmatprep.subr.mxu0 0.0
      %1860 = vmatpush1.msra.mxu0 0.0
      %1861 = vmatprep.subr.mxu0 0.0
      %1862 = vmatpush1.msra.mxu0 0.0
      %1863 = vmatprep.subr.mxu0 0.0
      %1864 = vmatpush1.msra.mxu0 0.0
      %1865 = vmatprep.subr.mxu0 0.0
      %1866 = vmatpush1.msra.mxu0 0.0
      %1867 = vmatprep.subr.mxu0 0.0
      %1868 = vmatpush1.msra.mxu0 0.0
      %1869 = vmatprep.subr.mxu0 0.0
      %1870 = vmatpush1.msra.mxu0 0.0
      %1871 = vmatprep.subr.mxu0 0.0
      %1872 = vmatpush1.msra.mxu0 0.0
      %1873 = vmatprep.subr.mxu0 0.0
      %1874 = vmatpush1.msra.mxu0 0.0
      %1875 = vmatprep.subr.mxu0 0.0
      %1876 = vmatpush1.msra.mxu0 0.0
      %1877 = vmatprep.subr.mxu0 0.0
      %1878 = vmatpush1.msra.mxu0 0.0
      %1879 = vmatprep.subr.mxu0 0.0
      %1880 = vmatpush1.msra.mxu0 0.0
      %1881 = vmatprep.subr.mxu0 0.0
      %1882 = vmatpush1.msra.mxu0 0.0
      %1883 = vmatprep.subr.mxu0 0.0
      %1884 = vmatpush1.msra.mxu0 0.0
      %1885 = vmatprep.subr.mxu0 0.0
      %1886 = vmatpush1.msra.mxu0 0.0
      %1887 = vmatprep.subr.mxu0 0.0
      %1888 = vmatpush1.msra.mxu0 0.0
      %1889 = vmatprep.subr.mxu0 0.0
      %1890 = vmatpush1.msra.mxu0 0.0
      %1891 = vmatprep.subr.mxu0 0.0
      %1892 = vmatpush1.msra.mxu0 0.0
      %1893 = vmatprep.subr.mxu0 0.0
      %1894 = vmatpush1.msra.mxu0 0.0
      %1895 = vmatprep.subr.mxu0 0.0
      %1896 = vmatpush1.msra.mxu0 0.0
      %1897 = vmatprep.subr.mxu0 0.0
      %1898 = vmatpush1.msra.mxu0 0.0
      %1899 = vmatprep.subr.mxu0 0.0
      %1900 = vmatpush1.msra.mxu0 0.0
      %1901 = vmatprep.subr.mxu0 0.0
      %1902 = vmatpush1.msra.mxu0 0.0
      %1903 = vmatprep.subr.mxu0 0.0
      %1904 = vmatpush1.msra.mxu0 0.0
      %1905 = vmatprep.mubr.f32.mxu0 0.0
      %1906 = vmatmul.mubr.f32.gmra.mrb[0].mxu0 %v1839
      %v1907 = vpop.f32.mrb[0].mxu0
      %v1908 = vadd.f32 0.0, %v1907
      %v1909 = vpop.f32.mrb[0].mxu0
      %1910 = vdwg.mxu0
      %v1911 = vadd.f32 %v1832, %v1908
      %s1912 = scalar_lea.vmem %s2, 128
      %v1913 = vld [vmem:[%s1912] sm:$0xff]
      %v1914 = vld [vmem:[%s1912 + $0x8] sm:$0xff]
      %v1915 = vld [vmem:[%s1912 + $0x10] sm:$0xff]
      %v1916 = vld [vmem:[%s1912 + $0x18] sm:$0xff]
      %v1917 = vrot.slane %v1595, 4
      %v1918 = vsel %vm288, %v1917, 0
      %1920 = vmatprep.subr.mxu0 0.0
      %1921 = vmatpush1.msra.mxu0 %v1913
      %1922 = vmatprep.subr.mxu0 0.0
      %1923 = vmatpush1.msra.mxu0 %v1914
      %1924 = vmatprep.subr.mxu0 0.0
      %1925 = vmatpush1.msra.mxu0 %v1915
      %1926 = vmatprep.subr.mxu0 0.0
      %1927 = vmatpush1.msra.mxu0 %v1916
      %1928 = vmatprep.subr.mxu0 0.0
      %1929 = vmatpush1.msra.mxu0 0.0
      %1930 = vmatprep.subr.mxu0 0.0
      %1931 = vmatpush1.msra.mxu0 0.0
      %1932 = vmatprep.subr.mxu0 0.0
      %1933 = vmatpush1.msra.mxu0 0.0
      %1934 = vmatprep.subr.mxu0 0.0
      %1935 = vmatpush1.msra.mxu0 0.0
      %1936 = vmatprep.subr.mxu0 0.0
      %1937 = vmatpush1.msra.mxu0 0.0
      %1938 = vmatprep.subr.mxu0 0.0
      %1939 = vmatpush1.msra.mxu0 0.0
      %1940 = vmatprep.subr.mxu0 0.0
      %1941 = vmatpush1.msra.mxu0 0.0
      %1942 = vmatprep.subr.mxu0 0.0
      %1943 = vmatpush1.msra.mxu0 0.0
      %1944 = vmatprep.subr.mxu0 0.0
      %1945 = vmatpush1.msra.mxu0 0.0
      %1946 = vmatprep.subr.mxu0 0.0
      %1947 = vmatpush1.msra.mxu0 0.0
      %1948 = vmatprep.subr.mxu0 0.0
      %1949 = vmatpush1.msra.mxu0 0.0
      %1950 = vmatprep.subr.mxu0 0.0
      %1951 = vmatpush1.msra.mxu0 0.0
      %1952 = vmatprep.subr.mxu0 0.0
      %1953 = vmatpush1.msra.mxu0 0.0
      %1954 = vmatprep.subr.mxu0 0.0
      %1955 = vmatpush1.msra.mxu0 0.0
      %1956 = vmatprep.subr.mxu0 0.0
      %1957 = vmatpush1.msra.mxu0 0.0
      %1958 = vmatprep.subr.mxu0 0.0
      %1959 = vmatpush1.msra.mxu0 0.0
      %1960 = vmatprep.subr.mxu0 0.0
      %1961 = vmatpush1.msra.mxu0 0.0
      %1962 = vmatprep.subr.mxu0 0.0
      %1963 = vmatpush1.msra.mxu0 0.0
      %1964 = vmatprep.subr.mxu0 0.0
      %1965 = vmatpush1.msra.mxu0 0.0
      %1966 = vmatprep.subr.mxu0 0.0
      %1967 = vmatpush1.msra.mxu0 0.0
      %1968 = vmatprep.subr.mxu0 0.0
      %1969 = vmatpush1.msra.mxu0 0.0
      %1970 = vmatprep.subr.mxu0 0.0
      %1971 = vmatpush1.msra.mxu0 0.0
      %1972 = vmatprep.subr.mxu0 0.0
      %1973 = vmatpush1.msra.mxu0 0.0
      %1974 = vmatprep.subr.mxu0 0.0
      %1975 = vmatpush1.msra.mxu0 0.0
      %1976 = vmatprep.subr.mxu0 0.0
      %1977 = vmatpush1.msra.mxu0 0.0
      %1978 = vmatprep.subr.mxu0 0.0
      %1979 = vmatpush1.msra.mxu0 0.0
      %1980 = vmatprep.subr.mxu0 0.0
      %1981 = vmatpush1.msra.mxu0 0.0
      %1982 = vmatprep.subr.mxu0 0.0
      %1983 = vmatpush1.msra.mxu0 0.0
      %1984 = vmatprep.mubr.f32.mxu0 0.0
      %1985 = vmatmul.mubr.f32.gmra.mrb[0].mxu0 %v1918
      %v1986 = vpop.f32.mrb[0].mxu0
      %v1987 = vadd.f32 0.0, %v1986
      %v1988 = vpop.f32.mrb[0].mxu0
      %1989 = vdwg.mxu0
      %v1990 = vadd.f32 %v1911, %v1987
      %v1991 = vmul.f32 %v1990, 0.5
      %v1992 = vmul.f32 %v1990, 0.70710677
      %v1993 = vand.u32 2147483647, %v1992
      %v1994 = vmul.f32 %v1993, 0.3275911
      %v1995 = vadd.f32 %v1994, 1.0
      %v1996 = vrcp.pop %v1995
      %v1997 = vmul.f32 1.0, %v1996
      %v1998 = vmul.f32 %v1997, 1.0614054
      %v1999 = vadd.f32 %v1998, -1.4531521
      %v2000 = vmul.f32 %v1999, %v1997
      %v2001 = vadd.f32 %v2000, 1.4214138
      %v2002 = vmul.f32 %v2001, %v1997
      %v2003 = vadd.f32 %v2002, -0.28449672
      %v2004 = vmul.f32 %v2003, %v1997
      %v2005 = vadd.f32 %v2004, 0.2548296
      %v2006 = vmul.f32 %v2005, %v1997
      %v2007 = vsub.f32 0.0, %v1993
      %v2008 = vmul.f32 %v2007, %v1993
      %v2009 = vmul.f32 %v2008, 1.442695
      %v2010 = vpow.pop %v2009
      %v2011 = vmul.f32 %v2006, %v2010
      %v2012 = vsub.f32 1.0, %v2011
      %vm2013 = vcmp.lt.f32.partialorder %v1992, 0.0
      %v2014 = vsub.f32 0.0, %v2012
      %v2015 = vsel %vm2013, %v2014, %v2012
      %v2016 = vadd.f32 %v2015, 1.0
      %v2017 = vmul.f32 %v1991, %v2016
      %v2018 = vld [vmem:[%s4] sm:$0xff]
      %v2019 = vld [vmem:[%s4 + $0x8] sm:$0xff]
      %v2020 = vld [vmem:[%s4 + $0x10] sm:$0xff]
      %v2021 = vld [vmem:[%s4 + $0x18] sm:$0xff]
      %v2022 = vld [vmem:[%s4 + $0x20] sm:$0xff]
      %v2023 = vld [vmem:[%s4 + $0x28] sm:$0xff]
      %v2024 = vld [vmem:[%s4 + $0x30] sm:$0xff]
      %v2025 = vld [vmem:[%s4 + $0x38] sm:$0xff]
      %vm2026 = vcmask 523264
      %v2028 = vsel %vm2026, %v2017, 0
      %2030 = vmatprep.subr.mxu0 0.0
      %2031 = vmatpush1.msra.mxu0 %v2018
      %2032 = vmatprep.subr.mxu0 0.0
      %2033 = vmatpush1.msra.mxu0 %v2019
      %2034 = vmatprep.subr.mxu0 0.0
      %2035 = vmatpush1.msra.mxu0 %v2020
      %2036 = vmatprep.subr.mxu0 0.0
      %2037 = vmatpush1.msra.mxu0 %v2021
      %2038 = vmatprep.subr.mxu0 0.0
      %2039 = vmatpush1.msra.mxu0 %v2022
      %2040 = vmatprep.subr.mxu0 0.0
      %2041 = vmatpush1.msra.mxu0 %v2023
      %2042 = vmatprep.subr.mxu0 0.0
      %2043 = vmatpush1.msra.mxu0 %v2024
      %2044 = vmatprep.subr.mxu0 0.0
      %2045 = vmatpush1.msra.mxu0 %v2025
      %2046 = vmatprep.subr.mxu0 0.0
      %2047 = vmatpush1.msra.mxu0 0.0
      %2048 = vmatprep.subr.mxu0 0.0
      %2049 = vmatpush1.msra.mxu0 0.0
      %2050 = vmatprep.subr.mxu0 0.0
      %2051 = vmatpush1.msra.mxu0 0.0
      %2052 = vmatprep.subr.mxu0 0.0
      %2053 = vmatpush1.msra.mxu0 0.0
      %2054 = vmatprep.subr.mxu0 0.0
      %2055 = vmatpush1.msra.mxu0 0.0
      %2056 = vmatprep.subr.mxu0 0.0
      %2057 = vmatpush1.msra.mxu0 0.0
      %2058 = vmatprep.subr.mxu0 0.0
      %2059 = vmatpush1.msra.mxu0 0.0
      %2060 = vmatprep.subr.mxu0 0.0
      %2061 = vmatpush1.msra.mxu0 0.0
      %2062 = vmatprep.subr.mxu0 0.0
      %2063 = vmatpush1.msra.mxu0 0.0
      %2064 = vmatprep.subr.mxu0 0.0
      %2065 = vmatpush1.msra.mxu0 0.0
      %2066 = vmatprep.subr.mxu0 0.0
      %2067 = vmatpush1.msra.mxu0 0.0
      %2068 = vmatprep.subr.mxu0 0.0
      %2069 = vmatpush1.msra.mxu0 0.0
      %2070 = vmatprep.subr.mxu0 0.0
      %2071 = vmatpush1.msra.mxu0 0.0
      %2072 = vmatprep.subr.mxu0 0.0
      %2073 = vmatpush1.msra.mxu0 0.0
      %2074 = vmatprep.subr.mxu0 0.0
      %2075 = vmatpush1.msra.mxu0 0.0
      %2076 = vmatprep.subr.mxu0 0.0
      %2077 = vmatpush1.msra.mxu0 0.0
      %2078 = vmatprep.subr.mxu0 0.0
      %2079 = vmatpush1.msra.mxu0 0.0
      %2080 = vmatprep.subr.mxu0 0.0
      %2081 = vmatpush1.msra.mxu0 0.0
      %2082 = vmatprep.subr.mxu0 0.0
      %2083 = vmatpush1.msra.mxu0 0.0
      %2084 = vmatprep.subr.mxu0 0.0
      %2085 = vmatpush1.msra.mxu0 0.0
      %2086 = vmatprep.subr.mxu0 0.0
      %2087 = vmatpush1.msra.mxu0 0.0
      %2088 = vmatprep.subr.mxu0 0.0
      %2089 = vmatpush1.msra.mxu0 0.0
      %2090 = vmatprep.subr.mxu0 0.0
      %2091 = vmatpush1.msra.mxu0 0.0
      %2092 = vmatprep.subr.mxu0 0.0
      %2093 = vmatpush1.msra.mxu0 0.0
      %2094 = vmatprep.mubr.f32.mxu0 0.0
      %2095 = vmatmul.mubr.f32.gmra.mrb[0].mxu0 %v2028
      %v2096 = vpop.f32.mrb[0].mxu0
      %v2097 = vadd.f32 0.0, %v2096
      %v2098 = vpop.f32.mrb[0].mxu0
      %2099 = vdwg.mxu0
      %s2100 = scalar_lea.vmem %s4, 64
      %v2101 = vld [vmem:[%s2100] sm:$0xff]
      %v2102 = vld [vmem:[%s2100 + $0x8] sm:$0xff]
      %v2103 = vld [vmem:[%s2100 + $0x10] sm:$0xff]
      %v2104 = vld [vmem:[%s2100 + $0x18] sm:$0xff]
      %v2105 = vld [vmem:[%s2100 + $0x20] sm:$0xff]
      %v2106 = vld [vmem:[%s2100 + $0x28] sm:$0xff]
      %v2107 = vld [vmem:[%s2100 + $0x30] sm:$0xff]
      %v2108 = vld [vmem:[%s2100 + $0x38] sm:$0xff]
      %2109 = vmatprep.subr.mxu0 0.0
      %2110 = vmatpush1.msra.mxu0 %v2101
      %2111 = vmatprep.subr.mxu0 0.0
      %2112 = vmatpush1.msra.mxu0 %v2102
      %2113 = vmatprep.subr.mxu0 0.0
      %2114 = vmatpush1.msra.mxu0 %v2103
      %2115 = vmatprep.subr.mxu0 0.0
      %2116 = vmatpush1.msra.mxu0 %v2104
      %2117 = vmatprep.subr.mxu0 0.0
      %2118 = vmatpush1.msra.mxu0 %v2105
      %2119 = vmatprep.subr.mxu0 0.0
      %2120 = vmatpush1.msra.mxu0 %v2106
      %2121 = vmatprep.subr.mxu0 0.0
      %2122 = vmatpush1.msra.mxu0 %v2107
      %2123 = vmatprep.subr.mxu0 0.0
      %2124 = vmatpush1.msra.mxu0 %v2108
      %2125 = vmatprep.subr.mxu0 0.0
      %2126 = vmatpush1.msra.mxu0 0.0
      %2127 = vmatprep.subr.mxu0 0.0
      %2128 = vmatpush1.msra.mxu0 0.0
      %2129 = vmatprep.subr.mxu0 0.0
      %2130 = vmatpush1.msra.mxu0 0.0
      %2131 = vmatprep.subr.mxu0 0.0
      %2132 = vmatpush1.msra.mxu0 0.0
      %2133 = vmatprep.subr.mxu0 0.0
      %2134 = vmatpush1.msra.mxu0 0.0
      %2135 = vmatprep.subr.mxu0 0.0
      %2136 = vmatpush1.msra.mxu0 0.0
      %2137 = vmatprep.subr.mxu0 0.0
      %2138 = vmatpush1.msra.mxu0 0.0
      %2139 = vmatprep.subr.mxu0 0.0
      %2140 = vmatpush1.msra.mxu0 0.0
      %2141 = vmatprep.subr.mxu0 0.0
      %2142 = vmatpush1.msra.mxu0 0.0
      %2143 = vmatprep.subr.mxu0 0.0
      %2144 = vmatpush1.msra.mxu0 0.0
      %2145 = vmatprep.subr.mxu0 0.0
      %2146 = vmatpush1.msra.mxu0 0.0
      %2147 = vmatprep.subr.mxu0 0.0
      %2148 = vmatpush1.msra.mxu0 0.0
      %2149 = vmatprep.subr.mxu0 0.0
      %2150 = vmatpush1.msra.mxu0 0.0
      %2151 = vmatprep.subr.mxu0 0.0
      %2152 = vmatpush1.msra.mxu0 0.0
      %2153 = vmatprep.subr.mxu0 0.0
      %2154 = vmatpush1.msra.mxu0 0.0
      %2155 = vmatprep.subr.mxu0 0.0
      %2156 = vmatpush1.msra.mxu0 0.0
      %2157 = vmatprep.subr.mxu0 0.0
      %2158 = vmatpush1.msra.mxu0 0.0
      %2159 = vmatprep.subr.mxu0 0.0
      %2160 = vmatpush1.msra.mxu0 0.0
      %2161 = vmatprep.subr.mxu0 0.0
      %2162 = vmatpush1.msra.mxu0 0.0
      %2163 = vmatprep.subr.mxu0 0.0
      %2164 = vmatpush1.msra.mxu0 0.0
      %2165 = vmatprep.subr.mxu0 0.0
      %2166 = vmatpush1.msra.mxu0 0.0
      %2167 = vmatprep.subr.mxu0 0.0
      %2168 = vmatpush1.msra.mxu0 0.0
      %2169 = vmatprep.subr.mxu0 0.0
      %2170 = vmatpush1.msra.mxu0 0.0
      %2171 = vmatprep.subr.mxu0 0.0
      %2172 = vmatpush1.msra.mxu0 0.0
      %2173 = vmatprep.mubr.f32.mxu0 0.0
      %2174 = vmatmul.mubr.f32.gmra.mrb[0].mxu0 %v2028
      %v2175 = vpop.f32.mrb[0].mxu0
      %v2176 = vadd.f32 0.0, %v2175
      %v2177 = vpop.f32.mrb[0].mxu0
      %2178 = vdwg.mxu0
      %s2179 = scalar_lea.vmem %s4, 128
      %v2180 = vld [vmem:[%s2179] sm:$0xff]
      %v2181 = vld [vmem:[%s2179 + $0x8] sm:$0xff]
      %v2182 = vld [vmem:[%s2179 + $0x10] sm:$0xff]
      %v2183 = vld [vmem:[%s2179 + $0x18] sm:$0xff]
      %v2184 = vld [vmem:[%s2179 + $0x20] sm:$0xff]
      %v2185 = vld [vmem:[%s2179 + $0x28] sm:$0xff]
      %v2186 = vld [vmem:[%s2179 + $0x30] sm:$0xff]
      %v2187 = vld [vmem:[%s2179 + $0x38] sm:$0xff]
      %2188 = vmatprep.subr.mxu0 0.0
      %2189 = vmatpush1.msra.mxu0 %v2180
      %2190 = vmatprep.subr.mxu0 0.0
      %2191 = vmatpush1.msra.mxu0 %v2181
      %2192 = vmatprep.subr.mxu0 0.0
      %2193 = vmatpush1.msra.mxu0 %v2182
      %2194 = vmatprep.subr.mxu0 0.0
      %2195 = vmatpush1.msra.mxu0 %v2183
      %2196 = vmatprep.subr.mxu0 0.0
      %2197 = vmatpush1.msra.mxu0 %v2184
      %2198 = vmatprep.subr.mxu0 0.0
      %2199 = vmatpush1.msra.mxu0 %v2185
      %2200 = vmatprep.subr.mxu0 0.0
      %2201 = vmatpush1.msra.mxu0 %v2186
      %2202 = vmatprep.subr.mxu0 0.0
      %2203 = vmatpush1.msra.mxu0 %v2187
      %2204 = vmatprep.subr.mxu0 0.0
      %2205 = vmatpush1.msra.mxu0 0.0
      %2206 = vmatprep.subr.mxu0 0.0
      %2207 = vmatpush1.msra.mxu0 0.0
      %2208 = vmatprep.subr.mxu0 0.0
      %2209 = vmatpush1.msra.mxu0 0.0
      %2210 = vmatprep.subr.mxu0 0.0
      %2211 = vmatpush1.msra.mxu0 0.0
      %2212 = vmatprep.subr.mxu0 0.0
      %2213 = vmatpush1.msra.mxu0 0.0
      %2214 = vmatprep.subr.mxu0 0.0
      %2215 = vmatpush1.msra.mxu0 0.0
      %2216 = vmatprep.subr.mxu0 0.0
      %2217 = vmatpush1.msra.mxu0 0.0
      %2218 = vmatprep.subr.mxu0 0.0
      %2219 = vmatpush1.msra.mxu0 0.0
      %2220 = vmatprep.subr.mxu0 0.0
      %2221 = vmatpush1.msra.mxu0 0.0
      %2222 = vmatprep.subr.mxu0 0.0
      %2223 = vmatpush1.msra.mxu0 0.0
      %2224 = vmatprep.subr.mxu0 0.0
      %2225 = vmatpush1.msra.mxu0 0.0
      %2226 = vmatprep.subr.mxu0 0.0
      %2227 = vmatpush1.msra.mxu0 0.0
      %2228 = vmatprep.subr.mxu0 0.0
      %2229 = vmatpush1.msra.mxu0 0.0
      %2230 = vmatprep.subr.mxu0 0.0
      %2231 = vmatpush1.msra.mxu0 0.0
      %2232 = vmatprep.subr.mxu0 0.0
      %2233 = vmatpush1.msra.mxu0 0.0
      %2234 = vmatprep.subr.mxu0 0.0
      %2235 = vmatpush1.msra.mxu0 0.0
      %2236 = vmatprep.subr.mxu0 0.0
      %2237 = vmatpush1.msra.mxu0 0.0
      %2238 = vmatprep.subr.mxu0 0.0
      %2239 = vmatpush1.msra.mxu0 0.0
      %2240 = vmatprep.subr.mxu0 0.0
      %2241 = vmatpush1.msra.mxu0 0.0
      %2242 = vmatprep.subr.mxu0 0.0
      %2243 = vmatpush1.msra.mxu0 0.0
      %2244 = vmatprep.subr.mxu0 0.0
      %2245 = vmatpush1.msra.mxu0 0.0
      %2246 = vmatprep.subr.mxu0 0.0
      %2247 = vmatpush1.msra.mxu0 0.0
      %2248 = vmatprep.subr.mxu0 0.0
      %2249 = vmatpush1.msra.mxu0 0.0
      %2250 = vmatprep.subr.mxu0 0.0
      %2251 = vmatpush1.msra.mxu0 0.0
      %2252 = vmatprep.mubr.f32.mxu0 0.0
      %2253 = vmatmul.mubr.f32.gmra.mrb[0].mxu0 %v2028
      %v2254 = vpop.f32.mrb[0].mxu0
      %v2255 = vadd.f32 0.0, %v2254
      %v2256 = vpop.f32.mrb[0].mxu0
      %2257 = vdwg.mxu0
      %s2258 = scalar_lea.vmem %s4, 192
      %v2259 = vld [vmem:[%s2258] sm:$0xff]
      %v2260 = vld [vmem:[%s2258 + $0x8] sm:$0xff]
      %v2261 = vld [vmem:[%s2258 + $0x10] sm:$0xff]
      %v2262 = vld [vmem:[%s2258 + $0x18] sm:$0xff]
      %v2263 = vld [vmem:[%s2258 + $0x20] sm:$0xff]
      %v2264 = vld [vmem:[%s2258 + $0x28] sm:$0xff]
      %v2265 = vld [vmem:[%s2258 + $0x30] sm:$0xff]
      %v2266 = vld [vmem:[%s2258 + $0x38] sm:$0xff]
      %2267 = vmatprep.subr.mxu0 0.0
      %2268 = vmatpush1.msra.mxu0 %v2259
      %2269 = vmatprep.subr.mxu0 0.0
      %2270 = vmatpush1.msra.mxu0 %v2260
      %2271 = vmatprep.subr.mxu0 0.0
      %2272 = vmatpush1.msra.mxu0 %v2261
      %2273 = vmatprep.subr.mxu0 0.0
      %2274 = vmatpush1.msra.mxu0 %v2262
      %2275 = vmatprep.subr.mxu0 0.0
      %2276 = vmatpush1.msra.mxu0 %v2263
      %2277 = vmatprep.subr.mxu0 0.0
      %2278 = vmatpush1.msra.mxu0 %v2264
      %2279 = vmatprep.subr.mxu0 0.0
      %2280 = vmatpush1.msra.mxu0 %v2265
      %2281 = vmatprep.subr.mxu0 0.0
      %2282 = vmatpush1.msra.mxu0 %v2266
      %2283 = vmatprep.subr.mxu0 0.0
      %2284 = vmatpush1.msra.mxu0 0.0
      %2285 = vmatprep.subr.mxu0 0.0
      %2286 = vmatpush1.msra.mxu0 0.0
      %2287 = vmatprep.subr.mxu0 0.0
      %2288 = vmatpush1.msra.mxu0 0.0
      %2289 = vmatprep.subr.mxu0 0.0
      %2290 = vmatpush1.msra.mxu0 0.0
      %2291 = vmatprep.subr.mxu0 0.0
      %2292 = vmatpush1.msra.mxu0 0.0
      %2293 = vmatprep.subr.mxu0 0.0
      %2294 = vmatpush1.msra.mxu0 0.0
      %2295 = vmatprep.subr.mxu0 0.0
      %2296 = vmatpush1.msra.mxu0 0.0
      %2297 = vmatprep.subr.mxu0 0.0
      %2298 = vmatpush1.msra.mxu0 0.0
      %2299 = vmatprep.subr.mxu0 0.0
      %2300 = vmatpush1.msra.mxu0 0.0
      %2301 = vmatprep.subr.mxu0 0.0
      %2302 = vmatpush1.msra.mxu0 0.0
      %2303 = vmatprep.subr.mxu0 0.0
      %2304 = vmatpush1.msra.mxu0 0.0
      %2305 = vmatprep.subr.mxu0 0.0
      %2306 = vmatpush1.msra.mxu0 0.0
      %2307 = vmatprep.subr.mxu0 0.0
      %2308 = vmatpush1.msra.mxu0 0.0
      %2309 = vmatprep.subr.mxu0 0.0
      %2310 = vmatpush1.msra.mxu0 0.0
      %2311 = vmatprep.subr.mxu0 0.0
      %2312 = vmatpush1.msra.mxu0 0.0
      %2313 = vmatprep.subr.mxu0 0.0
      %2314 = vmatpush1.msra.mxu0 0.0
      %2315 = vmatprep.subr.mxu0 0.0
      %2316 = vmatpush1.msra.mxu0 0.0
      %2317 = vmatprep.subr.mxu0 0.0
      %2318 = vmatpush1.msra.mxu0 0.0
      %2319 = vmatprep.subr.mxu0 0.0
      %2320 = vmatpush1.msra.mxu0 0.0
      %2321 = vmatprep.subr.mxu0 0.0
      %2322 = vmatpush1.msra.mxu0 0.0
      %2323 = vmatprep.subr.mxu0 0.0
      %2324 = vmatpush1.msra.mxu0 0.0
      %2325 = vmatprep.subr.mxu0 0.0
      %2326 = vmatpush1.msra.mxu0 0.0
      %2327 = vmatprep.subr.mxu0 0.0
      %2328 = vmatpush1.msra.mxu0 0.0
      %2329 = vmatprep.subr.mxu0 0.0
      %2330 = vmatpush1.msra.mxu0 0.0
      %2331 = vmatprep.mubr.f32.mxu0 0.0
      %2332 = vmatmul.mubr.f32.gmra.mrb[0].mxu0 %v2028
      %v2333 = vpop.f32.mrb[0].mxu0
      %v2334 = vadd.f32 0.0, %v2333
      %v2335 = vpop.f32.mrb[0].mxu0
      %2336 = vdwg.mxu0
      %s2337 = scalar_lea.vmem %s4, 256
      %v2338 = vld [vmem:[%s2337] sm:$0xff]
      %v2339 = vld [vmem:[%s2337 + $0x8] sm:$0xff]
      %v2340 = vld [vmem:[%s2337 + $0x10] sm:$0xff]
      %v2341 = vld [vmem:[%s2337 + $0x18] sm:$0xff]
      %v2342 = vld [vmem:[%s2337 + $0x20] sm:$0xff]
      %v2343 = vld [vmem:[%s2337 + $0x28] sm:$0xff]
      %v2344 = vld [vmem:[%s2337 + $0x30] sm:$0xff]
      %v2345 = vld [vmem:[%s2337 + $0x38] sm:$0xff]
      %2346 = vmatprep.subr.mxu0 0.0
      %2347 = vmatpush1.msra.mxu0 %v2338
      %2348 = vmatprep.subr.mxu0 0.0
      %2349 = vmatpush1.msra.mxu0 %v2339
      %2350 = vmatprep.subr.mxu0 0.0
      %2351 = vmatpush1.msra.mxu0 %v2340
      %2352 = vmatprep.subr.mxu0 0.0
      %2353 = vmatpush1.msra.mxu0 %v2341
      %2354 = vmatprep.subr.mxu0 0.0
      %2355 = vmatpush1.msra.mxu0 %v2342
      %2356 = vmatprep.subr.mxu0 0.0
      %2357 = vmatpush1.msra.mxu0 %v2343
      %2358 = vmatprep.subr.mxu0 0.0
      %2359 = vmatpush1.msra.mxu0 %v2344
      %2360 = vmatprep.subr.mxu0 0.0
      %2361 = vmatpush1.msra.mxu0 %v2345
      %2362 = vmatprep.subr.mxu0 0.0
      %2363 = vmatpush1.msra.mxu0 0.0
      %2364 = vmatprep.subr.mxu0 0.0
      %2365 = vmatpush1.msra.mxu0 0.0
      %2366 = vmatprep.subr.mxu0 0.0
      %2367 = vmatpush1.msra.mxu0 0.0
      %2368 = vmatprep.subr.mxu0 0.0
      %2369 = vmatpush1.msra.mxu0 0.0
      %2370 = vmatprep.subr.mxu0 0.0
      %2371 = vmatpush1.msra.mxu0 0.0
      %2372 = vmatprep.subr.mxu0 0.0
      %2373 = vmatpush1.msra.mxu0 0.0
      %2374 = vmatprep.subr.mxu0 0.0
      %2375 = vmatpush1.msra.mxu0 0.0
      %2376 = vmatprep.subr.mxu0 0.0
      %2377 = vmatpush1.msra.mxu0 0.0
      %2378 = vmatprep.subr.mxu0 0.0
      %2379 = vmatpush1.msra.mxu0 0.0
      %2380 = vmatprep.subr.mxu0 0.0
      %2381 = vmatpush1.msra.mxu0 0.0
      %2382 = vmatprep.subr.mxu0 0.0
      %2383 = vmatpush1.msra.mxu0 0.0
      %2384 = vmatprep.subr.mxu0 0.0
      %2385 = vmatpush1.msra.mxu0 0.0
      %2386 = vmatprep.subr.mxu0 0.0
      %2387 = vmatpush1.msra.mxu0 0.0
      %2388 = vmatprep.subr.mxu0 0.0
      %2389 = vmatpush1.msra.mxu0 0.0
      %2390 = vmatprep.subr.mxu0 0.0
      %2391 = vmatpush1.msra.mxu0 0.0
      %2392 = vmatprep.subr.mxu0 0.0
      %2393 = vmatpush1.msra.mxu0 0.0
      %2394 = vmatprep.subr.mxu0 0.0
      %2395 = vmatpush1.msra.mxu0 0.0
      %2396 = vmatprep.subr.mxu0 0.0
      %2397 = vmatpush1.msra.mxu0 0.0
      %2398 = vmatprep.subr.mxu0 0.0
      %2399 = vmatpush1.msra.mxu0 0.0
      %2400 = vmatprep.subr.mxu0 0.0
      %2401 = vmatpush1.msra.mxu0 0.0
      %2402 = vmatprep.subr.mxu0 0.0
      %2403 = vmatpush1.msra.mxu0 0.0
      %2404 = vmatprep.subr.mxu0 0.0
      %2405 = vmatpush1.msra.mxu0 0.0
      %2406 = vmatprep.subr.mxu0 0.0
      %2407 = vmatpush1.msra.mxu0 0.0
      %2408 = vmatprep.subr.mxu0 0.0
      %2409 = vmatpush1.msra.mxu0 0.0
      %2410 = vmatprep.mubr.f32.mxu0 0.0
      %2411 = vmatmul.mubr.f32.gmra.mrb[0].mxu0 %v2028
      %v2412 = vpop.f32.mrb[0].mxu0
      %v2413 = vadd.f32 0.0, %v2412
      %v2414 = vpop.f32.mrb[0].mxu0
      %2415 = vdwg.mxu0
      %v2417 = vrot.slane %v2176, 7
      %v2420 = vrot.slane %v2255, 6
      %v2423 = vrot.slane %v2334, 5
      %v2426 = vrot.slane %v2413, 4
      %vm2428 = vcmask 1040384
      %v2429 = vsel %vm2428, %v2097, %v2417
      %vm2430 = vcmask 1041408
      %v2431 = vsel %vm2430, %v2429, %v2420
      %vm2432 = vcmask 1042432
      %v2433 = vsel %vm2432, %v2431, %v2423
      %vm2434 = vcmask 1043456
      %v2435 = vsel %vm2434, %v2433, %v2426
      %v2436 = vld [vmem:[%s5] sm:$0x1f]
      %v2437 = vadd.f32 %v2435, %v2436
      %v2438 = vmul.f32 %v2437, 0.5
      %v2439 = vmul.f32 %v2437, 0.70710677
      %v2440 = vand.u32 2147483647, %v2439
      %v2441 = vmul.f32 %v2440, 0.3275911
      %v2442 = vadd.f32 %v2441, 1.0
      %v2443 = vrcp.pop %v2442
      %v2444 = vmul.f32 1.0, %v2443
      %v2445 = vmul.f32 %v2444, 1.0614054
      %v2446 = vadd.f32 %v2445, -1.4531521
      %v2447 = vmul.f32 %v2446, %v2444
      %v2448 = vadd.f32 %v2447, 1.4214138
      %v2449 = vmul.f32 %v2448, %v2444
      %v2450 = vadd.f32 %v2449, -0.28449672
      %v2451 = vmul.f32 %v2450, %v2444
      %v2452 = vadd.f32 %v2451, 0.2548296
      %v2453 = vmul.f32 %v2452, %v2444
      %v2454 = vsub.f32 0.0, %v2440
      %v2455 = vmul.f32 %v2454, %v2440
      %v2456 = vmul.f32 %v2455, 1.442695
      %v2457 = vpow.pop %v2456
      %v2458 = vmul.f32 %v2453, %v2457
      %v2459 = vsub.f32 1.0, %v2458
      %vm2460 = vcmp.lt.f32.partialorder %v2439, 0.0
      %v2461 = vsub.f32 0.0, %v2459
      %v2462 = vsel %vm2460, %v2461, %v2459
      %v2463 = vadd.f32 %v2462, 1.0
      %v2464 = vmul.f32 %v2438, %v2463
      %v2465 = vadd.f32 %v1560, %v2464
      %2466 = vst.msk [vmem:[%s246] sm:$0x1f] %vm248, %v2465
      %p2467 = scmp.lt.s32.totalorder %s17, 1
      %s2468 = scalar_select %p2467, %s17, 1
      %s2469 = smul.addr %s2468, 8
      %s2470 = scalar_lea.vmem %s6, %s2469
      // Predicated region
      $region45: #{tpu_custom_call.1} parent=43 // pred_check
        %p2471 = pneg %p166
      $region46: #{tpu_custom_call.1} parent=43 // pred_check_branch
        %2473 = sbr.rel (%p2471) target = $region48
      $region47: #{tpu_custom_call.1} parent=43 // pred_region
        _
      $region48: #{tpu_custom_call.1} parent=43 // pred_fallthru
        _
    $region44: #{tpu_custom_call.1} parent=5 // pred_fallthru
      _
    %p2474 = scmp.le.s32.totalorder 2, %s12
    // Predicated region
    $region49: #{tpu_custom_call.1} parent=5 // pred_check
      %p2475 = pneg %p2474
    $region50: #{tpu_custom_call.1} parent=5 // pred_check_branch
      %2477 = sbr.rel (%p2475) target = $region52
    $region51: #{tpu_custom_call.1} parent=5 // pred_region
      %s2478 = ssub.s32 %s12, 2
      // Predicated region
      $region53: #{tpu_custom_call.1} parent=51 // pred_check
        %p2479 = pneg %p172
      $region54: #{tpu_custom_call.1} parent=51 // pred_check_branch
        %2481 = sbr.rel (%p2479) target = $region56
      $region55: #{tpu_custom_call.1} parent=51 // pred_region
        %p2482 = scmp.lt.s32.totalorder %s18, 1
        %s2483 = scalar_select %p2482, %s18, 1
        %s2484 = smul.addr %s2483, 8
        %s2485 = scalar_lea.vmem %s6, %s2484
      $region56: #{tpu_custom_call.1} parent=51 // pred_fallthru
        _
    $region52: #{tpu_custom_call.1} parent=5 // pred_fallthru
      _
  $region6: #{tpu_custom_call.1} parent=0 // loop_footer
    %s16 = sadd.s32 1, %s12
  $region7: #{tpu_custom_call.1} parent=0 // loop_footer_branch
    %11 = sbr.rel target = $region3
  $region8: #{tpu_custom_call.1} parent=0 // loop_exit
    _

</llo_original>
